<compile_context>
chip_gen: v7x
topology: tpu7x:2x2x1
jax: 0.10.0
libtpu: 0.0.40
codegen_flags: <defaults>
</compile_context>

<pallas_src>
import functools

import jax
import jax.numpy as jnp
from jax.experimental import pallas as pl
from jax.experimental.pallas import tpu as pltpu

EPS_LN = 1e-5
EPS_BN = 1e-5


def _layer_norm(x, g, b):
    mu = jnp.mean(x, axis=-1, keepdims=True)
    var = jnp.mean(jnp.square(x - mu), axis=-1, keepdims=True)
    return (x - mu) * jax.lax.rsqrt(var + EPS_LN) * g + b


def _silu(x):
    return x * jax.nn.sigmoid(x)


def _mm(a_f32, w_ref, b_ref):
    """bf16 MXU matmul (f32 accumulation) + f32 bias; weight read at use site."""
    return (jnp.dot(a_f32.astype(jnp.bfloat16), w_ref[...],
                    preferred_element_type=jnp.float32) + b_ref[...])


def conformer_kernel(n_head, kernel_size,
                     # inputs -------------------------------------------------
                     x_ref,
                     ff1_lng, ff1_lnb, ff1_w1, ff1_b1, ff1_w2, ff1_b2,
                     mh_lng, mh_lnb, wq, bq, wk, bk, wv, bv, wo, bo,
                     cv_lng, cv_lnb, pw1_w, pw1_b, dw_w, dw_b, bn_s, bn_o,
                     pw2_w, pw2_b,
                     ff2_lng, ff2_lnb, ff2_w1, ff2_b1, ff2_w2, ff2_b2,
                     fin_lng, fin_lnb,
                     # output / scratch ---------------------------------------
                     o_ref, conv_buf):
    K = kernel_size
    pad = (K - 1) // 2

    # (1, D, T) channels-first block -> (T, D) with features on the lane axis.
    x = jnp.transpose(x_ref[0].astype(jnp.float32))            # (T, D)
    T, D = x.shape
    dh = D // n_head

    # ---------------- FeedForward 1 (half-step residual) --------------------
    h = _layer_norm(x, ff1_lng[...], ff1_lnb[...])
    h = _silu(_mm(h, ff1_w1, ff1_b1))
    h = _mm(h, ff1_w2, ff1_b2)
    x = 0.5 * h + x

    # ---------------- Multi-head self-attention -----------------------------
    y = _layer_norm(x, mh_lng[...], mh_lnb[...])
    q = _mm(y, wq, bq)
    k = _mm(y, wk, bk)
    v = _mm(y, wv, bv)

    # One relayout: stack the heads on a leading (batch) axis, then two batched
    # MXU einsums instead of n_head narrow per-head matmuls.
    def _heads(z):
        return jnp.stack(
            [z[:, i * dh:(i + 1) * dh] for i in range(n_head)], axis=0
        ).astype(jnp.bfloat16)                                  # (H, T, dh)

    qh, kh, vh = _heads(q), _heads(k), _heads(v)
    s = jnp.einsum('hqd,hkd->hqk', qh, kh,
                   preferred_element_type=jnp.float32)          # (H, T, T)
    s = s * (1.0 / float(dh) ** 0.5)
    s = s - jnp.max(s, axis=-1, keepdims=True)
    e = jnp.exp(s)
    a = e * pl.reciprocal(jnp.sum(e, axis=-1, keepdims=True), approx=True)
    oh = jnp.einsum('hqk,hkd->hqd', a.astype(jnp.bfloat16), vh,
                    preferred_element_type=jnp.float32)         # (H, T, dh)
    attn = jnp.concatenate([oh[i] for i in range(n_head)], axis=-1)  # (T, D)
    x = x + _mm(attn, wo, bo)

    # ---------------- Convolution module -------------------------------------
    c = _layer_norm(x, cv_lng[...], cv_lnb[...])
    c = _mm(c, pw1_w, pw1_b)                                    # (T, 2D)
    c = c[:, :D] * jax.nn.sigmoid(c[:, D:])                     # GLU
    # 'same' depthwise conv: write once into a zero-padded VMEM scratch, then
    # accumulate K shifted reads (no concatenate / per-tap padded copies).
    conv_buf[...] = jnp.zeros_like(conv_buf)
    conv_buf[pl.ds(pad, T), :] = c
    dw = dw_w[...]                                              # (K, D) f32
    acc = jnp.zeros((T, D), jnp.float32)
    for kk in range(K):
        acc = acc + conv_buf[pl.ds(kk, T), :] * dw[kk:kk + 1, :]
    c = acc + dw_b[...]
    c = c * bn_s[...] + bn_o[...]             # BatchNorm (eval), fused on host
    c = _silu(c)
    c = _mm(c, pw2_w, pw2_b)
    x = x + c

    # ---------------- FeedForward 2 (half-step residual) ---------------------
    h = _layer_norm(x, ff2_lng[...], ff2_lnb[...])
    h = _silu(_mm(h, ff2_w1, ff2_b1))
    h = _mm(h, ff2_w2, ff2_b2)
    x = 0.5 * h + x

    # ---------------- Final LayerNorm, back to channels-first (D, T) ---------
    y = _layer_norm(x, fin_lng[...], fin_lnb[...])
    o_ref[0] = jnp.transpose(y).astype(o_ref.dtype)


def init_params(key, D, kernel_size):
    """Deterministic synthetic weights (no checkpoint load). Matmul weights
    are stored in bf16 (MXU-native); vector params stay f32."""
    ks = iter(jax.random.split(key, 64))

    def rand(shape, fan_in, dtype=jnp.bfloat16):
        w = (jax.random.normal(next(ks), shape, jnp.float32)
             / jnp.sqrt(jnp.float32(fan_in)))
        return w.astype(dtype)

    ones = lambda *s: jnp.ones(s, jnp.float32)
    zeros = lambda *s: jnp.zeros(s, jnp.float32)

    params = []
    # FF1: LN, Linear(D,4D)+Swish, Linear(4D,D)
    params += [ones(1, D), zeros(1, D),
               rand((D, 4 * D), D), zeros(1, 4 * D),
               rand((4 * D, D), 4 * D), zeros(1, D)]
    # MHSA: LN, Wq/Wk/Wv/Wo (+ biases)
    params += [ones(1, D), zeros(1, D)]
    for _ in range(4):
        params += [rand((D, D), D), zeros(1, D)]
    # Conv module: LN, pointwise1 (D->2D, GLU), depthwise (K,D), fused eval
    # BatchNorm scale/bias, pointwise2 (D->D)
    bn_g, bn_b, bn_m, bn_v = ones(1, D), zeros(1, D), zeros(1, D), ones(1, D)
    bn_scale = bn_g * jax.lax.rsqrt(bn_v + EPS_BN)
    bn_bias = bn_b - bn_m * bn_scale
    params += [ones(1, D), zeros(1, D),
               rand((D, 2 * D), D), zeros(1, 2 * D),
               rand((kernel_size, D), kernel_size, jnp.float32), zeros(1, D),
               bn_scale, bn_bias,
               rand((D, D), D), zeros(1, D)]
    # FF2
    params += [ones(1, D), zeros(1, D),
               rand((D, 4 * D), D), zeros(1, 4 * D),
               rand((4 * D, D), 4 * D), zeros(1, D)]
    # Final LayerNorm
    params += [ones(1, D), zeros(1, D)]
    return params


def _vmem_limit_bytes():
    # v5e/v6e: 128 MiB physical VMEM; v7x: 64 MiB. Leave headroom.
    try:
        cap = pltpu.get_tpu_info().vmem_capacity_bytes
        return min(int(cap * 3 // 4), 96 * 1024 * 1024)
    except Exception:
        return None


def conformer_block(x_bdt, params, n_head, kernel_size):
    """x_bdt: (B, input_height, T) channels-first, as in the PyTorch module.
    Returns channels-first (B, input_height, T); no wrapper-side transposes."""
    assert kernel_size % 2 == 1, "depthwise 'same' conv requires odd kernel_size"
    B, D, T = x_bdt.shape
    assert D % n_head == 0

    in_specs = [pl.BlockSpec((1, D, T), lambda b: (b, 0, 0))]
    for w in params:
        nd = w.ndim
        # Constant index_map: weight tiles are fetched once and stay resident
        # across grid steps (no per-step re-DMA).
        in_specs.append(pl.BlockSpec(w.shape, lambda b, nd=nd: (0,) * nd))

    out = pl.pallas_call(
        functools.partial(conformer_kernel, n_head, kernel_size),
        out_shape=jax.ShapeDtypeStruct((B, D, T), jnp.float32),
        grid=(B,),
        in_specs=in_specs,
        out_specs=pl.BlockSpec((1, D, T), lambda b: (b, 0, 0)),
        scratch_shapes=[
            pltpu.VMEM((T + kernel_size - 1, D), jnp.float32),  # conv pad buf
        ],
        compiler_params=pltpu.CompilerParams(
            dimension_semantics=("parallel",),
            vmem_limit_bytes=_vmem_limit_bytes()),
    )(x_bdt.astype(jnp.float32), *params)

    return out


if __name__ == "__main__":
    B, D, T = 2, 32, 16            # batch, input_height, sequence length
    N_HEAD, KSIZE = 4, 3

    key = jax.random.PRNGKey(0)
    k_x, k_p = jax.random.split(key)
    x = jax.random.normal(k_x, (B, D, T), jnp.float32)   # (batch, input_height, seq)
    params = init_params(k_p, D, KSIZE)

    y = conformer_block(x, params, N_HEAD, KSIZE)
    jax.block_until_ready(y)
    assert y.shape == (B, D, T), y.shape
    assert bool(jnp.all(jnp.isfinite(y))), "non-finite output"
    print("KERNEL_OK")
</pallas_src>

<mosaic_0001>
module attributes {stable_mosaic.version = 11 : i64} {
  func.func @conformer_kernel(%arg0: i32, %arg1: memref<1x32x16xf32, #tpu.memory_space<vmem>>, %arg2: memref<1x32xf32, #tpu.memory_space<vmem>>, %arg3: memref<1x32xf32, #tpu.memory_space<vmem>>, %arg4: memref<32x128xbf16, #tpu.memory_space<vmem>>, %arg5: memref<1x128xf32, #tpu.memory_space<vmem>>, %arg6: memref<128x32xbf16, #tpu.memory_space<vmem>>, %arg7: memref<1x32xf32, #tpu.memory_space<vmem>>, %arg8: memref<1x32xf32, #tpu.memory_space<vmem>>, %arg9: memref<1x32xf32, #tpu.memory_space<vmem>>, %arg10: memref<32x32xbf16, #tpu.memory_space<vmem>>, %arg11: memref<1x32xf32, #tpu.memory_space<vmem>>, %arg12: memref<32x32xbf16, #tpu.memory_space<vmem>>, %arg13: memref<1x32xf32, #tpu.memory_space<vmem>>, %arg14: memref<32x32xbf16, #tpu.memory_space<vmem>>, %arg15: memref<1x32xf32, #tpu.memory_space<vmem>>, %arg16: memref<32x32xbf16, #tpu.memory_space<vmem>>, %arg17: memref<1x32xf32, #tpu.memory_space<vmem>>, %arg18: memref<1x32xf32, #tpu.memory_space<vmem>>, %arg19: memref<1x32xf32, #tpu.memory_space<vmem>>, %arg20: memref<32x64xbf16, #tpu.memory_space<vmem>>, %arg21: memref<1x64xf32, #tpu.memory_space<vmem>>, %arg22: memref<3x32xf32, #tpu.memory_space<vmem>>, %arg23: memref<1x32xf32, #tpu.memory_space<vmem>>, %arg24: memref<1x32xf32, #tpu.memory_space<vmem>>, %arg25: memref<1x32xf32, #tpu.memory_space<vmem>>, %arg26: memref<32x32xbf16, #tpu.memory_space<vmem>>, %arg27: memref<1x32xf32, #tpu.memory_space<vmem>>, %arg28: memref<1x32xf32, #tpu.memory_space<vmem>>, %arg29: memref<1x32xf32, #tpu.memory_space<vmem>>, %arg30: memref<32x128xbf16, #tpu.memory_space<vmem>>, %arg31: memref<1x128xf32, #tpu.memory_space<vmem>>, %arg32: memref<128x32xbf16, #tpu.memory_space<vmem>>, %arg33: memref<1x32xf32, #tpu.memory_space<vmem>>, %arg34: memref<1x32xf32, #tpu.memory_space<vmem>>, %arg35: memref<1x32xf32, #tpu.memory_space<vmem>>, %arg36: memref<1x32x16xf32, #tpu.memory_space<vmem>>, %arg37: memref<18x32xf32, #tpu.memory_space<vmem>>) attributes {dimension_semantics = [#tpu.dimension_semantics<parallel>], iteration_bounds = array<i64: 2>, scalar_prefetch = 0 : i64, scratch_operands = 1 : i64, tpu.core_type = #tpu.core_type<tc>, window_params = [{transform_indices = @transform_0, window_bounds = array<i64: 1, 32, 16>}, {pipeline_mode = #tpu.pipeline_mode<synchronous>, transform_indices = @transform_1, window_bounds = array<i64: 1, 32>}, {pipeline_mode = #tpu.pipeline_mode<synchronous>, transform_indices = @transform_2, window_bounds = array<i64: 1, 32>}, {pipeline_mode = #tpu.pipeline_mode<synchronous>, transform_indices = @transform_3, window_bounds = array<i64: 32, 128>}, {pipeline_mode = #tpu.pipeline_mode<synchronous>, transform_indices = @transform_4, window_bounds = array<i64: 1, 128>}, {pipeline_mode = #tpu.pipeline_mode<synchronous>, transform_indices = @transform_5, window_bounds = array<i64: 128, 32>}, {pipeline_mode = #tpu.pipeline_mode<synchronous>, transform_indices = @transform_6, window_bounds = array<i64: 1, 32>}, {pipeline_mode = #tpu.pipeline_mode<synchronous>, transform_indices = @transform_7, window_bounds = array<i64: 1, 32>}, {pipeline_mode = #tpu.pipeline_mode<synchronous>, transform_indices = @transform_8, window_bounds = array<i64: 1, 32>}, {pipeline_mode = #tpu.pipeline_mode<synchronous>, transform_indices = @transform_9, window_bounds = array<i64: 32, 32>}, {pipeline_mode = #tpu.pipeline_mode<synchronous>, transform_indices = @transform_10, window_bounds = array<i64: 1, 32>}, {pipeline_mode = #tpu.pipeline_mode<synchronous>, transform_indices = @transform_11, window_bounds = array<i64: 32, 32>}, {pipeline_mode = #tpu.pipeline_mode<synchronous>, transform_indices = @transform_12, window_bounds = array<i64: 1, 32>}, {pipeline_mode = #tpu.pipeline_mode<synchronous>, transform_indices = @transform_13, window_bounds = array<i64: 32, 32>}, {pipeline_mode = #tpu.pipeline_mode<synchronous>, transform_indices = @transform_14, window_bounds = array<i64: 1, 32>}, {pipeline_mode = #tpu.pipeline_mode<synchronous>, transform_indices = @transform_15, window_bounds = array<i64: 32, 32>}, {pipeline_mode = #tpu.pipeline_mode<synchronous>, transform_indices = @transform_16, window_bounds = array<i64: 1, 32>}, {pipeline_mode = #tpu.pipeline_mode<synchronous>, transform_indices = @transform_17, window_bounds = array<i64: 1, 32>}, {pipeline_mode = #tpu.pipeline_mode<synchronous>, transform_indices = @transform_18, window_bounds = array<i64: 1, 32>}, {pipeline_mode = #tpu.pipeline_mode<synchronous>, transform_indices = @transform_19, window_bounds = array<i64: 32, 64>}, {pipeline_mode = #tpu.pipeline_mode<synchronous>, transform_indices = @transform_20, window_bounds = array<i64: 1, 64>}, {pipeline_mode = #tpu.pipeline_mode<synchronous>, transform_indices = @transform_21, window_bounds = array<i64: 3, 32>}, {pipeline_mode = #tpu.pipeline_mode<synchronous>, transform_indices = @transform_22, window_bounds = array<i64: 1, 32>}, {pipeline_mode = #tpu.pipeline_mode<synchronous>, transform_indices = @transform_23, window_bounds = array<i64: 1, 32>}, {pipeline_mode = #tpu.pipeline_mode<synchronous>, transform_indices = @transform_24, window_bounds = array<i64: 1, 32>}, {pipeline_mode = #tpu.pipeline_mode<synchronous>, transform_indices = @transform_25, window_bounds = array<i64: 32, 32>}, {pipeline_mode = #tpu.pipeline_mode<synchronous>, transform_indices = @transform_26, window_bounds = array<i64: 1, 32>}, {pipeline_mode = #tpu.pipeline_mode<synchronous>, transform_indices = @transform_27, window_bounds = array<i64: 1, 32>}, {pipeline_mode = #tpu.pipeline_mode<synchronous>, transform_indices = @transform_28, window_bounds = array<i64: 1, 32>}, {pipeline_mode = #tpu.pipeline_mode<synchronous>, transform_indices = @transform_29, window_bounds = array<i64: 32, 128>}, {pipeline_mode = #tpu.pipeline_mode<synchronous>, transform_indices = @transform_30, window_bounds = array<i64: 1, 128>}, {pipeline_mode = #tpu.pipeline_mode<synchronous>, transform_indices = @transform_31, window_bounds = array<i64: 128, 32>}, {pipeline_mode = #tpu.pipeline_mode<synchronous>, transform_indices = @transform_32, window_bounds = array<i64: 1, 32>}, {pipeline_mode = #tpu.pipeline_mode<synchronous>, transform_indices = @transform_33, window_bounds = array<i64: 1, 32>}, {pipeline_mode = #tpu.pipeline_mode<synchronous>, transform_indices = @transform_34, window_bounds = array<i64: 1, 32>}, {transform_indices = @transform_35, window_bounds = array<i64: 1, 32, 16>}]} {
    %c0 = arith.constant 0 : index
    %c0_0 = arith.constant 0 : index
    %c0_1 = arith.constant 0 : index
    %0 = vector.load %arg1[%c0, %c0_0, %c0_1] : memref<1x32x16xf32, #tpu.memory_space<vmem>>, vector<1x32x16xf32>
    %1 = vector.shape_cast %0 : vector<1x32x16xf32> to vector<32x16xf32>
    %2 = tpu.transpose %1, [1, 0] : vector<32x16xf32> -> vector<16x32xf32>
    %c0_2 = arith.constant 0 : index
    %c0_3 = arith.constant 0 : index
    %3 = vector.load %arg2[%c0_2, %c0_3] : memref<1x32xf32, #tpu.memory_space<vmem>>, vector<1x32xf32>
    %c0_4 = arith.constant 0 : index
    %c0_5 = arith.constant 0 : index
    %4 = vector.load %arg3[%c0_4, %c0_5] : memref<1x32xf32, #tpu.memory_space<vmem>>, vector<1x32xf32>
    %cst = arith.constant dense<0.000000e+00> : vector<16xf32>
    %5 = vector.multi_reduction <add>, %2, %cst [1] : vector<16x32xf32> to vector<16xf32>
    %6 = vector.shape_cast %5 : vector<16xf32> to vector<16x1xf32>
    %cst_6 = arith.constant 3.200000e+01 : f32
    %7 = vector.broadcast %cst_6 : f32 to vector<16x1xf32>
    %8 = arith.divf %6, %7 : vector<16x1xf32>
    %9 = vector.broadcast %8 : vector<16x1xf32> to vector<16x32xf32>
    %10 = arith.subf %2, %9 : vector<16x32xf32>
    %11 = arith.mulf %10, %10 : vector<16x32xf32>
    %cst_7 = arith.constant dense<0.000000e+00> : vector<16xf32>
    %12 = vector.multi_reduction <add>, %11, %cst_7 [1] : vector<16x32xf32> to vector<16xf32>
    %13 = vector.shape_cast %12 : vector<16xf32> to vector<16x1xf32>
    %cst_8 = arith.constant 3.200000e+01 : f32
    %14 = vector.broadcast %cst_8 : f32 to vector<16x1xf32>
    %15 = arith.divf %13, %14 : vector<16x1xf32>
    %16 = vector.broadcast %8 : vector<16x1xf32> to vector<16x32xf32>
    %17 = arith.subf %2, %16 : vector<16x32xf32>
    %cst_9 = arith.constant 9.99999974E-6 : f32
    %18 = vector.broadcast %cst_9 : f32 to vector<16x1xf32>
    %19 = arith.addf %15, %18 : vector<16x1xf32>
    %20 = math.rsqrt %19 : vector<16x1xf32>
    %21 = vector.broadcast %20 : vector<16x1xf32> to vector<16x32xf32>
    %22 = arith.mulf %17, %21 : vector<16x32xf32>
    %23 = vector.broadcast %3 : vector<1x32xf32> to vector<16x32xf32>
    %24 = arith.mulf %22, %23 : vector<16x32xf32>
    %25 = vector.broadcast %4 : vector<1x32xf32> to vector<16x32xf32>
    %26 = arith.addf %24, %25 : vector<16x32xf32>
    %27 = arith.truncf %26 : vector<16x32xf32> to vector<16x32xbf16>
    %c0_10 = arith.constant 0 : index
    %c0_11 = arith.constant 0 : index
    %28 = vector.load %arg4[%c0_10, %c0_11] : memref<32x128xbf16, #tpu.memory_space<vmem>>, vector<32x128xbf16>
    %cst_12 = arith.constant dense<0.000000e+00> : vector<16x128xf32>
    %29 = tpu.matmul %27, %28, %cst_12 {dimension_numbers = #tpu.dot_dimension_numbers<[1], [0], [0], [1], [0, 0, 1, 1], [], []>} : vector<16x32xbf16>, vector<32x128xbf16>, vector<16x128xf32> -> vector<16x128xf32>
    %c0_13 = arith.constant 0 : index
    %c0_14 = arith.constant 0 : index
    %30 = vector.load %arg5[%c0_13, %c0_14] : memref<1x128xf32, #tpu.memory_space<vmem>>, vector<1x128xf32>
    %31 = vector.broadcast %30 : vector<1x128xf32> to vector<16x128xf32>
    %32 = arith.addf %29, %31 : vector<16x128xf32>
    %33 = arith.negf %32 : vector<16x128xf32>
    %34 = math.exp %33 : vector<16x128xf32>
    %cst_15 = arith.constant 1.000000e+00 : f32
    %35 = vector.broadcast %cst_15 : f32 to vector<16x128xf32>
    %36 = arith.addf %35, %34 : vector<16x128xf32>
    %37 = arith.divf %35, %36 : vector<16x128xf32>
    %38 = arith.mulf %32, %37 : vector<16x128xf32>
    %39 = arith.truncf %38 : vector<16x128xf32> to vector<16x128xbf16>
    %c0_16 = arith.constant 0 : index
    %c0_17 = arith.constant 0 : index
    %40 = vector.load %arg6[%c0_16, %c0_17] : memref<128x32xbf16, #tpu.memory_space<vmem>>, vector<128x32xbf16>
    %cst_18 = arith.constant dense<0.000000e+00> : vector<16x32xf32>
    %41 = tpu.matmul %39, %40, %cst_18 {dimension_numbers = #tpu.dot_dimension_numbers<[1], [0], [0], [1], [0, 0, 1, 1], [], []>} : vector<16x128xbf16>, vector<128x32xbf16>, vector<16x32xf32> -> vector<16x32xf32>
    %c0_19 = arith.constant 0 : index
    %c0_20 = arith.constant 0 : index
    %42 = vector.load %arg7[%c0_19, %c0_20] : memref<1x32xf32, #tpu.memory_space<vmem>>, vector<1x32xf32>
    %43 = vector.broadcast %42 : vector<1x32xf32> to vector<16x32xf32>
    %44 = arith.addf %41, %43 : vector<16x32xf32>
    %cst_21 = arith.constant 5.000000e-01 : f32
    %45 = vector.broadcast %cst_21 : f32 to vector<16x32xf32>
    %46 = arith.mulf %45, %44 : vector<16x32xf32>
    %47 = arith.addf %46, %2 : vector<16x32xf32>
    %c0_22 = arith.constant 0 : index
    %c0_23 = arith.constant 0 : index
    %48 = vector.load %arg8[%c0_22, %c0_23] : memref<1x32xf32, #tpu.memory_space<vmem>>, vector<1x32xf32>
    %c0_24 = arith.constant 0 : index
    %c0_25 = arith.constant 0 : index
    %49 = vector.load %arg9[%c0_24, %c0_25] : memref<1x32xf32, #tpu.memory_space<vmem>>, vector<1x32xf32>
    %cst_26 = arith.constant dense<0.000000e+00> : vector<16xf32>
    %50 = vector.multi_reduction <add>, %47, %cst_26 [1] : vector<16x32xf32> to vector<16xf32>
    %51 = vector.shape_cast %50 : vector<16xf32> to vector<16x1xf32>
    %cst_27 = arith.constant 3.200000e+01 : f32
    %52 = vector.broadcast %cst_27 : f32 to vector<16x1xf32>
    %53 = arith.divf %51, %52 : vector<16x1xf32>
    %54 = vector.broadcast %53 : vector<16x1xf32> to vector<16x32xf32>
    %55 = arith.subf %47, %54 : vector<16x32xf32>
    %56 = arith.mulf %55, %55 : vector<16x32xf32>
    %cst_28 = arith.constant dense<0.000000e+00> : vector<16xf32>
    %57 = vector.multi_reduction <add>, %56, %cst_28 [1] : vector<16x32xf32> to vector<16xf32>
    %58 = vector.shape_cast %57 : vector<16xf32> to vector<16x1xf32>
    %cst_29 = arith.constant 3.200000e+01 : f32
    %59 = vector.broadcast %cst_29 : f32 to vector<16x1xf32>
    %60 = arith.divf %58, %59 : vector<16x1xf32>
    %61 = vector.broadcast %53 : vector<16x1xf32> to vector<16x32xf32>
    %62 = arith.subf %47, %61 : vector<16x32xf32>
    %cst_30 = arith.constant 9.99999974E-6 : f32
    %63 = vector.broadcast %cst_30 : f32 to vector<16x1xf32>
    %64 = arith.addf %60, %63 : vector<16x1xf32>
    %65 = math.rsqrt %64 : vector<16x1xf32>
    %66 = vector.broadcast %65 : vector<16x1xf32> to vector<16x32xf32>
    %67 = arith.mulf %62, %66 : vector<16x32xf32>
    %68 = vector.broadcast %48 : vector<1x32xf32> to vector<16x32xf32>
    %69 = arith.mulf %67, %68 : vector<16x32xf32>
    %70 = vector.broadcast %49 : vector<1x32xf32> to vector<16x32xf32>
    %71 = arith.addf %69, %70 : vector<16x32xf32>
    %72 = arith.truncf %71 : vector<16x32xf32> to vector<16x32xbf16>
    %c0_31 = arith.constant 0 : index
    %c0_32 = arith.constant 0 : index
    %73 = vector.load %arg10[%c0_31, %c0_32] : memref<32x32xbf16, #tpu.memory_space<vmem>>, vector<32x32xbf16>
    %cst_33 = arith.constant dense<0.000000e+00> : vector<16x32xf32>
    %74 = tpu.matmul %72, %73, %cst_33 {dimension_numbers = #tpu.dot_dimension_numbers<[1], [0], [0], [1], [0, 0, 1, 1], [], []>} : vector<16x32xbf16>, vector<32x32xbf16>, vector<16x32xf32> -> vector<16x32xf32>
    %c0_34 = arith.constant 0 : index
    %c0_35 = arith.constant 0 : index
    %75 = vector.load %arg11[%c0_34, %c0_35] : memref<1x32xf32, #tpu.memory_space<vmem>>, vector<1x32xf32>
    %76 = vector.broadcast %75 : vector<1x32xf32> to vector<16x32xf32>
    %77 = arith.addf %74, %76 : vector<16x32xf32>
    %78 = arith.truncf %71 : vector<16x32xf32> to vector<16x32xbf16>
    %c0_36 = arith.constant 0 : index
    %c0_37 = arith.constant 0 : index
    %79 = vector.load %arg12[%c0_36, %c0_37] : memref<32x32xbf16, #tpu.memory_space<vmem>>, vector<32x32xbf16>
    %cst_38 = arith.constant dense<0.000000e+00> : vector<16x32xf32>
    %80 = tpu.matmul %78, %79, %cst_38 {dimension_numbers = #tpu.dot_dimension_numbers<[1], [0], [0], [1], [0, 0, 1, 1], [], []>} : vector<16x32xbf16>, vector<32x32xbf16>, vector<16x32xf32> -> vector<16x32xf32>
    %c0_39 = arith.constant 0 : index
    %c0_40 = arith.constant 0 : index
    %81 = vector.load %arg13[%c0_39, %c0_40] : memref<1x32xf32, #tpu.memory_space<vmem>>, vector<1x32xf32>
    %82 = vector.broadcast %81 : vector<1x32xf32> to vector<16x32xf32>
    %83 = arith.addf %80, %82 : vector<16x32xf32>
    %84 = arith.truncf %71 : vector<16x32xf32> to vector<16x32xbf16>
    %c0_41 = arith.constant 0 : index
    %c0_42 = arith.constant 0 : index
    %85 = vector.load %arg14[%c0_41, %c0_42] : memref<32x32xbf16, #tpu.memory_space<vmem>>, vector<32x32xbf16>
    %cst_43 = arith.constant dense<0.000000e+00> : vector<16x32xf32>
    %86 = tpu.matmul %84, %85, %cst_43 {dimension_numbers = #tpu.dot_dimension_numbers<[1], [0], [0], [1], [0, 0, 1, 1], [], []>} : vector<16x32xbf16>, vector<32x32xbf16>, vector<16x32xf32> -> vector<16x32xf32>
    %c0_44 = arith.constant 0 : index
    %c0_45 = arith.constant 0 : index
    %87 = vector.load %arg15[%c0_44, %c0_45] : memref<1x32xf32, #tpu.memory_space<vmem>>, vector<1x32xf32>
    %88 = vector.broadcast %87 : vector<1x32xf32> to vector<16x32xf32>
    %89 = arith.addf %86, %88 : vector<16x32xf32>
    %90 = vector.extract_strided_slice %77 {offsets = [0, 0], sizes = [16, 8], strides = [1, 1]} : vector<16x32xf32> to vector<16x8xf32>
    %91 = vector.extract_strided_slice %77 {offsets = [0, 8], sizes = [16, 8], strides = [1, 1]} : vector<16x32xf32> to vector<16x8xf32>
    %92 = vector.extract_strided_slice %77 {offsets = [0, 16], sizes = [16, 8], strides = [1, 1]} : vector<16x32xf32> to vector<16x8xf32>
    %93 = vector.extract_strided_slice %77 {offsets = [0, 24], sizes = [16, 8], strides = [1, 1]} : vector<16x32xf32> to vector<16x8xf32>
    %94 = vector.shape_cast %90 : vector<16x8xf32> to vector<1x16x8xf32>
    %95 = vector.shape_cast %91 : vector<16x8xf32> to vector<1x16x8xf32>
    %96 = vector.shape_cast %92 : vector<16x8xf32> to vector<1x16x8xf32>
    %97 = vector.shape_cast %93 : vector<16x8xf32> to vector<1x16x8xf32>
    %98 = tpu.concatenate %94, %95, %96, %97 in 0 : vector<1x16x8xf32>, vector<1x16x8xf32>, vector<1x16x8xf32>, vector<1x16x8xf32> -> vector<4x16x8xf32>
    %99 = arith.truncf %98 : vector<4x16x8xf32> to vector<4x16x8xbf16>
    %100 = vector.extract_strided_slice %83 {offsets = [0, 0], sizes = [16, 8], strides = [1, 1]} : vector<16x32xf32> to vector<16x8xf32>
    %101 = vector.extract_strided_slice %83 {offsets = [0, 8], sizes = [16, 8], strides = [1, 1]} : vector<16x32xf32> to vector<16x8xf32>
    %102 = vector.extract_strided_slice %83 {offsets = [0, 16], sizes = [16, 8], strides = [1, 1]} : vector<16x32xf32> to vector<16x8xf32>
    %103 = vector.extract_strided_slice %83 {offsets = [0, 24], sizes = [16, 8], strides = [1, 1]} : vector<16x32xf32> to vector<16x8xf32>
    %104 = vector.shape_cast %100 : vector<16x8xf32> to vector<1x16x8xf32>
    %105 = vector.shape_cast %101 : vector<16x8xf32> to vector<1x16x8xf32>
    %106 = vector.shape_cast %102 : vector<16x8xf32> to vector<1x16x8xf32>
    %107 = vector.shape_cast %103 : vector<16x8xf32> to vector<1x16x8xf32>
    %108 = tpu.concatenate %104, %105, %106, %107 in 0 : vector<1x16x8xf32>, vector<1x16x8xf32>, vector<1x16x8xf32>, vector<1x16x8xf32> -> vector<4x16x8xf32>
    %109 = arith.truncf %108 : vector<4x16x8xf32> to vector<4x16x8xbf16>
    %110 = vector.extract_strided_slice %89 {offsets = [0, 0], sizes = [16, 8], strides = [1, 1]} : vector<16x32xf32> to vector<16x8xf32>
    %111 = vector.extract_strided_slice %89 {offsets = [0, 8], sizes = [16, 8], strides = [1, 1]} : vector<16x32xf32> to vector<16x8xf32>
    %112 = vector.extract_strided_slice %89 {offsets = [0, 16], sizes = [16, 8], strides = [1, 1]} : vector<16x32xf32> to vector<16x8xf32>
    %113 = vector.extract_strided_slice %89 {offsets = [0, 24], sizes = [16, 8], strides = [1, 1]} : vector<16x32xf32> to vector<16x8xf32>
    %114 = vector.shape_cast %110 : vector<16x8xf32> to vector<1x16x8xf32>
    %115 = vector.shape_cast %111 : vector<16x8xf32> to vector<1x16x8xf32>
    %116 = vector.shape_cast %112 : vector<16x8xf32> to vector<1x16x8xf32>
    %117 = vector.shape_cast %113 : vector<16x8xf32> to vector<1x16x8xf32>
    %118 = tpu.concatenate %114, %115, %116, %117 in 0 : vector<1x16x8xf32>, vector<1x16x8xf32>, vector<1x16x8xf32>, vector<1x16x8xf32> -> vector<4x16x8xf32>
    %119 = arith.truncf %118 : vector<4x16x8xf32> to vector<4x16x8xbf16>
    "tpu.trace_start"() <{level = 10 : i32, message = "hqd,hkd->hqk"}> : () -> ()
    %cst_46 = arith.constant dense<0.000000e+00> : vector<4x16x16xf32>
    %120 = tpu.matmul %99, %109, %cst_46 {dimension_numbers = #tpu.dot_dimension_numbers<[2], [2], [1], [1], [0, 0, 0, 1, 1, 1], [0], [0]>} : vector<4x16x8xbf16>, vector<4x16x8xbf16>, vector<4x16x16xf32> -> vector<4x16x16xf32>
    "tpu.trace_stop"() : () -> ()
    %cst_47 = arith.constant 0.353553385 : f32
    %121 = vector.broadcast %cst_47 : f32 to vector<4x16x16xf32>
    %122 = arith.mulf %120, %121 : vector<4x16x16xf32>
    %cst_48 = arith.constant dense<0xFF800000> : vector<4x16xf32>
    %123 = vector.multi_reduction <maximumf>, %122, %cst_48 [2] : vector<4x16x16xf32> to vector<4x16xf32>
    %124 = vector.shape_cast %123 : vector<4x16xf32> to vector<4x16x1xf32>
    %125 = vector.broadcast %124 : vector<4x16x1xf32> to vector<4x16x16xf32>
    %126 = arith.subf %122, %125 : vector<4x16x16xf32>
    %127 = math.exp %126 : vector<4x16x16xf32>
    %cst_49 = arith.constant dense<0.000000e+00> : vector<4x16xf32>
    %128 = vector.multi_reduction <add>, %127, %cst_49 [2] : vector<4x16x16xf32> to vector<4x16xf32>
    %129 = vector.shape_cast %128 : vector<4x16xf32> to vector<4x16x1xf32>
    %130 = tpu.reciprocal %129 {approx = true} : vector<4x16x1xf32> -> vector<4x16x1xf32>
    %131 = vector.broadcast %130 : vector<4x16x1xf32> to vector<4x16x16xf32>
    %132 = arith.mulf %127, %131 : vector<4x16x16xf32>
    %133 = arith.truncf %132 : vector<4x16x16xf32> to vector<4x16x16xbf16>
    "tpu.trace_start"() <{level = 10 : i32, message = "hqk,hkd->hqd"}> : () -> ()
    %cst_50 = arith.constant dense<0.000000e+00> : vector<4x16x8xf32>
    %134 = tpu.matmul %133, %119, %cst_50 {dimension_numbers = #tpu.dot_dimension_numbers<[2], [1], [1], [2], [0, 0, 0, 1, 1, 2], [0], [0]>} : vector<4x16x16xbf16>, vector<4x16x8xbf16>, vector<4x16x8xf32> -> vector<4x16x8xf32>
    "tpu.trace_stop"() : () -> ()
    %135 = vector.extract_strided_slice %134 {offsets = [0, 0, 0], sizes = [1, 16, 8], strides = [1, 1, 1]} : vector<4x16x8xf32> to vector<1x16x8xf32>
    %136 = vector.shape_cast %135 : vector<1x16x8xf32> to vector<16x8xf32>
    %137 = vector.extract_strided_slice %134 {offsets = [1, 0, 0], sizes = [1, 16, 8], strides = [1, 1, 1]} : vector<4x16x8xf32> to vector<1x16x8xf32>
    %138 = vector.shape_cast %137 : vector<1x16x8xf32> to vector<16x8xf32>
    %139 = vector.extract_strided_slice %134 {offsets = [2, 0, 0], sizes = [1, 16, 8], strides = [1, 1, 1]} : vector<4x16x8xf32> to vector<1x16x8xf32>
    %140 = vector.shape_cast %139 : vector<1x16x8xf32> to vector<16x8xf32>
    %141 = vector.extract_strided_slice %134 {offsets = [3, 0, 0], sizes = [1, 16, 8], strides = [1, 1, 1]} : vector<4x16x8xf32> to vector<1x16x8xf32>
    %142 = vector.shape_cast %141 : vector<1x16x8xf32> to vector<16x8xf32>
    %143 = tpu.concatenate %136, %138, %140, %142 in 1 : vector<16x8xf32>, vector<16x8xf32>, vector<16x8xf32>, vector<16x8xf32> -> vector<16x32xf32>
    %144 = arith.truncf %143 : vector<16x32xf32> to vector<16x32xbf16>
    %c0_51 = arith.constant 0 : index
    %c0_52 = arith.constant 0 : index
    %145 = vector.load %arg16[%c0_51, %c0_52] : memref<32x32xbf16, #tpu.memory_space<vmem>>, vector<32x32xbf16>
    %cst_53 = arith.constant dense<0.000000e+00> : vector<16x32xf32>
    %146 = tpu.matmul %144, %145, %cst_53 {dimension_numbers = #tpu.dot_dimension_numbers<[1], [0], [0], [1], [0, 0, 1, 1], [], []>} : vector<16x32xbf16>, vector<32x32xbf16>, vector<16x32xf32> -> vector<16x32xf32>
    %c0_54 = arith.constant 0 : index
    %c0_55 = arith.constant 0 : index
    %147 = vector.load %arg17[%c0_54, %c0_55] : memref<1x32xf32, #tpu.memory_space<vmem>>, vector<1x32xf32>
    %148 = vector.broadcast %147 : vector<1x32xf32> to vector<16x32xf32>
    %149 = arith.addf %146, %148 : vector<16x32xf32>
    %150 = arith.addf %47, %149 : vector<16x32xf32>
    %c0_56 = arith.constant 0 : index
    %c0_57 = arith.constant 0 : index
    %151 = vector.load %arg18[%c0_56, %c0_57] : memref<1x32xf32, #tpu.memory_space<vmem>>, vector<1x32xf32>
    %c0_58 = arith.constant 0 : index
    %c0_59 = arith.constant 0 : index
    %152 = vector.load %arg19[%c0_58, %c0_59] : memref<1x32xf32, #tpu.memory_space<vmem>>, vector<1x32xf32>
    %cst_60 = arith.constant dense<0.000000e+00> : vector<16xf32>
    %153 = vector.multi_reduction <add>, %150, %cst_60 [1] : vector<16x32xf32> to vector<16xf32>
    %154 = vector.shape_cast %153 : vector<16xf32> to vector<16x1xf32>
    %cst_61 = arith.constant 3.200000e+01 : f32
    %155 = vector.broadcast %cst_61 : f32 to vector<16x1xf32>
    %156 = arith.divf %154, %155 : vector<16x1xf32>
    %157 = vector.broadcast %156 : vector<16x1xf32> to vector<16x32xf32>
    %158 = arith.subf %150, %157 : vector<16x32xf32>
    %159 = arith.mulf %158, %158 : vector<16x32xf32>
    %cst_62 = arith.constant dense<0.000000e+00> : vector<16xf32>
    %160 = vector.multi_reduction <add>, %159, %cst_62 [1] : vector<16x32xf32> to vector<16xf32>
    %161 = vector.shape_cast %160 : vector<16xf32> to vector<16x1xf32>
    %cst_63 = arith.constant 3.200000e+01 : f32
    %162 = vector.broadcast %cst_63 : f32 to vector<16x1xf32>
    %163 = arith.divf %161, %162 : vector<16x1xf32>
    %164 = vector.broadcast %156 : vector<16x1xf32> to vector<16x32xf32>
    %165 = arith.subf %150, %164 : vector<16x32xf32>
    %cst_64 = arith.constant 9.99999974E-6 : f32
    %166 = vector.broadcast %cst_64 : f32 to vector<16x1xf32>
    %167 = arith.addf %163, %166 : vector<16x1xf32>
    %168 = math.rsqrt %167 : vector<16x1xf32>
    %169 = vector.broadcast %168 : vector<16x1xf32> to vector<16x32xf32>
    %170 = arith.mulf %165, %169 : vector<16x32xf32>
    %171 = vector.broadcast %151 : vector<1x32xf32> to vector<16x32xf32>
    %172 = arith.mulf %170, %171 : vector<16x32xf32>
    %173 = vector.broadcast %152 : vector<1x32xf32> to vector<16x32xf32>
    %174 = arith.addf %172, %173 : vector<16x32xf32>
    %175 = arith.truncf %174 : vector<16x32xf32> to vector<16x32xbf16>
    %c0_65 = arith.constant 0 : index
    %c0_66 = arith.constant 0 : index
    %176 = vector.load %arg20[%c0_65, %c0_66] : memref<32x64xbf16, #tpu.memory_space<vmem>>, vector<32x64xbf16>
    %cst_67 = arith.constant dense<0.000000e+00> : vector<16x64xf32>
    %177 = tpu.matmul %175, %176, %cst_67 {dimension_numbers = #tpu.dot_dimension_numbers<[1], [0], [0], [1], [0, 0, 1, 1], [], []>} : vector<16x32xbf16>, vector<32x64xbf16>, vector<16x64xf32> -> vector<16x64xf32>
    %c0_68 = arith.constant 0 : index
    %c0_69 = arith.constant 0 : index
    %178 = vector.load %arg21[%c0_68, %c0_69] : memref<1x64xf32, #tpu.memory_space<vmem>>, vector<1x64xf32>
    %179 = vector.broadcast %178 : vector<1x64xf32> to vector<16x64xf32>
    %180 = arith.addf %177, %179 : vector<16x64xf32>
    %181 = vector.extract_strided_slice %180 {offsets = [0, 0], sizes = [16, 32], strides = [1, 1]} : vector<16x64xf32> to vector<16x32xf32>
    %182 = vector.extract_strided_slice %180 {offsets = [0, 32], sizes = [16, 32], strides = [1, 1]} : vector<16x64xf32> to vector<16x32xf32>
    %183 = arith.negf %182 : vector<16x32xf32>
    %184 = math.exp %183 : vector<16x32xf32>
    %cst_70 = arith.constant 1.000000e+00 : f32
    %185 = vector.broadcast %cst_70 : f32 to vector<16x32xf32>
    %186 = arith.addf %185, %184 : vector<16x32xf32>
    %187 = arith.divf %185, %186 : vector<16x32xf32>
    %188 = arith.mulf %181, %187 : vector<16x32xf32>
    %cst_71 = arith.constant 0.000000e+00 : f32
    %189 = vector.broadcast %cst_71 : f32 to vector<18x32xf32>
    %c0_72 = arith.constant 0 : index
    %c0_73 = arith.constant 0 : index
    %190 = vector.load %arg37[%c0_72, %c0_73] : memref<18x32xf32, #tpu.memory_space<vmem>>, vector<18x32xf32>
    tpu.vector_store %arg37[%c0_72, %c0_73], %189 {strides = array<i32>} : memref<18x32xf32, #tpu.memory_space<vmem>>, vector<18x32xf32>,
    %c1 = arith.constant 1 : index
    %c0_74 = arith.constant 0 : index
    %191 = vector.load %arg37[%c1, %c0_74] : memref<18x32xf32, #tpu.memory_space<vmem>>, vector<16x32xf32>
    tpu.vector_store %arg37[%c1, %c0_74], %188 {strides = array<i32>} : memref<18x32xf32, #tpu.memory_space<vmem>>, vector<16x32xf32>,
    %c0_75 = arith.constant 0 : index
    %c0_76 = arith.constant 0 : index
    %192 = vector.load %arg22[%c0_75, %c0_76] : memref<3x32xf32, #tpu.memory_space<vmem>>, vector<3x32xf32>
    %cst_77 = arith.constant 0.000000e+00 : f32
    %193 = vector.broadcast %cst_77 : f32 to vector<16x32xf32>
    %c0_78 = arith.constant 0 : index
    %c0_79 = arith.constant 0 : index
    %194 = vector.load %arg37[%c0_78, %c0_79] : memref<18x32xf32, #tpu.memory_space<vmem>>, vector<16x32xf32>
    %195 = vector.extract_strided_slice %192 {offsets = [0, 0], sizes = [1, 32], strides = [1, 1]} : vector<3x32xf32> to vector<1x32xf32>
    %196 = vector.broadcast %195 : vector<1x32xf32> to vector<16x32xf32>
    %197 = arith.mulf %194, %196 : vector<16x32xf32>
    %198 = arith.addf %193, %197 : vector<16x32xf32>
    %c1_80 = arith.constant 1 : index
    %c0_81 = arith.constant 0 : index
    %199 = vector.load %arg37[%c1_80, %c0_81] : memref<18x32xf32, #tpu.memory_space<vmem>>, vector<16x32xf32>
    %200 = vector.extract_strided_slice %192 {offsets = [1, 0], sizes = [1, 32], strides = [1, 1]} : vector<3x32xf32> to vector<1x32xf32>
    %201 = vector.broadcast %200 : vector<1x32xf32> to vector<16x32xf32>
    %202 = arith.mulf %199, %201 : vector<16x32xf32>
    %203 = arith.addf %198, %202 : vector<16x32xf32>
    %c2 = arith.constant 2 : index
    %c0_82 = arith.constant 0 : index
    %204 = vector.load %arg37[%c2, %c0_82] : memref<18x32xf32, #tpu.memory_space<vmem>>, vector<16x32xf32>
    %205 = vector.extract_strided_slice %192 {offsets = [2, 0], sizes = [1, 32], strides = [1, 1]} : vector<3x32xf32> to vector<1x32xf32>
    %206 = vector.broadcast %205 : vector<1x32xf32> to vector<16x32xf32>
    %207 = arith.mulf %204, %206 : vector<16x32xf32>
    %208 = arith.addf %203, %207 : vector<16x32xf32>
    %c0_83 = arith.constant 0 : index
    %c0_84 = arith.constant 0 : index
    %209 = vector.load %arg23[%c0_83, %c0_84] : memref<1x32xf32, #tpu.memory_space<vmem>>, vector<1x32xf32>
    %210 = vector.broadcast %209 : vector<1x32xf32> to vector<16x32xf32>
    %211 = arith.addf %208, %210 : vector<16x32xf32>
    %c0_85 = arith.constant 0 : index
    %c0_86 = arith.constant 0 : index
    %212 = vector.load %arg24[%c0_85, %c0_86] : memref<1x32xf32, #tpu.memory_space<vmem>>, vector<1x32xf32>
    %213 = vector.broadcast %212 : vector<1x32xf32> to vector<16x32xf32>
    %214 = arith.mulf %211, %213 : vector<16x32xf32>
    %c0_87 = arith.constant 0 : index
    %c0_88 = arith.constant 0 : index
    %215 = vector.load %arg25[%c0_87, %c0_88] : memref<1x32xf32, #tpu.memory_space<vmem>>, vector<1x32xf32>
    %216 = vector.broadcast %215 : vector<1x32xf32> to vector<16x32xf32>
    %217 = arith.addf %214, %216 : vector<16x32xf32>
    %218 = arith.negf %217 : vector<16x32xf32>
    %219 = math.exp %218 : vector<16x32xf32>
    %cst_89 = arith.constant 1.000000e+00 : f32
    %220 = vector.broadcast %cst_89 : f32 to vector<16x32xf32>
    %221 = arith.addf %220, %219 : vector<16x32xf32>
    %222 = arith.divf %220, %221 : vector<16x32xf32>
    %223 = arith.mulf %217, %222 : vector<16x32xf32>
    %224 = arith.truncf %223 : vector<16x32xf32> to vector<16x32xbf16>
    %c0_90 = arith.constant 0 : index
    %c0_91 = arith.constant 0 : index
    %225 = vector.load %arg26[%c0_90, %c0_91] : memref<32x32xbf16, #tpu.memory_space<vmem>>, vector<32x32xbf16>
    %cst_92 = arith.constant dense<0.000000e+00> : vector<16x32xf32>
    %226 = tpu.matmul %224, %225, %cst_92 {dimension_numbers = #tpu.dot_dimension_numbers<[1], [0], [0], [1], [0, 0, 1, 1], [], []>} : vector<16x32xbf16>, vector<32x32xbf16>, vector<16x32xf32> -> vector<16x32xf32>
    %c0_93 = arith.constant 0 : index
    %c0_94 = arith.constant 0 : index
    %227 = vector.load %arg27[%c0_93, %c0_94] : memref<1x32xf32, #tpu.memory_space<vmem>>, vector<1x32xf32>
    %228 = vector.broadcast %227 : vector<1x32xf32> to vector<16x32xf32>
    %229 = arith.addf %226, %228 : vector<16x32xf32>
    %230 = arith.addf %150, %229 : vector<16x32xf32>
    %c0_95 = arith.constant 0 : index
    %c0_96 = arith.constant 0 : index
    %231 = vector.load %arg28[%c0_95, %c0_96] : memref<1x32xf32, #tpu.memory_space<vmem>>, vector<1x32xf32>
    %c0_97 = arith.constant 0 : index
    %c0_98 = arith.constant 0 : index
    %232 = vector.load %arg29[%c0_97, %c0_98] : memref<1x32xf32, #tpu.memory_space<vmem>>, vector<1x32xf32>
    %cst_99 = arith.constant dense<0.000000e+00> : vector<16xf32>
    %233 = vector.multi_reduction <add>, %230, %cst_99 [1] : vector<16x32xf32> to vector<16xf32>
    %234 = vector.shape_cast %233 : vector<16xf32> to vector<16x1xf32>
    %cst_100 = arith.constant 3.200000e+01 : f32
    %235 = vector.broadcast %cst_100 : f32 to vector<16x1xf32>
    %236 = arith.divf %234, %235 : vector<16x1xf32>
    %237 = vector.broadcast %236 : vector<16x1xf32> to vector<16x32xf32>
    %238 = arith.subf %230, %237 : vector<16x32xf32>
    %239 = arith.mulf %238, %238 : vector<16x32xf32>
    %cst_101 = arith.constant dense<0.000000e+00> : vector<16xf32>
    %240 = vector.multi_reduction <add>, %239, %cst_101 [1] : vector<16x32xf32> to vector<16xf32>
    %241 = vector.shape_cast %240 : vector<16xf32> to vector<16x1xf32>
    %cst_102 = arith.constant 3.200000e+01 : f32
    %242 = vector.broadcast %cst_102 : f32 to vector<16x1xf32>
    %243 = arith.divf %241, %242 : vector<16x1xf32>
    %244 = vector.broadcast %236 : vector<16x1xf32> to vector<16x32xf32>
    %245 = arith.subf %230, %244 : vector<16x32xf32>
    %cst_103 = arith.constant 9.99999974E-6 : f32
    %246 = vector.broadcast %cst_103 : f32 to vector<16x1xf32>
    %247 = arith.addf %243, %246 : vector<16x1xf32>
    %248 = math.rsqrt %247 : vector<16x1xf32>
    %249 = vector.broadcast %248 : vector<16x1xf32> to vector<16x32xf32>
    %250 = arith.mulf %245, %249 : vector<16x32xf32>
    %251 = vector.broadcast %231 : vector<1x32xf32> to vector<16x32xf32>
    %252 = arith.mulf %250, %251 : vector<16x32xf32>
    %253 = vector.broadcast %232 : vector<1x32xf32> to vector<16x32xf32>
    %254 = arith.addf %252, %253 : vector<16x32xf32>
    %255 = arith.truncf %254 : vector<16x32xf32> to vector<16x32xbf16>
    %c0_104 = arith.constant 0 : index
    %c0_105 = arith.constant 0 : index
    %256 = vector.load %arg30[%c0_104, %c0_105] : memref<32x128xbf16, #tpu.memory_space<vmem>>, vector<32x128xbf16>
    %cst_106 = arith.constant dense<0.000000e+00> : vector<16x128xf32>
    %257 = tpu.matmul %255, %256, %cst_106 {dimension_numbers = #tpu.dot_dimension_numbers<[1], [0], [0], [1], [0, 0, 1, 1], [], []>} : vector<16x32xbf16>, vector<32x128xbf16>, vector<16x128xf32> -> vector<16x128xf32>
    %c0_107 = arith.constant 0 : index
    %c0_108 = arith.constant 0 : index
    %258 = vector.load %arg31[%c0_107, %c0_108] : memref<1x128xf32, #tpu.memory_space<vmem>>, vector<1x128xf32>
    %259 = vector.broadcast %258 : vector<1x128xf32> to vector<16x128xf32>
    %260 = arith.addf %257, %259 : vector<16x128xf32>
    %261 = arith.negf %260 : vector<16x128xf32>
    %262 = math.exp %261 : vector<16x128xf32>
    %cst_109 = arith.constant 1.000000e+00 : f32
    %263 = vector.broadcast %cst_109 : f32 to vector<16x128xf32>
    %264 = arith.addf %263, %262 : vector<16x128xf32>
    %265 = arith.divf %263, %264 : vector<16x128xf32>
    %266 = arith.mulf %260, %265 : vector<16x128xf32>
    %267 = arith.truncf %266 : vector<16x128xf32> to vector<16x128xbf16>
    %c0_110 = arith.constant 0 : index
    %c0_111 = arith.constant 0 : index
    %268 = vector.load %arg32[%c0_110, %c0_111] : memref<128x32xbf16, #tpu.memory_space<vmem>>, vector<128x32xbf16>
    %cst_112 = arith.constant dense<0.000000e+00> : vector<16x32xf32>
    %269 = tpu.matmul %267, %268, %cst_112 {dimension_numbers = #tpu.dot_dimension_numbers<[1], [0], [0], [1], [0, 0, 1, 1], [], []>} : vector<16x128xbf16>, vector<128x32xbf16>, vector<16x32xf32> -> vector<16x32xf32>
    %c0_113 = arith.constant 0 : index
    %c0_114 = arith.constant 0 : index
    %270 = vector.load %arg33[%c0_113, %c0_114] : memref<1x32xf32, #tpu.memory_space<vmem>>, vector<1x32xf32>
    %271 = vector.broadcast %270 : vector<1x32xf32> to vector<16x32xf32>
    %272 = arith.addf %269, %271 : vector<16x32xf32>
    %cst_115 = arith.constant 5.000000e-01 : f32
    %273 = vector.broadcast %cst_115 : f32 to vector<16x32xf32>
    %274 = arith.mulf %273, %272 : vector<16x32xf32>
    %275 = arith.addf %274, %230 : vector<16x32xf32>
    %c0_116 = arith.constant 0 : index
    %c0_117 = arith.constant 0 : index
    %276 = vector.load %arg34[%c0_116, %c0_117] : memref<1x32xf32, #tpu.memory_space<vmem>>, vector<1x32xf32>
    %c0_118 = arith.constant 0 : index
    %c0_119 = arith.constant 0 : index
    %277 = vector.load %arg35[%c0_118, %c0_119] : memref<1x32xf32, #tpu.memory_space<vmem>>, vector<1x32xf32>
    %cst_120 = arith.constant dense<0.000000e+00> : vector<16xf32>
    %278 = vector.multi_reduction <add>, %275, %cst_120 [1] : vector<16x32xf32> to vector<16xf32>
    %279 = vector.shape_cast %278 : vector<16xf32> to vector<16x1xf32>
    %cst_121 = arith.constant 3.200000e+01 : f32
    %280 = vector.broadcast %cst_121 : f32 to vector<16x1xf32>
    %281 = arith.divf %279, %280 : vector<16x1xf32>
    %282 = vector.broadcast %281 : vector<16x1xf32> to vector<16x32xf32>
    %283 = arith.subf %275, %282 : vector<16x32xf32>
    %284 = arith.mulf %283, %283 : vector<16x32xf32>
    %cst_122 = arith.constant dense<0.000000e+00> : vector<16xf32>
    %285 = vector.multi_reduction <add>, %284, %cst_122 [1] : vector<16x32xf32> to vector<16xf32>
    %286 = vector.shape_cast %285 : vector<16xf32> to vector<16x1xf32>
    %cst_123 = arith.constant 3.200000e+01 : f32
    %287 = vector.broadcast %cst_123 : f32 to vector<16x1xf32>
    %288 = arith.divf %286, %287 : vector<16x1xf32>
    %289 = vector.broadcast %281 : vector<16x1xf32> to vector<16x32xf32>
    %290 = arith.subf %275, %289 : vector<16x32xf32>
    %cst_124 = arith.constant 9.99999974E-6 : f32
    %291 = vector.broadcast %cst_124 : f32 to vector<16x1xf32>
    %292 = arith.addf %288, %291 : vector<16x1xf32>
    %293 = math.rsqrt %292 : vector<16x1xf32>
    %294 = vector.broadcast %293 : vector<16x1xf32> to vector<16x32xf32>
    %295 = arith.mulf %290, %294 : vector<16x32xf32>
    %296 = vector.broadcast %276 : vector<1x32xf32> to vector<16x32xf32>
    %297 = arith.mulf %295, %296 : vector<16x32xf32>
    %298 = vector.broadcast %277 : vector<1x32xf32> to vector<16x32xf32>
    %299 = arith.addf %297, %298 : vector<16x32xf32>
    %300 = tpu.transpose %299, [1, 0] : vector<16x32xf32> -> vector<32x16xf32>
    %c0_125 = arith.constant 0 : index
    %c0_126 = arith.constant 0 : index
    %c0_127 = arith.constant 0 : index
    %301 = vector.load %arg36[%c0_125, %c0_126, %c0_127] : memref<1x32x16xf32, #tpu.memory_space<vmem>>, vector<1x32x16xf32>
    %302 = vector.shape_cast %301 : vector<1x32x16xf32> to vector<32x16xf32>
    %303 = vector.shape_cast %300 : vector<32x16xf32> to vector<1x32x16xf32>
    tpu.vector_store %arg36[%c0_125, %c0_126, %c0_127], %303 {strides = array<i32>} : memref<1x32x16xf32, #tpu.memory_space<vmem>>, vector<1x32x16xf32>,
    return
  }
  func.func @transform_0(%arg0: i32) -> (i32, i32, i32) {
    %c0_i32 = arith.constant 0 : i32
    %c0_i32_0 = arith.constant 0 : i32
    %c0_i32_1 = arith.constant 0 : i32
    return %arg0, %c0_i32, %c0_i32_0 : i32, i32, i32
  }
  func.func @transform_1(%arg0: i32) -> (i32, i32) {
    %c0_i32 = arith.constant 0 : i32
    %c0_i32_0 = arith.constant 0 : i32
    %c0_i32_1 = arith.constant 0 : i32
    return %c0_i32, %c0_i32_0 : i32, i32
  }
  func.func @transform_2(%arg0: i32) -> (i32, i32) {
    %c0_i32 = arith.constant 0 : i32
    %c0_i32_0 = arith.constant 0 : i32
    %c0_i32_1 = arith.constant 0 : i32
    return %c0_i32, %c0_i32_0 : i32, i32
  }
  func.func @transform_3(%arg0: i32) -> (i32, i32) {
    %c0_i32 = arith.constant 0 : i32
    %c0_i32_0 = arith.constant 0 : i32
    %c0_i32_1 = arith.constant 0 : i32
    return %c0_i32, %c0_i32_0 : i32, i32
  }
  func.func @transform_4(%arg0: i32) -> (i32, i32) {
    %c0_i32 = arith.constant 0 : i32
    %c0_i32_0 = arith.constant 0 : i32
    %c0_i32_1 = arith.constant 0 : i32
    return %c0_i32, %c0_i32_0 : i32, i32
  }
  func.func @transform_5(%arg0: i32) -> (i32, i32) {
    %c0_i32 = arith.constant 0 : i32
    %c0_i32_0 = arith.constant 0 : i32
    %c0_i32_1 = arith.constant 0 : i32
    return %c0_i32, %c0_i32_0 : i32, i32
  }
  func.func @transform_6(%arg0: i32) -> (i32, i32) {
    %c0_i32 = arith.constant 0 : i32
    %c0_i32_0 = arith.constant 0 : i32
    %c0_i32_1 = arith.constant 0 : i32
    return %c0_i32, %c0_i32_0 : i32, i32
  }
  func.func @transform_7(%arg0: i32) -> (i32, i32) {
    %c0_i32 = arith.constant 0 : i32
    %c0_i32_0 = arith.constant 0 : i32
    %c0_i32_1 = arith.constant 0 : i32
    return %c0_i32, %c0_i32_0 : i32, i32
  }
  func.func @transform_8(%arg0: i32) -> (i32, i32) {
    %c0_i32 = arith.constant 0 : i32
    %c0_i32_0 = arith.constant 0 : i32
    %c0_i32_1 = arith.constant 0 : i32
    return %c0_i32, %c0_i32_0 : i32, i32
  }
  func.func @transform_9(%arg0: i32) -> (i32, i32) {
    %c0_i32 = arith.constant 0 : i32
    %c0_i32_0 = arith.constant 0 : i32
    %c0_i32_1 = arith.constant 0 : i32
    return %c0_i32, %c0_i32_0 : i32, i32
  }
  func.func @transform_10(%arg0: i32) -> (i32, i32) {
    %c0_i32 = arith.constant 0 : i32
    %c0_i32_0 = arith.constant 0 : i32
    %c0_i32_1 = arith.constant 0 : i32
    return %c0_i32, %c0_i32_0 : i32, i32
  }
  func.func @transform_11(%arg0: i32) -> (i32, i32) {
    %c0_i32 = arith.constant 0 : i32
    %c0_i32_0 = arith.constant 0 : i32
    %c0_i32_1 = arith.constant 0 : i32
    return %c0_i32, %c0_i32_0 : i32, i32
  }
  func.func @transform_12(%arg0: i32) -> (i32, i32) {
    %c0_i32 = arith.constant 0 : i32
    %c0_i32_0 = arith.constant 0 : i32
    %c0_i32_1 = arith.constant 0 : i32
    return %c0_i32, %c0_i32_0 : i32, i32
  }
  func.func @transform_13(%arg0: i32) -> (i32, i32) {
    %c0_i32 = arith.constant 0 : i32
    %c0_i32_0 = arith.constant 0 : i32
    %c0_i32_1 = arith.constant 0 : i32
    return %c0_i32, %c0_i32_0 : i32, i32
  }
  func.func @transform_14(%arg0: i32) -> (i32, i32) {
    %c0_i32 = arith.constant 0 : i32
    %c0_i32_0 = arith.constant 0 : i32
    %c0_i32_1 = arith.constant 0 : i32
    return %c0_i32, %c0_i32_0 : i32, i32
  }
  func.func @transform_15(%arg0: i32) -> (i32, i32) {
    %c0_i32 = arith.constant 0 : i32
    %c0_i32_0 = arith.constant 0 : i32
    %c0_i32_1 = arith.constant 0 : i32
    return %c0_i32, %c0_i32_0 : i32, i32
  }
  func.func @transform_16(%arg0: i32) -> (i32, i32) {
    %c0_i32 = arith.constant 0 : i32
    %c0_i32_0 = arith.constant 0 : i32
    %c0_i32_1 = arith.constant 0 : i32
    return %c0_i32, %c0_i32_0 : i32, i32
  }
  func.func @transform_17(%arg0: i32) -> (i32, i32) {
    %c0_i32 = arith.constant 0 : i32
    %c0_i32_0 = arith.constant 0 : i32
    %c0_i32_1 = arith.constant 0 : i32
    return %c0_i32, %c0_i32_0 : i32, i32
  }
  func.func @transform_18(%arg0: i32) -> (i32, i32) {
    %c0_i32 = arith.constant 0 : i32
    %c0_i32_0 = arith.constant 0 : i32
    %c0_i32_1 = arith.constant 0 : i32
    return %c0_i32, %c0_i32_0 : i32, i32
  }
  func.func @transform_19(%arg0: i32) -> (i32, i32) {
    %c0_i32 = arith.constant 0 : i32
    %c0_i32_0 = arith.constant 0 : i32
    %c0_i32_1 = arith.constant 0 : i32
    return %c0_i32, %c0_i32_0 : i32, i32
  }
  func.func @transform_20(%arg0: i32) -> (i32, i32) {
    %c0_i32 = arith.constant 0 : i32
    %c0_i32_0 = arith.constant 0 : i32
    %c0_i32_1 = arith.constant 0 : i32
    return %c0_i32, %c0_i32_0 : i32, i32
  }
  func.func @transform_21(%arg0: i32) -> (i32, i32) {
    %c0_i32 = arith.constant 0 : i32
    %c0_i32_0 = arith.constant 0 : i32
    %c0_i32_1 = arith.constant 0 : i32
    return %c0_i32, %c0_i32_0 : i32, i32
  }
  func.func @transform_22(%arg0: i32) -> (i32, i32) {
    %c0_i32 = arith.constant 0 : i32
    %c0_i32_0 = arith.constant 0 : i32
    %c0_i32_1 = arith.constant 0 : i32
    return %c0_i32, %c0_i32_0 : i32, i32
  }
  func.func @transform_23(%arg0: i32) -> (i32, i32) {
    %c0_i32 = arith.constant 0 : i32
    %c0_i32_0 = arith.constant 0 : i32
    %c0_i32_1 = arith.constant 0 : i32
    return %c0_i32, %c0_i32_0 : i32, i32
  }
  func.func @transform_24(%arg0: i32) -> (i32, i32) {
    %c0_i32 = arith.constant 0 : i32
    %c0_i32_0 = arith.constant 0 : i32
    %c0_i32_1 = arith.constant 0 : i32
    return %c0_i32, %c0_i32_0 : i32, i32
  }
  func.func @transform_25(%arg0: i32) -> (i32, i32) {
    %c0_i32 = arith.constant 0 : i32
    %c0_i32_0 = arith.constant 0 : i32
    %c0_i32_1 = arith.constant 0 : i32
    return %c0_i32, %c0_i32_0 : i32, i32
  }
  func.func @transform_26(%arg0: i32) -> (i32, i32) {
    %c0_i32 = arith.constant 0 : i32
    %c0_i32_0 = arith.constant 0 : i32
    %c0_i32_1 = arith.constant 0 : i32
    return %c0_i32, %c0_i32_0 : i32, i32
  }
  func.func @transform_27(%arg0: i32) -> (i32, i32) {
    %c0_i32 = arith.constant 0 : i32
    %c0_i32_0 = arith.constant 0 : i32
    %c0_i32_1 = arith.constant 0 : i32
    return %c0_i32, %c0_i32_0 : i32, i32
  }
  func.func @transform_28(%arg0: i32) -> (i32, i32) {
    %c0_i32 = arith.constant 0 : i32
    %c0_i32_0 = arith.constant 0 : i32
    %c0_i32_1 = arith.constant 0 : i32
    return %c0_i32, %c0_i32_0 : i32, i32
  }
  func.func @transform_29(%arg0: i32) -> (i32, i32) {
    %c0_i32 = arith.constant 0 : i32
    %c0_i32_0 = arith.constant 0 : i32
    %c0_i32_1 = arith.constant 0 : i32
    return %c0_i32, %c0_i32_0 : i32, i32
  }
  func.func @transform_30(%arg0: i32) -> (i32, i32) {
    %c0_i32 = arith.constant 0 : i32
    %c0_i32_0 = arith.constant 0 : i32
    %c0_i32_1 = arith.constant 0 : i32
    return %c0_i32, %c0_i32_0 : i32, i32
  }
  func.func @transform_31(%arg0: i32) -> (i32, i32) {
    %c0_i32 = arith.constant 0 : i32
    %c0_i32_0 = arith.constant 0 : i32
    %c0_i32_1 = arith.constant 0 : i32
    return %c0_i32, %c0_i32_0 : i32, i32
  }
  func.func @transform_32(%arg0: i32) -> (i32, i32) {
    %c0_i32 = arith.constant 0 : i32
    %c0_i32_0 = arith.constant 0 : i32
    %c0_i32_1 = arith.constant 0 : i32
    return %c0_i32, %c0_i32_0 : i32, i32
  }
  func.func @transform_33(%arg0: i32) -> (i32, i32) {
    %c0_i32 = arith.constant 0 : i32
    %c0_i32_0 = arith.constant 0 : i32
    %c0_i32_1 = arith.constant 0 : i32
    return %c0_i32, %c0_i32_0 : i32, i32
  }
  func.func @transform_34(%arg0: i32) -> (i32, i32) {
    %c0_i32 = arith.constant 0 : i32
    %c0_i32_0 = arith.constant 0 : i32
    %c0_i32_1 = arith.constant 0 : i32
    return %c0_i32, %c0_i32_0 : i32, i32
  }
  func.func @transform_35(%arg0: i32) -> (i32, i32, i32) {
    %c0_i32 = arith.constant 0 : i32
    %c0_i32_0 = arith.constant 0 : i32
    %c0_i32_1 = arith.constant 0 : i32
    return %arg0, %c0_i32, %c0_i32_0 : i32, i32, i32
  }
}

</mosaic_0001>

<llo_original>
// kernel: tpu_custom_call.1
$region0: #{tpu_custom_call.1}
  #allocation0 [shape = 'u32[]', space=smem, size = 0x4, offset = 0x4, fixed_abs, tag = 'smem constant byte address 0x4 - core index']
  #allocation1 [shape = 'u32[144,128]{1,0:T(1,128)}', space=vmem, size = 0x12000, scoped, tag = 'internal scratch']
  #allocation2 [shape = 'f32[18,32]{1,0:T(8,128)}', space=vmem, size = 0x3000, scoped, tag = 'scratch operand']
  %s0 = inlined_call_operand.smem [shape: u32[36], index: -1, kind: input, shape index: {}]
  %s1 = sld [smem:[%s0]]
  %s2 = scalar_lea.smem %s0, 1
  %s3 = sld [smem:[%s2]]
  %s4 = scalar_lea.smem %s0, 2
  %s5 = sld [smem:[%s4]]
  %s6 = scalar_lea.smem %s0, 3
  %s7 = sld [smem:[%s6]]
  %s8 = scalar_lea.smem %s0, 4
  %s9 = sld [smem:[%s8]]
  %s10 = scalar_lea.smem %s0, 5
  %s11 = sld [smem:[%s10]]
  %s12 = scalar_lea.smem %s0, 6
  %s13 = sld [smem:[%s12]]
  %s14 = scalar_lea.smem %s0, 7
  %s15 = sld [smem:[%s14]]
  %s16 = scalar_lea.smem %s0, 8
  %s17 = sld [smem:[%s16]]
  %s18 = scalar_lea.smem %s0, 9
  %s19 = sld [smem:[%s18]]
  %s20 = scalar_lea.smem %s0, 10
  %s21 = sld [smem:[%s20]]
  %s22 = scalar_lea.smem %s0, 11
  %s23 = sld [smem:[%s22]]
  %s24 = scalar_lea.smem %s0, 12
  %s25 = sld [smem:[%s24]]
  %s26 = scalar_lea.smem %s0, 13
  %s27 = sld [smem:[%s26]]
  %s28 = scalar_lea.smem %s0, 14
  %s29 = sld [smem:[%s28]]
  %s30 = scalar_lea.smem %s0, 15
  %s31 = sld [smem:[%s30]]
  %s32 = scalar_lea.smem %s0, 16
  %s33 = sld [smem:[%s32]]
  %s34 = scalar_lea.smem %s0, 17
  %s35 = sld [smem:[%s34]]
  %s36 = scalar_lea.smem %s0, 18
  %s37 = sld [smem:[%s36]]
  %s38 = scalar_lea.smem %s0, 19
  %s39 = sld [smem:[%s38]]
  %s40 = scalar_lea.smem %s0, 20
  %s41 = sld [smem:[%s40]]
  %s42 = scalar_lea.smem %s0, 21
  %s43 = sld [smem:[%s42]]
  %s44 = scalar_lea.smem %s0, 22
  %s45 = sld [smem:[%s44]]
  %s46 = scalar_lea.smem %s0, 23
  %s47 = sld [smem:[%s46]]
  %s48 = scalar_lea.smem %s0, 24
  %s49 = sld [smem:[%s48]]
  %s50 = scalar_lea.smem %s0, 25
  %s51 = sld [smem:[%s50]]
  %s52 = scalar_lea.smem %s0, 26
  %s53 = sld [smem:[%s52]]
  %s54 = scalar_lea.smem %s0, 27
  %s55 = sld [smem:[%s54]]
  %s56 = scalar_lea.smem %s0, 28
  %s57 = sld [smem:[%s56]]
  %s58 = scalar_lea.smem %s0, 29
  %s59 = sld [smem:[%s58]]
  %s60 = scalar_lea.smem %s0, 30
  %s61 = sld [smem:[%s60]]
  %s62 = scalar_lea.smem %s0, 31
  %s63 = sld [smem:[%s62]]
  %s64 = scalar_lea.smem %s0, 32
  %s65 = sld [smem:[%s64]]
  %s66 = scalar_lea.smem %s0, 33
  %s67 = sld [smem:[%s66]]
  %s68 = scalar_lea.smem %s0, 34
  %s69 = sld [smem:[%s68]]
  %s70 = scalar_lea.smem %s0, 35
  %s71 = sld [smem:[%s70]]
  %s72 = sld [smem:[#allocation0]]
  $region173: #{tpu_custom_call.1} parent=0
    _
  %s74 = ssub.s32 1, %s72
  %s75 = scalar_select 0, %s74, %s72
  loop: start=0, step=1, limit=4
  $region2: #{tpu_custom_call.1} parent=0 // loop_pre_header
    _
  $region3: #{tpu_custom_call.1} parent=0 // loop_header
    %s77 = sphi 0, %s81
    %p78 = scmp.ge.s32.totalorder %s77, 4
    %s87 = sphi 0, %s89
    %s90 = sphi 0, %s87
    %s91 = sphi 0, %s90
    %s107 = sphi 0, %s91
    %s111 = sphi 0, %s111
    %s113 = sphi 0, %s111
    %s114 = sphi 0, %s113
    %s128 = sphi 0, %s114
    %s132 = sphi 0, %s132
    %s134 = sphi 0, %s132
    %s135 = sphi 0, %s134
    %s149 = sphi 0, %s135
    %s153 = sphi 0, %s153
    %s155 = sphi 0, %s153
    %s156 = sphi 0, %s155
    %s170 = sphi 0, %s156
    %s174 = sphi 0, %s174
    %s176 = sphi 0, %s174
    %s177 = sphi 0, %s176
    %s191 = sphi 0, %s177
    %s195 = sphi 0, %s195
    %s197 = sphi 0, %s195
    %s198 = sphi 0, %s197
    %s212 = sphi 0, %s198
    %s216 = sphi 0, %s216
    %s218 = sphi 0, %s216
    %s219 = sphi 0, %s218
    %s233 = sphi 0, %s219
    %s237 = sphi 0, %s237
    %s239 = sphi 0, %s237
    %s240 = sphi 0, %s239
    %s254 = sphi 0, %s240
    %s258 = sphi 0, %s258
    %s260 = sphi 0, %s258
    %s261 = sphi 0, %s260
    %s275 = sphi 0, %s261
    %s279 = sphi 0, %s279
    %s281 = sphi 0, %s279
    %s282 = sphi 0, %s281
    %s296 = sphi 0, %s282
    %s300 = sphi 0, %s300
    %s302 = sphi 0, %s300
    %s303 = sphi 0, %s302
    %s317 = sphi 0, %s303
    %s321 = sphi 0, %s321
    %s323 = sphi 0, %s321
    %s324 = sphi 0, %s323
    %s338 = sphi 0, %s324
    %s342 = sphi 0, %s342
    %s344 = sphi 0, %s342
    %s345 = sphi 0, %s344
    %s359 = sphi 0, %s345
    %s363 = sphi 0, %s363
    %s365 = sphi 0, %s363
    %s366 = sphi 0, %s365
    %s380 = sphi 0, %s366
    %s384 = sphi 0, %s384
    %s386 = sphi 0, %s384
    %s387 = sphi 0, %s386
    %s401 = sphi 0, %s387
    %s405 = sphi 0, %s405
    %s407 = sphi 0, %s405
    %s408 = sphi 0, %s407
    %s422 = sphi 0, %s408
    %s426 = sphi 0, %s426
    %s428 = sphi 0, %s426
    %s429 = sphi 0, %s428
    %s443 = sphi 0, %s429
    %s447 = sphi 0, %s447
    %s449 = sphi 0, %s447
    %s450 = sphi 0, %s449
    %s464 = sphi 0, %s450
    %s468 = sphi 0, %s468
    %s470 = sphi 0, %s468
    %s471 = sphi 0, %s470
    %s485 = sphi 0, %s471
    %s489 = sphi 0, %s489
    %s491 = sphi 0, %s489
    %s492 = sphi 0, %s491
    %s506 = sphi 0, %s492
    %s510 = sphi 0, %s510
    %s512 = sphi 0, %s510
    %s513 = sphi 0, %s512
    %s527 = sphi 0, %s513
    %s531 = sphi 0, %s531
    %s533 = sphi 0, %s531
    %s534 = sphi 0, %s533
    %s548 = sphi 0, %s534
    %s552 = sphi 0, %s552
    %s554 = sphi 0, %s552
    %s555 = sphi 0, %s554
    %s569 = sphi 0, %s555
    %s573 = sphi 0, %s573
    %s575 = sphi 0, %s573
    %s576 = sphi 0, %s575
    %s590 = sphi 0, %s576
    %s594 = sphi 0, %s594
    %s596 = sphi 0, %s594
    %s597 = sphi 0, %s596
    %s611 = sphi 0, %s597
    %s615 = sphi 0, %s615
    %s617 = sphi 0, %s615
    %s618 = sphi 0, %s617
    %s632 = sphi 0, %s618
    %s636 = sphi 0, %s636
    %s638 = sphi 0, %s636
    %s639 = sphi 0, %s638
    %s653 = sphi 0, %s639
    %s657 = sphi 0, %s657
    %s659 = sphi 0, %s657
    %s660 = sphi 0, %s659
    %s674 = sphi 0, %s660
    %s678 = sphi 0, %s678
    %s680 = sphi 0, %s678
    %s681 = sphi 0, %s680
    %s695 = sphi 0, %s681
    %s699 = sphi 0, %s699
    %s701 = sphi 0, %s699
    %s702 = sphi 0, %s701
    %s716 = sphi 0, %s702
    %s720 = sphi 0, %s720
    %s722 = sphi 0, %s720
    %s723 = sphi 0, %s722
    %s737 = sphi 0, %s723
    %s741 = sphi 0, %s741
    %s743 = sphi 0, %s741
    %s744 = sphi 0, %s743
    %s758 = sphi 0, %s744
    %s762 = sphi 0, %s762
    %s764 = sphi 0, %s762
    %s765 = sphi 0, %s764
    %s779 = sphi 0, %s765
    %s783 = sphi 0, %s783
    %s785 = sphi 0, %s783
    %s786 = sphi 0, %s785
    %s800 = sphi 0, %s786
    %s804 = sphi 0, %s804
    %s806 = sphi 0, %s804
    %s807 = sphi 0, %s806
    %s821 = sphi 0, %s807
    %s827 = sphi 0, %s829
    %s830 = sphi 0, %s827
    %s831 = sphi 0, %s830
    %s847 = sphi 0, %s831
  $region4: #{tpu_custom_call.1} parent=0 // loop_header_branch
    %80 = sbr.rel (%p78) target = $region8
  $region5: #{tpu_custom_call.1} parent=0 // loop_body
    %s82 = ssub.s32 %s77, 1
    %s83 = ssub.s32 %s77, 2
    %s84 = sadd.s32 %s77, 1
    %s85 = ssub.s32 %s77, %s84
    %p86 = scmp.eq.s32.totalorder %s85, 0
    %s88 = sadd.s32 %s87, 1
    %s89 = scalar_select %p86, %s87, %s88
    %p92 = pneg %p86
    %p93 = scmp.eq.s32.totalorder %s77, 1
    %p94 = por %p92, %p93
    %p95 = scmp.ne.s32.totalorder %s87, %s90
    %p96 = scmp.eq.s32.totalorder %s77, 0
    %p97 = por %p95, %p96
    %p98 = scmp.ne.s32.totalorder %s87, %s90
    %p99 = scmp.eq.s32.totalorder %s82, 1
    %p100 = por %p98, %p99
    %p101 = scmp.ne.s32.totalorder %s90, %s91
    %p102 = scmp.eq.s32.totalorder %s82, 0
    %p103 = por %p101, %p102
    %p104 = scmp.ne.s32.totalorder %s90, %s91
    %p105 = scmp.eq.s32.totalorder %s83, 1
    %p106 = por %p104, %p105
    %p108 = scmp.ne.s32.totalorder %s91, %s107
    %p109 = scmp.eq.s32.totalorder %s83, 0
    %p110 = por %p108, %p109
    %s112 = sadd.s32 %s111, 1
    %p115 = scmp.eq.s32.totalorder %s77, 1
    %p116 = scmp.ne.s32.totalorder %s111, %s113
    %p117 = scmp.eq.s32.totalorder %s77, 0
    %p118 = por %p116, %p117
    %p119 = scmp.ne.s32.totalorder %s111, %s113
    %p120 = scmp.eq.s32.totalorder %s82, 1
    %p121 = por %p119, %p120
    %p122 = scmp.ne.s32.totalorder %s113, %s114
    %p123 = scmp.eq.s32.totalorder %s82, 0
    %p124 = por %p122, %p123
    %p125 = scmp.ne.s32.totalorder %s113, %s114
    %p126 = scmp.eq.s32.totalorder %s83, 1
    %p127 = por %p125, %p126
    %p129 = scmp.ne.s32.totalorder %s114, %s128
    %p130 = scmp.eq.s32.totalorder %s83, 0
    %p131 = por %p129, %p130
    %s133 = sadd.s32 %s132, 1
    %p136 = scmp.eq.s32.totalorder %s77, 1
    %p137 = scmp.ne.s32.totalorder %s132, %s134
    %p138 = scmp.eq.s32.totalorder %s77, 0
    %p139 = por %p137, %p138
    %p140 = scmp.ne.s32.totalorder %s132, %s134
    %p141 = scmp.eq.s32.totalorder %s82, 1
    %p142 = por %p140, %p141
    %p143 = scmp.ne.s32.totalorder %s134, %s135
    %p144 = scmp.eq.s32.totalorder %s82, 0
    %p145 = por %p143, %p144
    %p146 = scmp.ne.s32.totalorder %s134, %s135
    %p147 = scmp.eq.s32.totalorder %s83, 1
    %p148 = por %p146, %p147
    %p150 = scmp.ne.s32.totalorder %s135, %s149
    %p151 = scmp.eq.s32.totalorder %s83, 0
    %p152 = por %p150, %p151
    %s154 = sadd.s32 %s153, 1
    %p157 = scmp.eq.s32.totalorder %s77, 1
    %p158 = scmp.ne.s32.totalorder %s153, %s155
    %p159 = scmp.eq.s32.totalorder %s77, 0
    %p160 = por %p158, %p159
    %p161 = scmp.ne.s32.totalorder %s153, %s155
    %p162 = scmp.eq.s32.totalorder %s82, 1
    %p163 = por %p161, %p162
    %p164 = scmp.ne.s32.totalorder %s155, %s156
    %p165 = scmp.eq.s32.totalorder %s82, 0
    %p166 = por %p164, %p165
    %p167 = scmp.ne.s32.totalorder %s155, %s156
    %p168 = scmp.eq.s32.totalorder %s83, 1
    %p169 = por %p167, %p168
    %p171 = scmp.ne.s32.totalorder %s156, %s170
    %p172 = scmp.eq.s32.totalorder %s83, 0
    %p173 = por %p171, %p172
    %s175 = sadd.s32 %s174, 1
    %p178 = scmp.eq.s32.totalorder %s77, 1
    %p179 = scmp.ne.s32.totalorder %s174, %s176
    %p180 = scmp.eq.s32.totalorder %s77, 0
    %p181 = por %p179, %p180
    %p182 = scmp.ne.s32.totalorder %s174, %s176
    %p183 = scmp.eq.s32.totalorder %s82, 1
    %p184 = por %p182, %p183
    %p185 = scmp.ne.s32.totalorder %s176, %s177
    %p186 = scmp.eq.s32.totalorder %s82, 0
    %p187 = por %p185, %p186
    %p188 = scmp.ne.s32.totalorder %s176, %s177
    %p189 = scmp.eq.s32.totalorder %s83, 1
    %p190 = por %p188, %p189
    %p192 = scmp.ne.s32.totalorder %s177, %s191
    %p193 = scmp.eq.s32.totalorder %s83, 0
    %p194 = por %p192, %p193
    %s196 = sadd.s32 %s195, 1
    %p199 = scmp.eq.s32.totalorder %s77, 1
    %p200 = scmp.ne.s32.totalorder %s195, %s197
    %p201 = scmp.eq.s32.totalorder %s77, 0
    %p202 = por %p200, %p201
    %p203 = scmp.ne.s32.totalorder %s195, %s197
    %p204 = scmp.eq.s32.totalorder %s82, 1
    %p205 = por %p203, %p204
    %p206 = scmp.ne.s32.totalorder %s197, %s198
    %p207 = scmp.eq.s32.totalorder %s82, 0
    %p208 = por %p206, %p207
    %p209 = scmp.ne.s32.totalorder %s197, %s198
    %p210 = scmp.eq.s32.totalorder %s83, 1
    %p211 = por %p209, %p210
    %p213 = scmp.ne.s32.totalorder %s198, %s212
    %p214 = scmp.eq.s32.totalorder %s83, 0
    %p215 = por %p213, %p214
    %s217 = sadd.s32 %s216, 1
    %p220 = scmp.eq.s32.totalorder %s77, 1
    %p221 = scmp.ne.s32.totalorder %s216, %s218
    %p222 = scmp.eq.s32.totalorder %s77, 0
    %p223 = por %p221, %p222
    %p224 = scmp.ne.s32.totalorder %s216, %s218
    %p225 = scmp.eq.s32.totalorder %s82, 1
    %p226 = por %p224, %p225
    %p227 = scmp.ne.s32.totalorder %s218, %s219
    %p228 = scmp.eq.s32.totalorder %s82, 0
    %p229 = por %p227, %p228
    %p230 = scmp.ne.s32.totalorder %s218, %s219
    %p231 = scmp.eq.s32.totalorder %s83, 1
    %p232 = por %p230, %p231
    %p234 = scmp.ne.s32.totalorder %s219, %s233
    %p235 = scmp.eq.s32.totalorder %s83, 0
    %p236 = por %p234, %p235
    %s238 = sadd.s32 %s237, 1
    %p241 = scmp.eq.s32.totalorder %s77, 1
    %p242 = scmp.ne.s32.totalorder %s237, %s239
    %p243 = scmp.eq.s32.totalorder %s77, 0
    %p244 = por %p242, %p243
    %p245 = scmp.ne.s32.totalorder %s237, %s239
    %p246 = scmp.eq.s32.totalorder %s82, 1
    %p247 = por %p245, %p246
    %p248 = scmp.ne.s32.totalorder %s239, %s240
    %p249 = scmp.eq.s32.totalorder %s82, 0
    %p250 = por %p248, %p249
    %p251 = scmp.ne.s32.totalorder %s239, %s240
    %p252 = scmp.eq.s32.totalorder %s83, 1
    %p253 = por %p251, %p252
    %p255 = scmp.ne.s32.totalorder %s240, %s254
    %p256 = scmp.eq.s32.totalorder %s83, 0
    %p257 = por %p255, %p256
    %s259 = sadd.s32 %s258, 1
    %p262 = scmp.eq.s32.totalorder %s77, 1
    %p263 = scmp.ne.s32.totalorder %s258, %s260
    %p264 = scmp.eq.s32.totalorder %s77, 0
    %p265 = por %p263, %p264
    %p266 = scmp.ne.s32.totalorder %s258, %s260
    %p267 = scmp.eq.s32.totalorder %s82, 1
    %p268 = por %p266, %p267
    %p269 = scmp.ne.s32.totalorder %s260, %s261
    %p270 = scmp.eq.s32.totalorder %s82, 0
    %p271 = por %p269, %p270
    %p272 = scmp.ne.s32.totalorder %s260, %s261
    %p273 = scmp.eq.s32.totalorder %s83, 1
    %p274 = por %p272, %p273
    %p276 = scmp.ne.s32.totalorder %s261, %s275
    %p277 = scmp.eq.s32.totalorder %s83, 0
    %p278 = por %p276, %p277
    %s280 = sadd.s32 %s279, 1
    %p283 = scmp.eq.s32.totalorder %s77, 1
    %p284 = scmp.ne.s32.totalorder %s279, %s281
    %p285 = scmp.eq.s32.totalorder %s77, 0
    %p286 = por %p284, %p285
    %p287 = scmp.ne.s32.totalorder %s279, %s281
    %p288 = scmp.eq.s32.totalorder %s82, 1
    %p289 = por %p287, %p288
    %p290 = scmp.ne.s32.totalorder %s281, %s282
    %p291 = scmp.eq.s32.totalorder %s82, 0
    %p292 = por %p290, %p291
    %p293 = scmp.ne.s32.totalorder %s281, %s282
    %p294 = scmp.eq.s32.totalorder %s83, 1
    %p295 = por %p293, %p294
    %p297 = scmp.ne.s32.totalorder %s282, %s296
    %p298 = scmp.eq.s32.totalorder %s83, 0
    %p299 = por %p297, %p298
    %s301 = sadd.s32 %s300, 1
    %p304 = scmp.eq.s32.totalorder %s77, 1
    %p305 = scmp.ne.s32.totalorder %s300, %s302
    %p306 = scmp.eq.s32.totalorder %s77, 0
    %p307 = por %p305, %p306
    %p308 = scmp.ne.s32.totalorder %s300, %s302
    %p309 = scmp.eq.s32.totalorder %s82, 1
    %p310 = por %p308, %p309
    %p311 = scmp.ne.s32.totalorder %s302, %s303
    %p312 = scmp.eq.s32.totalorder %s82, 0
    %p313 = por %p311, %p312
    %p314 = scmp.ne.s32.totalorder %s302, %s303
    %p315 = scmp.eq.s32.totalorder %s83, 1
    %p316 = por %p314, %p315
    %p318 = scmp.ne.s32.totalorder %s303, %s317
    %p319 = scmp.eq.s32.totalorder %s83, 0
    %p320 = por %p318, %p319
    %s322 = sadd.s32 %s321, 1
    %p325 = scmp.eq.s32.totalorder %s77, 1
    %p326 = scmp.ne.s32.totalorder %s321, %s323
    %p327 = scmp.eq.s32.totalorder %s77, 0
    %p328 = por %p326, %p327
    %p329 = scmp.ne.s32.totalorder %s321, %s323
    %p330 = scmp.eq.s32.totalorder %s82, 1
    %p331 = por %p329, %p330
    %p332 = scmp.ne.s32.totalorder %s323, %s324
    %p333 = scmp.eq.s32.totalorder %s82, 0
    %p334 = por %p332, %p333
    %p335 = scmp.ne.s32.totalorder %s323, %s324
    %p336 = scmp.eq.s32.totalorder %s83, 1
    %p337 = por %p335, %p336
    %p339 = scmp.ne.s32.totalorder %s324, %s338
    %p340 = scmp.eq.s32.totalorder %s83, 0
    %p341 = por %p339, %p340
    %s343 = sadd.s32 %s342, 1
    %p346 = scmp.eq.s32.totalorder %s77, 1
    %p347 = scmp.ne.s32.totalorder %s342, %s344
    %p348 = scmp.eq.s32.totalorder %s77, 0
    %p349 = por %p347, %p348
    %p350 = scmp.ne.s32.totalorder %s342, %s344
    %p351 = scmp.eq.s32.totalorder %s82, 1
    %p352 = por %p350, %p351
    %p353 = scmp.ne.s32.totalorder %s344, %s345
    %p354 = scmp.eq.s32.totalorder %s82, 0
    %p355 = por %p353, %p354
    %p356 = scmp.ne.s32.totalorder %s344, %s345
    %p357 = scmp.eq.s32.totalorder %s83, 1
    %p358 = por %p356, %p357
    %p360 = scmp.ne.s32.totalorder %s345, %s359
    %p361 = scmp.eq.s32.totalorder %s83, 0
    %p362 = por %p360, %p361
    %s364 = sadd.s32 %s363, 1
    %p367 = scmp.eq.s32.totalorder %s77, 1
    %p368 = scmp.ne.s32.totalorder %s363, %s365
    %p369 = scmp.eq.s32.totalorder %s77, 0
    %p370 = por %p368, %p369
    %p371 = scmp.ne.s32.totalorder %s363, %s365
    %p372 = scmp.eq.s32.totalorder %s82, 1
    %p373 = por %p371, %p372
    %p374 = scmp.ne.s32.totalorder %s365, %s366
    %p375 = scmp.eq.s32.totalorder %s82, 0
    %p376 = por %p374, %p375
    %p377 = scmp.ne.s32.totalorder %s365, %s366
    %p378 = scmp.eq.s32.totalorder %s83, 1
    %p379 = por %p377, %p378
    %p381 = scmp.ne.s32.totalorder %s366, %s380
    %p382 = scmp.eq.s32.totalorder %s83, 0
    %p383 = por %p381, %p382
    %s385 = sadd.s32 %s384, 1
    %p388 = scmp.eq.s32.totalorder %s77, 1
    %p389 = scmp.ne.s32.totalorder %s384, %s386
    %p390 = scmp.eq.s32.totalorder %s77, 0
    %p391 = por %p389, %p390
    %p392 = scmp.ne.s32.totalorder %s384, %s386
    %p393 = scmp.eq.s32.totalorder %s82, 1
    %p394 = por %p392, %p393
    %p395 = scmp.ne.s32.totalorder %s386, %s387
    %p396 = scmp.eq.s32.totalorder %s82, 0
    %p397 = por %p395, %p396
    %p398 = scmp.ne.s32.totalorder %s386, %s387
    %p399 = scmp.eq.s32.totalorder %s83, 1
    %p400 = por %p398, %p399
    %p402 = scmp.ne.s32.totalorder %s387, %s401
    %p403 = scmp.eq.s32.totalorder %s83, 0
    %p404 = por %p402, %p403
    %s406 = sadd.s32 %s405, 1
    %p409 = scmp.eq.s32.totalorder %s77, 1
    %p410 = scmp.ne.s32.totalorder %s405, %s407
    %p411 = scmp.eq.s32.totalorder %s77, 0
    %p412 = por %p410, %p411
    %p413 = scmp.ne.s32.totalorder %s405, %s407
    %p414 = scmp.eq.s32.totalorder %s82, 1
    %p415 = por %p413, %p414
    %p416 = scmp.ne.s32.totalorder %s407, %s408
    %p417 = scmp.eq.s32.totalorder %s82, 0
    %p418 = por %p416, %p417
    %p419 = scmp.ne.s32.totalorder %s407, %s408
    %p420 = scmp.eq.s32.totalorder %s83, 1
    %p421 = por %p419, %p420
    %p423 = scmp.ne.s32.totalorder %s408, %s422
    %p424 = scmp.eq.s32.totalorder %s83, 0
    %p425 = por %p423, %p424
    %s427 = sadd.s32 %s426, 1
    %p430 = scmp.eq.s32.totalorder %s77, 1
    %p431 = scmp.ne.s32.totalorder %s426, %s428
    %p432 = scmp.eq.s32.totalorder %s77, 0
    %p433 = por %p431, %p432
    %p434 = scmp.ne.s32.totalorder %s426, %s428
    %p435 = scmp.eq.s32.totalorder %s82, 1
    %p436 = por %p434, %p435
    %p437 = scmp.ne.s32.totalorder %s428, %s429
    %p438 = scmp.eq.s32.totalorder %s82, 0
    %p439 = por %p437, %p438
    %p440 = scmp.ne.s32.totalorder %s428, %s429
    %p441 = scmp.eq.s32.totalorder %s83, 1
    %p442 = por %p440, %p441
    %p444 = scmp.ne.s32.totalorder %s429, %s443
    %p445 = scmp.eq.s32.totalorder %s83, 0
    %p446 = por %p444, %p445
    %s448 = sadd.s32 %s447, 1
    %p451 = scmp.eq.s32.totalorder %s77, 1
    %p452 = scmp.ne.s32.totalorder %s447, %s449
    %p453 = scmp.eq.s32.totalorder %s77, 0
    %p454 = por %p452, %p453
    %p455 = scmp.ne.s32.totalorder %s447, %s449
    %p456 = scmp.eq.s32.totalorder %s82, 1
    %p457 = por %p455, %p456
    %p458 = scmp.ne.s32.totalorder %s449, %s450
    %p459 = scmp.eq.s32.totalorder %s82, 0
    %p460 = por %p458, %p459
    %p461 = scmp.ne.s32.totalorder %s449, %s450
    %p462 = scmp.eq.s32.totalorder %s83, 1
    %p463 = por %p461, %p462
    %p465 = scmp.ne.s32.totalorder %s450, %s464
    %p466 = scmp.eq.s32.totalorder %s83, 0
    %p467 = por %p465, %p466
    %s469 = sadd.s32 %s468, 1
    %p472 = scmp.eq.s32.totalorder %s77, 1
    %p473 = scmp.ne.s32.totalorder %s468, %s470
    %p474 = scmp.eq.s32.totalorder %s77, 0
    %p475 = por %p473, %p474
    %p476 = scmp.ne.s32.totalorder %s468, %s470
    %p477 = scmp.eq.s32.totalorder %s82, 1
    %p478 = por %p476, %p477
    %p479 = scmp.ne.s32.totalorder %s470, %s471
    %p480 = scmp.eq.s32.totalorder %s82, 0
    %p481 = por %p479, %p480
    %p482 = scmp.ne.s32.totalorder %s470, %s471
    %p483 = scmp.eq.s32.totalorder %s83, 1
    %p484 = por %p482, %p483
    %p486 = scmp.ne.s32.totalorder %s471, %s485
    %p487 = scmp.eq.s32.totalorder %s83, 0
    %p488 = por %p486, %p487
    %s490 = sadd.s32 %s489, 1
    %p493 = scmp.eq.s32.totalorder %s77, 1
    %p494 = scmp.ne.s32.totalorder %s489, %s491
    %p495 = scmp.eq.s32.totalorder %s77, 0
    %p496 = por %p494, %p495
    %p497 = scmp.ne.s32.totalorder %s489, %s491
    %p498 = scmp.eq.s32.totalorder %s82, 1
    %p499 = por %p497, %p498
    %p500 = scmp.ne.s32.totalorder %s491, %s492
    %p501 = scmp.eq.s32.totalorder %s82, 0
    %p502 = por %p500, %p501
    %p503 = scmp.ne.s32.totalorder %s491, %s492
    %p504 = scmp.eq.s32.totalorder %s83, 1
    %p505 = por %p503, %p504
    %p507 = scmp.ne.s32.totalorder %s492, %s506
    %p508 = scmp.eq.s32.totalorder %s83, 0
    %p509 = por %p507, %p508
    %s511 = sadd.s32 %s510, 1
    %p514 = scmp.eq.s32.totalorder %s77, 1
    %p515 = scmp.ne.s32.totalorder %s510, %s512
    %p516 = scmp.eq.s32.totalorder %s77, 0
    %p517 = por %p515, %p516
    %p518 = scmp.ne.s32.totalorder %s510, %s512
    %p519 = scmp.eq.s32.totalorder %s82, 1
    %p520 = por %p518, %p519
    %p521 = scmp.ne.s32.totalorder %s512, %s513
    %p522 = scmp.eq.s32.totalorder %s82, 0
    %p523 = por %p521, %p522
    %p524 = scmp.ne.s32.totalorder %s512, %s513
    %p525 = scmp.eq.s32.totalorder %s83, 1
    %p526 = por %p524, %p525
    %p528 = scmp.ne.s32.totalorder %s513, %s527
    %p529 = scmp.eq.s32.totalorder %s83, 0
    %p530 = por %p528, %p529
    %s532 = sadd.s32 %s531, 1
    %p535 = scmp.eq.s32.totalorder %s77, 1
    %p536 = scmp.ne.s32.totalorder %s531, %s533
    %p537 = scmp.eq.s32.totalorder %s77, 0
    %p538 = por %p536, %p537
    %p539 = scmp.ne.s32.totalorder %s531, %s533
    %p540 = scmp.eq.s32.totalorder %s82, 1
    %p541 = por %p539, %p540
    %p542 = scmp.ne.s32.totalorder %s533, %s534
    %p543 = scmp.eq.s32.totalorder %s82, 0
    %p544 = por %p542, %p543
    %p545 = scmp.ne.s32.totalorder %s533, %s534
    %p546 = scmp.eq.s32.totalorder %s83, 1
    %p547 = por %p545, %p546
    %p549 = scmp.ne.s32.totalorder %s534, %s548
    %p550 = scmp.eq.s32.totalorder %s83, 0
    %p551 = por %p549, %p550
    %s553 = sadd.s32 %s552, 1
    %p556 = scmp.eq.s32.totalorder %s77, 1
    %p557 = scmp.ne.s32.totalorder %s552, %s554
    %p558 = scmp.eq.s32.totalorder %s77, 0
    %p559 = por %p557, %p558
    %p560 = scmp.ne.s32.totalorder %s552, %s554
    %p561 = scmp.eq.s32.totalorder %s82, 1
    %p562 = por %p560, %p561
    %p563 = scmp.ne.s32.totalorder %s554, %s555
    %p564 = scmp.eq.s32.totalorder %s82, 0
    %p565 = por %p563, %p564
    %p566 = scmp.ne.s32.totalorder %s554, %s555
    %p567 = scmp.eq.s32.totalorder %s83, 1
    %p568 = por %p566, %p567
    %p570 = scmp.ne.s32.totalorder %s555, %s569
    %p571 = scmp.eq.s32.totalorder %s83, 0
    %p572 = por %p570, %p571
    %s574 = sadd.s32 %s573, 1
    %p577 = scmp.eq.s32.totalorder %s77, 1
    %p578 = scmp.ne.s32.totalorder %s573, %s575
    %p579 = scmp.eq.s32.totalorder %s77, 0
    %p580 = por %p578, %p579
    %p581 = scmp.ne.s32.totalorder %s573, %s575
    %p582 = scmp.eq.s32.totalorder %s82, 1
    %p583 = por %p581, %p582
    %p584 = scmp.ne.s32.totalorder %s575, %s576
    %p585 = scmp.eq.s32.totalorder %s82, 0
    %p586 = por %p584, %p585
    %p587 = scmp.ne.s32.totalorder %s575, %s576
    %p588 = scmp.eq.s32.totalorder %s83, 1
    %p589 = por %p587, %p588
    %p591 = scmp.ne.s32.totalorder %s576, %s590
    %p592 = scmp.eq.s32.totalorder %s83, 0
    %p593 = por %p591, %p592
    %s595 = sadd.s32 %s594, 1
    %p598 = scmp.eq.s32.totalorder %s77, 1
    %p599 = scmp.ne.s32.totalorder %s594, %s596
    %p600 = scmp.eq.s32.totalorder %s77, 0
    %p601 = por %p599, %p600
    %p602 = scmp.ne.s32.totalorder %s594, %s596
    %p603 = scmp.eq.s32.totalorder %s82, 1
    %p604 = por %p602, %p603
    %p605 = scmp.ne.s32.totalorder %s596, %s597
    %p606 = scmp.eq.s32.totalorder %s82, 0
    %p607 = por %p605, %p606
    %p608 = scmp.ne.s32.totalorder %s596, %s597
    %p609 = scmp.eq.s32.totalorder %s83, 1
    %p610 = por %p608, %p609
    %p612 = scmp.ne.s32.totalorder %s597, %s611
    %p613 = scmp.eq.s32.totalorder %s83, 0
    %p614 = por %p612, %p613
    %s616 = sadd.s32 %s615, 1
    %p619 = scmp.eq.s32.totalorder %s77, 1
    %p620 = scmp.ne.s32.totalorder %s615, %s617
    %p621 = scmp.eq.s32.totalorder %s77, 0
    %p622 = por %p620, %p621
    %p623 = scmp.ne.s32.totalorder %s615, %s617
    %p624 = scmp.eq.s32.totalorder %s82, 1
    %p625 = por %p623, %p624
    %p626 = scmp.ne.s32.totalorder %s617, %s618
    %p627 = scmp.eq.s32.totalorder %s82, 0
    %p628 = por %p626, %p627
    %p629 = scmp.ne.s32.totalorder %s617, %s618
    %p630 = scmp.eq.s32.totalorder %s83, 1
    %p631 = por %p629, %p630
    %p633 = scmp.ne.s32.totalorder %s618, %s632
    %p634 = scmp.eq.s32.totalorder %s83, 0
    %p635 = por %p633, %p634
    %s637 = sadd.s32 %s636, 1
    %p640 = scmp.eq.s32.totalorder %s77, 1
    %p641 = scmp.ne.s32.totalorder %s636, %s638
    %p642 = scmp.eq.s32.totalorder %s77, 0
    %p643 = por %p641, %p642
    %p644 = scmp.ne.s32.totalorder %s636, %s638
    %p645 = scmp.eq.s32.totalorder %s82, 1
    %p646 = por %p644, %p645
    %p647 = scmp.ne.s32.totalorder %s638, %s639
    %p648 = scmp.eq.s32.totalorder %s82, 0
    %p649 = por %p647, %p648
    %p650 = scmp.ne.s32.totalorder %s638, %s639
    %p651 = scmp.eq.s32.totalorder %s83, 1
    %p652 = por %p650, %p651
    %p654 = scmp.ne.s32.totalorder %s639, %s653
    %p655 = scmp.eq.s32.totalorder %s83, 0
    %p656 = por %p654, %p655
    %s658 = sadd.s32 %s657, 1
    %p661 = scmp.eq.s32.totalorder %s77, 1
    %p662 = scmp.ne.s32.totalorder %s657, %s659
    %p663 = scmp.eq.s32.totalorder %s77, 0
    %p664 = por %p662, %p663
    %p665 = scmp.ne.s32.totalorder %s657, %s659
    %p666 = scmp.eq.s32.totalorder %s82, 1
    %p667 = por %p665, %p666
    %p668 = scmp.ne.s32.totalorder %s659, %s660
    %p669 = scmp.eq.s32.totalorder %s82, 0
    %p670 = por %p668, %p669
    %p671 = scmp.ne.s32.totalorder %s659, %s660
    %p672 = scmp.eq.s32.totalorder %s83, 1
    %p673 = por %p671, %p672
    %p675 = scmp.ne.s32.totalorder %s660, %s674
    %p676 = scmp.eq.s32.totalorder %s83, 0
    %p677 = por %p675, %p676
    %s679 = sadd.s32 %s678, 1
    %p682 = scmp.eq.s32.totalorder %s77, 1
    %p683 = scmp.ne.s32.totalorder %s678, %s680
    %p684 = scmp.eq.s32.totalorder %s77, 0
    %p685 = por %p683, %p684
    %p686 = scmp.ne.s32.totalorder %s678, %s680
    %p687 = scmp.eq.s32.totalorder %s82, 1
    %p688 = por %p686, %p687
    %p689 = scmp.ne.s32.totalorder %s680, %s681
    %p690 = scmp.eq.s32.totalorder %s82, 0
    %p691 = por %p689, %p690
    %p692 = scmp.ne.s32.totalorder %s680, %s681
    %p693 = scmp.eq.s32.totalorder %s83, 1
    %p694 = por %p692, %p693
    %p696 = scmp.ne.s32.totalorder %s681, %s695
    %p697 = scmp.eq.s32.totalorder %s83, 0
    %p698 = por %p696, %p697
    %s700 = sadd.s32 %s699, 1
    %p703 = scmp.eq.s32.totalorder %s77, 1
    %p704 = scmp.ne.s32.totalorder %s699, %s701
    %p705 = scmp.eq.s32.totalorder %s77, 0
    %p706 = por %p704, %p705
    %p707 = scmp.ne.s32.totalorder %s699, %s701
    %p708 = scmp.eq.s32.totalorder %s82, 1
    %p709 = por %p707, %p708
    %p710 = scmp.ne.s32.totalorder %s701, %s702
    %p711 = scmp.eq.s32.totalorder %s82, 0
    %p712 = por %p710, %p711
    %p713 = scmp.ne.s32.totalorder %s701, %s702
    %p714 = scmp.eq.s32.totalorder %s83, 1
    %p715 = por %p713, %p714
    %p717 = scmp.ne.s32.totalorder %s702, %s716
    %p718 = scmp.eq.s32.totalorder %s83, 0
    %p719 = por %p717, %p718
    %s721 = sadd.s32 %s720, 1
    %p724 = scmp.eq.s32.totalorder %s77, 1
    %p725 = scmp.ne.s32.totalorder %s720, %s722
    %p726 = scmp.eq.s32.totalorder %s77, 0
    %p727 = por %p725, %p726
    %p728 = scmp.ne.s32.totalorder %s720, %s722
    %p729 = scmp.eq.s32.totalorder %s82, 1
    %p730 = por %p728, %p729
    %p731 = scmp.ne.s32.totalorder %s722, %s723
    %p732 = scmp.eq.s32.totalorder %s82, 0
    %p733 = por %p731, %p732
    %p734 = scmp.ne.s32.totalorder %s722, %s723
    %p735 = scmp.eq.s32.totalorder %s83, 1
    %p736 = por %p734, %p735
    %p738 = scmp.ne.s32.totalorder %s723, %s737
    %p739 = scmp.eq.s32.totalorder %s83, 0
    %p740 = por %p738, %p739
    %s742 = sadd.s32 %s741, 1
    %p745 = scmp.eq.s32.totalorder %s77, 1
    %p746 = scmp.ne.s32.totalorder %s741, %s743
    %p747 = scmp.eq.s32.totalorder %s77, 0
    %p748 = por %p746, %p747
    %p749 = scmp.ne.s32.totalorder %s741, %s743
    %p750 = scmp.eq.s32.totalorder %s82, 1
    %p751 = por %p749, %p750
    %p752 = scmp.ne.s32.totalorder %s743, %s744
    %p753 = scmp.eq.s32.totalorder %s82, 0
    %p754 = por %p752, %p753
    %p755 = scmp.ne.s32.totalorder %s743, %s744
    %p756 = scmp.eq.s32.totalorder %s83, 1
    %p757 = por %p755, %p756
    %p759 = scmp.ne.s32.totalorder %s744, %s758
    %p760 = scmp.eq.s32.totalorder %s83, 0
    %p761 = por %p759, %p760
    %s763 = sadd.s32 %s762, 1
    %p766 = scmp.eq.s32.totalorder %s77, 1
    %p767 = scmp.ne.s32.totalorder %s762, %s764
    %p768 = scmp.eq.s32.totalorder %s77, 0
    %p769 = por %p767, %p768
    %p770 = scmp.ne.s32.totalorder %s762, %s764
    %p771 = scmp.eq.s32.totalorder %s82, 1
    %p772 = por %p770, %p771
    %p773 = scmp.ne.s32.totalorder %s764, %s765
    %p774 = scmp.eq.s32.totalorder %s82, 0
    %p775 = por %p773, %p774
    %p776 = scmp.ne.s32.totalorder %s764, %s765
    %p777 = scmp.eq.s32.totalorder %s83, 1
    %p778 = por %p776, %p777
    %p780 = scmp.ne.s32.totalorder %s765, %s779
    %p781 = scmp.eq.s32.totalorder %s83, 0
    %p782 = por %p780, %p781
    %s784 = sadd.s32 %s783, 1
    %p787 = scmp.eq.s32.totalorder %s77, 1
    %p788 = scmp.ne.s32.totalorder %s783, %s785
    %p789 = scmp.eq.s32.totalorder %s77, 0
    %p790 = por %p788, %p789
    %p791 = scmp.ne.s32.totalorder %s783, %s785
    %p792 = scmp.eq.s32.totalorder %s82, 1
    %p793 = por %p791, %p792
    %p794 = scmp.ne.s32.totalorder %s785, %s786
    %p795 = scmp.eq.s32.totalorder %s82, 0
    %p796 = por %p794, %p795
    %p797 = scmp.ne.s32.totalorder %s785, %s786
    %p798 = scmp.eq.s32.totalorder %s83, 1
    %p799 = por %p797, %p798
    %p801 = scmp.ne.s32.totalorder %s786, %s800
    %p802 = scmp.eq.s32.totalorder %s83, 0
    %p803 = por %p801, %p802
    %s805 = sadd.s32 %s804, 1
    %p808 = scmp.eq.s32.totalorder %s77, 1
    %p809 = scmp.ne.s32.totalorder %s804, %s806
    %p810 = scmp.eq.s32.totalorder %s77, 0
    %p811 = por %p809, %p810
    %p812 = scmp.ne.s32.totalorder %s804, %s806
    %p813 = scmp.eq.s32.totalorder %s82, 1
    %p814 = por %p812, %p813
    %p815 = scmp.ne.s32.totalorder %s806, %s807
    %p816 = scmp.eq.s32.totalorder %s82, 0
    %p817 = por %p815, %p816
    %p818 = scmp.ne.s32.totalorder %s806, %s807
    %p819 = scmp.eq.s32.totalorder %s83, 1
    %p820 = por %p818, %p819
    %p822 = scmp.ne.s32.totalorder %s807, %s821
    %p823 = scmp.eq.s32.totalorder %s83, 0
    %p824 = por %p822, %p823
    %s825 = ssub.s32 %s77, %s84
    %p826 = scmp.eq.s32.totalorder %s825, 0
    %s828 = sadd.s32 %s827, 1
    %s829 = scalar_select %p826, %s827, %s828
    %p832 = pneg %p826
    %p833 = scmp.eq.s32.totalorder %s77, 1
    %p834 = por %p832, %p833
    %p835 = scmp.ne.s32.totalorder %s827, %s830
    %p836 = scmp.eq.s32.totalorder %s77, 0
    %p837 = por %p835, %p836
    %p838 = scmp.ne.s32.totalorder %s827, %s830
    %p839 = scmp.eq.s32.totalorder %s82, 1
    %p840 = por %p838, %p839
    %p841 = scmp.ne.s32.totalorder %s830, %s831
    %p842 = scmp.eq.s32.totalorder %s82, 0
    %p843 = por %p841, %p842
    %p844 = scmp.ne.s32.totalorder %s830, %s831
    %p845 = scmp.eq.s32.totalorder %s83, 1
    %p846 = por %p844, %p845
    %p848 = scmp.ne.s32.totalorder %s831, %s847
    %p849 = scmp.eq.s32.totalorder %s83, 0
    %p850 = por %p848, %p849
    %p851 = scmp.le.s32.totalorder 1, %s77
    %p852 = scmp.lt.s32.totalorder %s77, 3
    %p853 = pnand %p851, %p852
    %p854 = pneg %p853
    // Predicated region
    $region9: #{tpu_custom_call.1} parent=5 // pred_check
      _
    $region10: #{tpu_custom_call.1} parent=5 // pred_check_branch
      %856 = sbr.rel (%p853) target = $region12
    $region11: #{tpu_custom_call.1} parent=5 // pred_region
      %s857 = ssub.s32 %s77, 1
      // Predicated region
      $region13: #{tpu_custom_call.1} parent=11 // pred_check
        %p858 = pneg %p124
      $region14: #{tpu_custom_call.1} parent=11 // pred_check_branch
        %860 = sbr.rel (%p858) target = $region16
      $region15: #{tpu_custom_call.1} parent=11 // pred_region
        _
      $region16: #{tpu_custom_call.1} parent=11 // pred_fallthru
        _
      // Predicated region
      $region17: #{tpu_custom_call.1} parent=11 // pred_check
        %p861 = pneg %p145
      $region18: #{tpu_custom_call.1} parent=11 // pred_check_branch
        %863 = sbr.rel (%p861) target = $region20
      $region19: #{tpu_custom_call.1} parent=11 // pred_region
        _
      $region20: #{tpu_custom_call.1} parent=11 // pred_fallthru
        _
      // Predicated region
      $region21: #{tpu_custom_call.1} parent=11 // pred_check
        %p864 = pneg %p166
      $region22: #{tpu_custom_call.1} parent=11 // pred_check_branch
        %866 = sbr.rel (%p864) target = $region24
      $region23: #{tpu_custom_call.1} parent=11 // pred_region
        _
      $region24: #{tpu_custom_call.1} parent=11 // pred_fallthru
        _
      // Predicated region
      $region25: #{tpu_custom_call.1} parent=11 // pred_check
        %p867 = pneg %p187
      $region26: #{tpu_custom_call.1} parent=11 // pred_check_branch
        %869 = sbr.rel (%p867) target = $region28
      $region27: #{tpu_custom_call.1} parent=11 // pred_region
        _
      $region28: #{tpu_custom_call.1} parent=11 // pred_fallthru
        _
      // Predicated region
      $region29: #{tpu_custom_call.1} parent=11 // pred_check
        %p870 = pneg %p208
      $region30: #{tpu_custom_call.1} parent=11 // pred_check_branch
        %872 = sbr.rel (%p870) target = $region32
      $region31: #{tpu_custom_call.1} parent=11 // pred_region
        _
      $region32: #{tpu_custom_call.1} parent=11 // pred_fallthru
        _
      // Predicated region
      $region33: #{tpu_custom_call.1} parent=11 // pred_check
        %p873 = pneg %p229
      $region34: #{tpu_custom_call.1} parent=11 // pred_check_branch
        %875 = sbr.rel (%p873) target = $region36
      $region35: #{tpu_custom_call.1} parent=11 // pred_region
        _
      $region36: #{tpu_custom_call.1} parent=11 // pred_fallthru
        _
      // Predicated region
      $region37: #{tpu_custom_call.1} parent=11 // pred_check
        %p876 = pneg %p250
      $region38: #{tpu_custom_call.1} parent=11 // pred_check_branch
        %878 = sbr.rel (%p876) target = $region40
      $region39: #{tpu_custom_call.1} parent=11 // pred_region
        _
      $region40: #{tpu_custom_call.1} parent=11 // pred_fallthru
        _
      // Predicated region
      $region41: #{tpu_custom_call.1} parent=11 // pred_check
        %p879 = pneg %p271
      $region42: #{tpu_custom_call.1} parent=11 // pred_check_branch
        %881 = sbr.rel (%p879) target = $region44
      $region43: #{tpu_custom_call.1} parent=11 // pred_region
        _
      $region44: #{tpu_custom_call.1} parent=11 // pred_fallthru
        _
      // Predicated region
      $region45: #{tpu_custom_call.1} parent=11 // pred_check
        %p882 = pneg %p292
      $region46: #{tpu_custom_call.1} parent=11 // pred_check_branch
        %884 = sbr.rel (%p882) target = $region48
      $region47: #{tpu_custom_call.1} parent=11 // pred_region
        _
      $region48: #{tpu_custom_call.1} parent=11 // pred_fallthru
        _
      // Predicated region
      $region49: #{tpu_custom_call.1} parent=11 // pred_check
        %p885 = pneg %p313
      $region50: #{tpu_custom_call.1} parent=11 // pred_check_branch
        %887 = sbr.rel (%p885) target = $region52
      $region51: #{tpu_custom_call.1} parent=11 // pred_region
        _
      $region52: #{tpu_custom_call.1} parent=11 // pred_fallthru
        _
      // Predicated region
      $region53: #{tpu_custom_call.1} parent=11 // pred_check
        %p888 = pneg %p334
      $region54: #{tpu_custom_call.1} parent=11 // pred_check_branch
        %890 = sbr.rel (%p888) target = $region56
      $region55: #{tpu_custom_call.1} parent=11 // pred_region
        _
      $region56: #{tpu_custom_call.1} parent=11 // pred_fallthru
        _
      // Predicated region
      $region57: #{tpu_custom_call.1} parent=11 // pred_check
        %p891 = pneg %p355
      $region58: #{tpu_custom_call.1} parent=11 // pred_check_branch
        %893 = sbr.rel (%p891) target = $region60
      $region59: #{tpu_custom_call.1} parent=11 // pred_region
        _
      $region60: #{tpu_custom_call.1} parent=11 // pred_fallthru
        _
      // Predicated region
      $region61: #{tpu_custom_call.1} parent=11 // pred_check
        %p894 = pneg %p376
      $region62: #{tpu_custom_call.1} parent=11 // pred_check_branch
        %896 = sbr.rel (%p894) target = $region64
      $region63: #{tpu_custom_call.1} parent=11 // pred_region
        _
      $region64: #{tpu_custom_call.1} parent=11 // pred_fallthru
        _
      // Predicated region
      $region65: #{tpu_custom_call.1} parent=11 // pred_check
        %p897 = pneg %p397
      $region66: #{tpu_custom_call.1} parent=11 // pred_check_branch
        %899 = sbr.rel (%p897) target = $region68
      $region67: #{tpu_custom_call.1} parent=11 // pred_region
        _
      $region68: #{tpu_custom_call.1} parent=11 // pred_fallthru
        _
      // Predicated region
      $region69: #{tpu_custom_call.1} parent=11 // pred_check
        %p900 = pneg %p418
      $region70: #{tpu_custom_call.1} parent=11 // pred_check_branch
        %902 = sbr.rel (%p900) target = $region72
      $region71: #{tpu_custom_call.1} parent=11 // pred_region
        _
      $region72: #{tpu_custom_call.1} parent=11 // pred_fallthru
        _
      // Predicated region
      $region73: #{tpu_custom_call.1} parent=11 // pred_check
        %p903 = pneg %p439
      $region74: #{tpu_custom_call.1} parent=11 // pred_check_branch
        %905 = sbr.rel (%p903) target = $region76
      $region75: #{tpu_custom_call.1} parent=11 // pred_region
        _
      $region76: #{tpu_custom_call.1} parent=11 // pred_fallthru
        _
      // Predicated region
      $region77: #{tpu_custom_call.1} parent=11 // pred_check
        %p906 = pneg %p460
      $region78: #{tpu_custom_call.1} parent=11 // pred_check_branch
        %908 = sbr.rel (%p906) target = $region80
      $region79: #{tpu_custom_call.1} parent=11 // pred_region
        _
      $region80: #{tpu_custom_call.1} parent=11 // pred_fallthru
        _
      // Predicated region
      $region81: #{tpu_custom_call.1} parent=11 // pred_check
        %p909 = pneg %p481
      $region82: #{tpu_custom_call.1} parent=11 // pred_check_branch
        %911 = sbr.rel (%p909) target = $region84
      $region83: #{tpu_custom_call.1} parent=11 // pred_region
        _
      $region84: #{tpu_custom_call.1} parent=11 // pred_fallthru
        _
      // Predicated region
      $region85: #{tpu_custom_call.1} parent=11 // pred_check
        %p912 = pneg %p502
      $region86: #{tpu_custom_call.1} parent=11 // pred_check_branch
        %914 = sbr.rel (%p912) target = $region88
      $region87: #{tpu_custom_call.1} parent=11 // pred_region
        _
      $region88: #{tpu_custom_call.1} parent=11 // pred_fallthru
        _
      // Predicated region
      $region89: #{tpu_custom_call.1} parent=11 // pred_check
        %p915 = pneg %p523
      $region90: #{tpu_custom_call.1} parent=11 // pred_check_branch
        %917 = sbr.rel (%p915) target = $region92
      $region91: #{tpu_custom_call.1} parent=11 // pred_region
        _
      $region92: #{tpu_custom_call.1} parent=11 // pred_fallthru
        _
      // Predicated region
      $region93: #{tpu_custom_call.1} parent=11 // pred_check
        %p918 = pneg %p544
      $region94: #{tpu_custom_call.1} parent=11 // pred_check_branch
        %920 = sbr.rel (%p918) target = $region96
      $region95: #{tpu_custom_call.1} parent=11 // pred_region
        _
      $region96: #{tpu_custom_call.1} parent=11 // pred_fallthru
        _
      // Predicated region
      $region97: #{tpu_custom_call.1} parent=11 // pred_check
        %p921 = pneg %p565
      $region98: #{tpu_custom_call.1} parent=11 // pred_check_branch
        %923 = sbr.rel (%p921) target = $region100
      $region99: #{tpu_custom_call.1} parent=11 // pred_region
        _
      $region100: #{tpu_custom_call.1} parent=11 // pred_fallthru
        _
      // Predicated region
      $region101: #{tpu_custom_call.1} parent=11 // pred_check
        %p924 = pneg %p586
      $region102: #{tpu_custom_call.1} parent=11 // pred_check_branch
        %926 = sbr.rel (%p924) target = $region104
      $region103: #{tpu_custom_call.1} parent=11 // pred_region
        _
      $region104: #{tpu_custom_call.1} parent=11 // pred_fallthru
        _
      // Predicated region
      $region105: #{tpu_custom_call.1} parent=11 // pred_check
        %p927 = pneg %p607
      $region106: #{tpu_custom_call.1} parent=11 // pred_check_branch
        %929 = sbr.rel (%p927) target = $region108
      $region107: #{tpu_custom_call.1} parent=11 // pred_region
        _
      $region108: #{tpu_custom_call.1} parent=11 // pred_fallthru
        _
      // Predicated region
      $region109: #{tpu_custom_call.1} parent=11 // pred_check
        %p930 = pneg %p628
      $region110: #{tpu_custom_call.1} parent=11 // pred_check_branch
        %932 = sbr.rel (%p930) target = $region112
      $region111: #{tpu_custom_call.1} parent=11 // pred_region
        _
      $region112: #{tpu_custom_call.1} parent=11 // pred_fallthru
        _
      // Predicated region
      $region113: #{tpu_custom_call.1} parent=11 // pred_check
        %p933 = pneg %p649
      $region114: #{tpu_custom_call.1} parent=11 // pred_check_branch
        %935 = sbr.rel (%p933) target = $region116
      $region115: #{tpu_custom_call.1} parent=11 // pred_region
        _
      $region116: #{tpu_custom_call.1} parent=11 // pred_fallthru
        _
      // Predicated region
      $region117: #{tpu_custom_call.1} parent=11 // pred_check
        %p936 = pneg %p670
      $region118: #{tpu_custom_call.1} parent=11 // pred_check_branch
        %938 = sbr.rel (%p936) target = $region120
      $region119: #{tpu_custom_call.1} parent=11 // pred_region
        _
      $region120: #{tpu_custom_call.1} parent=11 // pred_fallthru
        _
      // Predicated region
      $region121: #{tpu_custom_call.1} parent=11 // pred_check
        %p939 = pneg %p691
      $region122: #{tpu_custom_call.1} parent=11 // pred_check_branch
        %941 = sbr.rel (%p939) target = $region124
      $region123: #{tpu_custom_call.1} parent=11 // pred_region
        _
      $region124: #{tpu_custom_call.1} parent=11 // pred_fallthru
        _
      // Predicated region
      $region125: #{tpu_custom_call.1} parent=11 // pred_check
        %p942 = pneg %p712
      $region126: #{tpu_custom_call.1} parent=11 // pred_check_branch
        %944 = sbr.rel (%p942) target = $region128
      $region127: #{tpu_custom_call.1} parent=11 // pred_region
        _
      $region128: #{tpu_custom_call.1} parent=11 // pred_fallthru
        _
      // Predicated region
      $region129: #{tpu_custom_call.1} parent=11 // pred_check
        %p945 = pneg %p733
      $region130: #{tpu_custom_call.1} parent=11 // pred_check_branch
        %947 = sbr.rel (%p945) target = $region132
      $region131: #{tpu_custom_call.1} parent=11 // pred_region
        _
      $region132: #{tpu_custom_call.1} parent=11 // pred_fallthru
        _
      // Predicated region
      $region133: #{tpu_custom_call.1} parent=11 // pred_check
        %p948 = pneg %p754
      $region134: #{tpu_custom_call.1} parent=11 // pred_check_branch
        %950 = sbr.rel (%p948) target = $region136
      $region135: #{tpu_custom_call.1} parent=11 // pred_region
        _
      $region136: #{tpu_custom_call.1} parent=11 // pred_fallthru
        _
      // Predicated region
      $region137: #{tpu_custom_call.1} parent=11 // pred_check
        %p951 = pneg %p775
      $region138: #{tpu_custom_call.1} parent=11 // pred_check_branch
        %953 = sbr.rel (%p951) target = $region140
      $region139: #{tpu_custom_call.1} parent=11 // pred_region
        _
      $region140: #{tpu_custom_call.1} parent=11 // pred_fallthru
        _
      // Predicated region
      $region141: #{tpu_custom_call.1} parent=11 // pred_check
        %p954 = pneg %p796
      $region142: #{tpu_custom_call.1} parent=11 // pred_check_branch
        %956 = sbr.rel (%p954) target = $region144
      $region143: #{tpu_custom_call.1} parent=11 // pred_region
        _
      $region144: #{tpu_custom_call.1} parent=11 // pred_fallthru
        _
      // Predicated region
      $region145: #{tpu_custom_call.1} parent=11 // pred_check
        %p957 = pneg %p817
      $region146: #{tpu_custom_call.1} parent=11 // pred_check_branch
        %959 = sbr.rel (%p957) target = $region148
      $region147: #{tpu_custom_call.1} parent=11 // pred_region
        _
      $region148: #{tpu_custom_call.1} parent=11 // pred_fallthru
        _
    $region12: #{tpu_custom_call.1} parent=5 // pred_fallthru
      _
    %p960 = scmp.lt.s32.totalorder %s77, 2
    // Predicated region
    $region149: #{tpu_custom_call.1} parent=5 // pred_check
      %p961 = pneg %p960
    $region150: #{tpu_custom_call.1} parent=5 // pred_check_branch
      %963 = sbr.rel (%p961) target = $region152
    $region151: #{tpu_custom_call.1} parent=5 // pred_region
      // Predicated region
      $region153: #{tpu_custom_call.1} parent=151 // pred_check
        %p964 = pneg %p97
      $region154: #{tpu_custom_call.1} parent=151 // pred_check_branch
        %966 = sbr.rel (%p964) target = $region156
      $region155: #{tpu_custom_call.1} parent=151 // pred_region
        %p967 = scmp.lt.s32.totalorder %s77, 1
        %s968 = scalar_select %p967, %s77, 1
        %s969 = smul.addr %s968, 4
        %s970 = smul.addr %s969, 8
        %s971 = scalar_lea.vmem %s1, %s970
      $region156: #{tpu_custom_call.1} parent=151 // pred_fallthru
        _
    $region152: #{tpu_custom_call.1} parent=5 // pred_fallthru
      _
    %p972 = scmp.le.s32.totalorder 1, %s77
    %p973 = scmp.lt.s32.totalorder %s77, 3
    %p974 = pnand %p972, %p973
    %p975 = pneg %p974
    // Predicated region
    $region157: #{tpu_custom_call.1} parent=5 // pred_check
      _
    $region158: #{tpu_custom_call.1} parent=5 // pred_check_branch
      %977 = sbr.rel (%p974) target = $region160
    $region159: #{tpu_custom_call.1} parent=5 // pred_region
      %s978 = ssub.s32 %s77, 1
      %p979 = scmp.lt.s32.totalorder %s82, 1
      %s980 = scalar_select %p979, %s82, 1
      %s981 = smul.addr %s980, 4
      %s982 = smul.addr %s981, 8
      %s983 = scalar_lea.vmem %s1, %s982
      %p984 = pneg %p103
      %p985 = pneg %p100
      %p986 = pneg %p124
      %p987 = pneg %p121
      %p988 = pneg %p145
      %p989 = pneg %p142
      %p990 = pneg %p166
      %p991 = pneg %p163
      %p992 = pneg %p187
      %p993 = pneg %p184
      %p994 = pneg %p208
      %p995 = pneg %p205
      %p996 = pneg %p229
      %p997 = pneg %p226
      %p998 = pneg %p250
      %p999 = pneg %p247
      %p1000 = pneg %p271
      %p1001 = pneg %p268
      %p1002 = pneg %p292
      %p1003 = pneg %p289
      %p1004 = pneg %p313
      %p1005 = pneg %p310
      %p1006 = pneg %p334
      %p1007 = pneg %p331
      %p1008 = pneg %p355
      %p1009 = pneg %p352
      %p1010 = pneg %p376
      %p1011 = pneg %p373
      %p1012 = pneg %p397
      %p1013 = pneg %p394
      %p1014 = pneg %p418
      %p1015 = pneg %p415
      %p1016 = pneg %p439
      %p1017 = pneg %p436
      %p1018 = pneg %p460
      %p1019 = pneg %p457
      %p1020 = pneg %p481
      %p1021 = pneg %p478
      %p1022 = pneg %p502
      %p1023 = pneg %p499
      %p1024 = pneg %p523
      %p1025 = pneg %p520
      %p1026 = pneg %p544
      %p1027 = pneg %p541
      %p1028 = pneg %p565
      %p1029 = pneg %p562
      %p1030 = pneg %p586
      %p1031 = pneg %p583
      %p1032 = pneg %p607
      %p1033 = pneg %p604
      %p1034 = pneg %p628
      %p1035 = pneg %p625
      %p1036 = pneg %p649
      %p1037 = pneg %p646
      %p1038 = pneg %p670
      %p1039 = pneg %p667
      %p1040 = pneg %p691
      %p1041 = pneg %p688
      %p1042 = pneg %p712
      %p1043 = pneg %p709
      %p1044 = pneg %p733
      %p1045 = pneg %p730
      %p1046 = pneg %p754
      %p1047 = pneg %p751
      %p1048 = pneg %p775
      %p1049 = pneg %p772
      %p1050 = pneg %p796
      %p1051 = pneg %p793
      %p1052 = pneg %p817
      %p1053 = pneg %p814
      %p1054 = pneg %p843
      %p1055 = pneg %p840
      %p1056 = scmp.lt.s32.totalorder %s82, 1
      %s1057 = scalar_select %p1056, %s82, 1
      %s1058 = smul.addr %s1057, 4
      %s1059 = smul.addr %s1058, 8
      %s1060 = scalar_lea.vmem %s71, %s1059
      %p1061 = scmp.lt.s32.totalorder %s82, 1
      %s1062 = scalar_select %p1061, %s82, 1
      %s1063 = smul.addr %s1062, 4
      %s1064 = smul.addr %s1063, 8
      %s1065 = scalar_lea.vmem %s1, %s1064
      %p1066 = scmp.lt.s32.totalorder %s82, 1
      %s1067 = scalar_select %p1066, %s82, 1
      %s1068 = smul.addr %s1067, 4
      %s1069 = smul.addr %s1068, 8
      %s1070 = scalar_lea.vmem %s71, %s1069
      %v1072 = vld [vmem:[%s1065] sm:$0xff]
      %v1073 = vld [vmem:[%s1065 + $0x8] sm:$0xff]
      %v1074 = vld [vmem:[%s1065 + $0x10] sm:$0xff]
      %v1075 = vld [vmem:[%s1065 + $0x18] sm:$0xff]
      %1076 = vxpose.xlu0.b32.start [1/16] %v1072, 128
      %1077 = vxpose.xlu0.b32.cont [2/16] %v1073, 128
      %1078 = vxpose.xlu0.b32.cont [3/16] %v1074, 128
      %1079 = vxpose.xlu0.b32.cont [4/16] %v1075, 128
      %1080 = vxpose.xlu0.b32.cont [5/16] 0.0, 128
      %1081 = vxpose.xlu0.b32.cont [6/16] 0.0, 128
      %1082 = vxpose.xlu0.b32.cont [7/16] 0.0, 128
      %1083 = vxpose.xlu0.b32.cont [8/16] 0.0, 128
      %1084 = vxpose.xlu0.b32.cont [9/16] 0.0, 128
      %1085 = vxpose.xlu0.b32.cont [10/16] 0.0, 128
      %1086 = vxpose.xlu0.b32.cont [11/16] 0.0, 128
      %1087 = vxpose.xlu0.b32.cont [12/16] 0.0, 128
      %1088 = vxpose.xlu0.b32.cont [13/16] 0.0, 128
      %1089 = vxpose.xlu0.b32.cont [14/16] 0.0, 128
      %1090 = vxpose.xlu0.b32.cont [15/16] 0.0, 128
      %1091 = vxpose.xlu0.b32.end [16/16] 0.0, 128
      %v1092 = vpop.trf.xlu0
      %v1093 = vpop.trf.xlu0
      %v1094 = vpop.trf.xlu0
      %v1095 = vpop.trf.xlu0
      %v1096 = vpop.trf.xlu0
      %v1097 = vpop.trf.xlu0
      %v1098 = vpop.trf.xlu0
      %v1099 = vpop.trf.xlu0
      %v1100 = vpop.trf.xlu0
      %v1101 = vpop.trf.xlu0
      %v1102 = vpop.trf.xlu0
      %v1103 = vpop.trf.xlu0
      %v1104 = vpop.trf.xlu0
      %v1105 = vpop.trf.xlu0
      %v1106 = vpop.trf.xlu0
      %v1107 = vpop.trf.xlu0
      %v1108 = vld [vmem:[%s3] sm:$0x1]
      %v1109 = vld [vmem:[%s5] sm:$0x1]
      %vm1110 = vcmask 261120
      %v1111 = vsel %vm1110, %v1092, 0.0
      %1112 = vadd.xlane.f32.xlu0 %v1111
      %v1113 = vpop.xlane.xlu0 %1112
      %v1114 = vsel %vm1110, %v1093, 0.0
      %1115 = vadd.xlane.f32.xlu0 %v1114
      %v1116 = vpop.xlane.xlu0 %1115
      %v1117 = vrcp.pop 32.0
      %v1118 = vmul.f32 %v1113, %v1117
      %v1119 = vmul.f32 %v1116, %v1117
      %v1120 = vsub.f32 %v1092, %v1118
      %v1121 = vsub.f32 %v1093, %v1119
      %v1122 = vmul.f32 %v1120, %v1120
      %v1123 = vmul.f32 %v1121, %v1121
      %v1124 = vsel %vm1110, %v1122, 0.0
      %1125 = vadd.xlane.f32.xlu0 %v1124
      %v1126 = vpop.xlane.xlu0 %1125
      %v1127 = vsel %vm1110, %v1123, 0.0
      %1128 = vadd.xlane.f32.xlu0 %v1127
      %v1129 = vpop.xlane.xlu0 %1128
      %v1130 = vmul.f32 %v1126, %v1117
      %v1131 = vmul.f32 %v1129, %v1117
      %v1132 = vadd.f32 %v1130, 1e-05
      %v1133 = vadd.f32 %v1131, 1e-05
      %v1134 = vrsqrt.pop %v1132
      %v1135 = vrsqrt.pop %v1133
      %v1136 = vmul.f32 %v1120, %v1134
      %v1137 = vmul.f32 %v1121, %v1135
      %v1139 = vlaneseq
      %v1140 = vshrl.u32 %v1139, 7
      %v1141 = vsub.s32 0, %v1140
      %v1142 = vrot.slane %v1108, %v1141
      %v1144 = vmul.f32 %v1136, %v1142
      %v1145 = vmul.f32 %v1137, %v1142
      %v1147 = vlaneseq
      %v1148 = vshrl.u32 %v1147, 7
      %v1149 = vsub.s32 0, %v1148
      %v1150 = vrot.slane %v1109, %v1149
      %v1152 = vadd.f32 %v1144, %v1150
      %v1153 = vadd.f32 %v1145, %v1150
      %v1154 = vpack.c.bf16 %v1153, %v1152
      %v1155 = vld [vmem:[%s7] sm:$0xf]
      %v1156 = vld [vmem:[%s7 + $0x4] sm:$0xf]
      %v1157 = vld [vmem:[%s7 + $0x8] sm:$0xf]
      %v1158 = vld [vmem:[%s7 + $0xc] sm:$0xf]
      %v1159 = vld [vmem:[%s9] sm:$0x1]
      %v1161 = vlaneseq
      %v1162 = vshrl.u32 %v1161, 7
      %v1163 = vsub.s32 0, %v1162
      %v1164 = vrot.slane %v1159, %v1163
      %v1170 = vunpack.c.l.b16 %v1155
      %v1171 = vunpack.c.l.b16 %v1156
      %v1172 = vunpack.c.l.b16 %v1157
      %v1173 = vunpack.c.l.b16 %v1158
      %v1174 = vpack.c.b16 %v1171, %v1170
      %v1175 = vpack.c.b16 %v1173, %v1172
      %v1179 = vsel %vm1110, %v1154, 0
      %1181 = vmatprep.subr.bf16.mxu0 0
      %1182 = vmatpush1.bf16.msra.mxu0 %v1174
      %1183 = vmatprep.subr.bf16.mxu0 0
      %1184 = vmatpush1.bf16.msra.mxu0 %v1175
      %1185 = vmatprep.subr.bf16.mxu0 0
      %1186 = vmatpush1.bf16.msra.mxu0 0
      %1187 = vmatprep.subr.bf16.mxu0 0
      %1188 = vmatpush1.bf16.msra.mxu0 0
      %1189 = vmatprep.subr.bf16.mxu0 0
      %1190 = vmatpush1.bf16.msra.mxu0 0
      %1191 = vmatprep.subr.bf16.mxu0 0
      %1192 = vmatpush1.bf16.msra.mxu0 0
      %1193 = vmatprep.subr.bf16.mxu0 0
      %1194 = vmatpush1.bf16.msra.mxu0 0
      %1195 = vmatprep.subr.bf16.mxu0 0
      %1196 = vmatpush1.bf16.msra.mxu0 0
      %1197 = vmatprep.subr.bf16.mxu0 0
      %1198 = vmatpush1.bf16.msra.mxu0 0
      %1199 = vmatprep.subr.bf16.mxu0 0
      %1200 = vmatpush1.bf16.msra.mxu0 0
      %1201 = vmatprep.subr.bf16.mxu0 0
      %1202 = vmatpush1.bf16.msra.mxu0 0
      %1203 = vmatprep.subr.bf16.mxu0 0
      %1204 = vmatpush1.bf16.msra.mxu0 0
      %1205 = vmatprep.subr.bf16.mxu0 0
      %1206 = vmatpush1.bf16.msra.mxu0 0
      %1207 = vmatprep.subr.bf16.mxu0 0
      %1208 = vmatpush1.bf16.msra.mxu0 0
      %1209 = vmatprep.subr.bf16.mxu0 0
      %1210 = vmatpush1.bf16.msra.mxu0 0
      %1211 = vmatprep.subr.bf16.mxu0 0
      %1212 = vmatpush1.bf16.msra.mxu0 0
      %1213 = vmatprep.mubr.bf16.mxu0 0
      %1214 = vmatmul.mubr.bf16.gmra.mrb[0].mxu0 %v1179
      %v1215 = vpop.f32.mrb[0].mxu0
      %v1216 = vadd.f32 %v1164, %v1215
      %v1217 = vpop.f32.mrb[0].mxu0
      %v1218 = vpop.f32.mrb[0].mxu0
      %v1219 = vadd.f32 %v1164, %v1218
      %v1220 = vpop.f32.mrb[0].mxu0
      %1221 = vdwg.mxu0
      %v1222 = vxor.u32 %v1216, 2147483648
      %v1223 = vxor.u32 %v1219, 2147483648
      %v1224 = vmul.f32 %v1222, 1.442695
      %v1225 = vpow.pop %v1224
      %v1226 = vmul.f32 %v1223, 1.442695
      %v1227 = vpow.pop %v1226
      %v1228 = vadd.f32 %v1225, 1.0
      %v1229 = vadd.f32 %v1227, 1.0
      %v1230 = vrcp.pop %v1228
      %v1231 = vmul.f32 1.0, %v1230
      %v1232 = vrcp.pop %v1229
      %v1233 = vmul.f32 1.0, %v1232
      %v1234 = vmul.f32 %v1216, %v1231
      %v1235 = vmul.f32 %v1219, %v1233
      %v1236 = vpack.c.bf16 %v1235, %v1234
      %v1237 = vld [vmem:[%s11] sm:$0xf]
      %v1238 = vld [vmem:[%s11 + $0x4] sm:$0xf]
      %v1239 = vld [vmem:[%s11 + $0x8] sm:$0xf]
      %v1240 = vld [vmem:[%s11 + $0xc] sm:$0xf]
      %v1241 = vld [vmem:[%s11 + $0x10] sm:$0xf]
      %v1242 = vld [vmem:[%s11 + $0x14] sm:$0xf]
      %v1243 = vld [vmem:[%s11 + $0x18] sm:$0xf]
      %v1244 = vld [vmem:[%s11 + $0x1c] sm:$0xf]
      %v1245 = vld [vmem:[%s11 + $0x20] sm:$0xf]
      %v1246 = vld [vmem:[%s11 + $0x24] sm:$0xf]
      %v1247 = vld [vmem:[%s11 + $0x28] sm:$0xf]
      %v1248 = vld [vmem:[%s11 + $0x2c] sm:$0xf]
      %v1249 = vld [vmem:[%s11 + $0x30] sm:$0xf]
      %v1250 = vld [vmem:[%s11 + $0x34] sm:$0xf]
      %v1251 = vld [vmem:[%s11 + $0x38] sm:$0xf]
      %v1252 = vld [vmem:[%s11 + $0x3c] sm:$0xf]
      %v1253 = vld [vmem:[%s13] sm:$0x1]
      %v1255 = vlaneseq
      %v1256 = vshrl.u32 %v1255, 7
      %v1257 = vsub.s32 0, %v1256
      %v1258 = vrot.slane %v1253, %v1257
      %v1276 = vunpack.c.l.b16 %v1237
      %v1277 = vunpack.c.l.b16 %v1238
      %v1278 = vunpack.c.l.b16 %v1239
      %v1279 = vunpack.c.l.b16 %v1240
      %v1280 = vunpack.c.l.b16 %v1241
      %v1281 = vunpack.c.l.b16 %v1242
      %v1282 = vunpack.c.l.b16 %v1243
      %v1283 = vunpack.c.l.b16 %v1244
      %v1284 = vunpack.c.l.b16 %v1245
      %v1285 = vunpack.c.l.b16 %v1246
      %v1286 = vunpack.c.l.b16 %v1247
      %v1287 = vunpack.c.l.b16 %v1248
      %v1288 = vunpack.c.l.b16 %v1249
      %v1289 = vunpack.c.l.b16 %v1250
      %v1290 = vunpack.c.l.b16 %v1251
      %v1291 = vunpack.c.l.b16 %v1252
      %v1292 = vpack.c.b16 %v1277, %v1276
      %v1293 = vpack.c.b16 %v1279, %v1278
      %v1294 = vpack.c.b16 %v1281, %v1280
      %v1295 = vpack.c.b16 %v1283, %v1282
      %v1296 = vpack.c.b16 %v1285, %v1284
      %v1297 = vpack.c.b16 %v1287, %v1286
      %v1298 = vpack.c.b16 %v1289, %v1288
      %v1299 = vpack.c.b16 %v1291, %v1290
      %1308 = vmatprep.subr.bf16.mxu0 0
      %1309 = vmatpush1.bf16.msra.mxu0 %v1292
      %1310 = vmatprep.subr.bf16.mxu0 0
      %1311 = vmatpush1.bf16.msra.mxu0 %v1293
      %1312 = vmatprep.subr.bf16.mxu0 0
      %1313 = vmatpush1.bf16.msra.mxu0 %v1294
      %1314 = vmatprep.subr.bf16.mxu0 0
      %1315 = vmatpush1.bf16.msra.mxu0 %v1295
      %1316 = vmatprep.subr.bf16.mxu0 0
      %1317 = vmatpush1.bf16.msra.mxu0 %v1296
      %1318 = vmatprep.subr.bf16.mxu0 0
      %1319 = vmatpush1.bf16.msra.mxu0 %v1297
      %1320 = vmatprep.subr.bf16.mxu0 0
      %1321 = vmatpush1.bf16.msra.mxu0 %v1298
      %1322 = vmatprep.subr.bf16.mxu0 0
      %1323 = vmatpush1.bf16.msra.mxu0 %v1299
      %1324 = vmatprep.subr.bf16.mxu0 0
      %1325 = vmatpush1.bf16.msra.mxu0 0
      %1326 = vmatprep.subr.bf16.mxu0 0
      %1327 = vmatpush1.bf16.msra.mxu0 0
      %1328 = vmatprep.subr.bf16.mxu0 0
      %1329 = vmatpush1.bf16.msra.mxu0 0
      %1330 = vmatprep.subr.bf16.mxu0 0
      %1331 = vmatpush1.bf16.msra.mxu0 0
      %1332 = vmatprep.subr.bf16.mxu0 0
      %1333 = vmatpush1.bf16.msra.mxu0 0
      %1334 = vmatprep.subr.bf16.mxu0 0
      %1335 = vmatpush1.bf16.msra.mxu0 0
      %1336 = vmatprep.subr.bf16.mxu0 0
      %1337 = vmatpush1.bf16.msra.mxu0 0
      %1338 = vmatprep.subr.bf16.mxu0 0
      %1339 = vmatpush1.bf16.msra.mxu0 0
      %1340 = vmatprep.mubr.bf16.mxu0 0
      %1341 = vmatmul.mubr.bf16.gmra.mrb[0].mxu0 %v1236
      %v1342 = vpop.f32.mrb[0].mxu0
      %v1343 = vadd.f32 %v1258, %v1342
      %v1344 = vpop.f32.mrb[0].mxu0
      %v1345 = vpop.f32.mrb[0].mxu0
      %v1346 = vadd.f32 %v1258, %v1345
      %v1347 = vpop.f32.mrb[0].mxu0
      %1348 = vdwg.mxu0
      %v1349 = vmul.f32 %v1343, 0.5
      %v1350 = vmul.f32 %v1346, 0.5
      %v1351 = vadd.f32 %v1349, %v1092
      %v1352 = vadd.f32 %v1350, %v1093
      %v1353 = vld [vmem:[%s15] sm:$0x1]
      %v1354 = vld [vmem:[%s17] sm:$0x1]
      %v1355 = vsel %vm1110, %v1351, 0.0
      %1356 = vadd.xlane.f32.xlu0 %v1355
      %v1357 = vpop.xlane.xlu0 %1356
      %v1358 = vsel %vm1110, %v1352, 0.0
      %1359 = vadd.xlane.f32.xlu0 %v1358
      %v1360 = vpop.xlane.xlu0 %1359
      %v1361 = vmul.f32 %v1357, %v1117
      %v1362 = vmul.f32 %v1360, %v1117
      %v1363 = vsub.f32 %v1351, %v1361
      %v1364 = vsub.f32 %v1352, %v1362
      %v1365 = vmul.f32 %v1363, %v1363
      %v1366 = vmul.f32 %v1364, %v1364
      %v1367 = vsel %vm1110, %v1365, 0.0
      %1368 = vadd.xlane.f32.xlu0 %v1367
      %v1369 = vpop.xlane.xlu0 %1368
      %v1370 = vsel %vm1110, %v1366, 0.0
      %1371 = vadd.xlane.f32.xlu0 %v1370
      %v1372 = vpop.xlane.xlu0 %1371
      %v1373 = vmul.f32 %v1369, %v1117
      %v1374 = vmul.f32 %v1372, %v1117
      %v1375 = vadd.f32 %v1373, 1e-05
      %v1376 = vadd.f32 %v1374, 1e-05
      %v1377 = vrsqrt.pop %v1375
      %v1378 = vrsqrt.pop %v1376
      %v1379 = vmul.f32 %v1363, %v1377
      %v1380 = vmul.f32 %v1364, %v1378
      %v1382 = vlaneseq
      %v1383 = vshrl.u32 %v1382, 7
      %v1384 = vsub.s32 0, %v1383
      %v1385 = vrot.slane %v1353, %v1384
      %v1387 = vmul.f32 %v1379, %v1385
      %v1388 = vmul.f32 %v1380, %v1385
      %v1390 = vlaneseq
      %v1391 = vshrl.u32 %v1390, 7
      %v1392 = vsub.s32 0, %v1391
      %v1393 = vrot.slane %v1354, %v1392
      %v1395 = vadd.f32 %v1387, %v1393
      %v1396 = vadd.f32 %v1388, %v1393
      %v1397 = vpack.c.bf16 %v1396, %v1395
      %v1398 = vld [vmem:[%s19] sm:$0xf]
      %v1399 = vld [vmem:[%s19 + $0x4] sm:$0xf]
      %v1400 = vld [vmem:[%s19 + $0x8] sm:$0xf]
      %v1401 = vld [vmem:[%s19 + $0xc] sm:$0xf]
      %v1402 = vld [vmem:[%s21] sm:$0x1]
      %v1404 = vlaneseq
      %v1405 = vshrl.u32 %v1404, 7
      %v1406 = vsub.s32 0, %v1405
      %v1407 = vrot.slane %v1402, %v1406
      %v1413 = vunpack.c.l.b16 %v1398
      %v1414 = vunpack.c.l.b16 %v1399
      %v1415 = vunpack.c.l.b16 %v1400
      %v1416 = vunpack.c.l.b16 %v1401
      %v1417 = vpack.c.b16 %v1414, %v1413
      %v1418 = vpack.c.b16 %v1416, %v1415
      %v1422 = vsel %vm1110, %v1397, 0
      %1424 = vmatprep.subr.bf16.mxu0 0
      %1425 = vmatpush1.bf16.msra.mxu0 %v1417
      %1426 = vmatprep.subr.bf16.mxu0 0
      %1427 = vmatpush1.bf16.msra.mxu0 %v1418
      %1428 = vmatprep.subr.bf16.mxu0 0
      %1429 = vmatpush1.bf16.msra.mxu0 0
      %1430 = vmatprep.subr.bf16.mxu0 0
      %1431 = vmatpush1.bf16.msra.mxu0 0
      %1432 = vmatprep.subr.bf16.mxu0 0
      %1433 = vmatpush1.bf16.msra.mxu0 0
      %1434 = vmatprep.subr.bf16.mxu0 0
      %1435 = vmatpush1.bf16.msra.mxu0 0
      %1436 = vmatprep.subr.bf16.mxu0 0
      %1437 = vmatpush1.bf16.msra.mxu0 0
      %1438 = vmatprep.subr.bf16.mxu0 0
      %1439 = vmatpush1.bf16.msra.mxu0 0
      %1440 = vmatprep.subr.bf16.mxu0 0
      %1441 = vmatpush1.bf16.msra.mxu0 0
      %1442 = vmatprep.subr.bf16.mxu0 0
      %1443 = vmatpush1.bf16.msra.mxu0 0
      %1444 = vmatprep.subr.bf16.mxu0 0
      %1445 = vmatpush1.bf16.msra.mxu0 0
      %1446 = vmatprep.subr.bf16.mxu0 0
      %1447 = vmatpush1.bf16.msra.mxu0 0
      %1448 = vmatprep.subr.bf16.mxu0 0
      %1449 = vmatpush1.bf16.msra.mxu0 0
      %1450 = vmatprep.subr.bf16.mxu0 0
      %1451 = vmatpush1.bf16.msra.mxu0 0
      %1452 = vmatprep.subr.bf16.mxu0 0
      %1453 = vmatpush1.bf16.msra.mxu0 0
      %1454 = vmatprep.subr.bf16.mxu0 0
      %1455 = vmatpush1.bf16.msra.mxu0 0
      %1456 = vmatprep.mubr.bf16.mxu0 0
      %1457 = vmatmul.mubr.bf16.gmra.mrb[0].mxu0 %v1422
      %v1458 = vpop.f32.mrb[0].mxu0
      %v1459 = vadd.f32 %v1407, %v1458
      %v1460 = vpop.f32.mrb[0].mxu0
      %v1461 = vpop.f32.mrb[0].mxu0
      %v1462 = vadd.f32 %v1407, %v1461
      %v1463 = vpop.f32.mrb[0].mxu0
      %1464 = vdwg.mxu0
      %v1465 = vld [vmem:[%s23] sm:$0xf]
      %v1466 = vld [vmem:[%s23 + $0x4] sm:$0xf]
      %v1467 = vld [vmem:[%s23 + $0x8] sm:$0xf]
      %v1468 = vld [vmem:[%s23 + $0xc] sm:$0xf]
      %v1469 = vld [vmem:[%s25] sm:$0x1]
      %v1471 = vlaneseq
      %v1472 = vshrl.u32 %v1471, 7
      %v1473 = vsub.s32 0, %v1472
      %v1474 = vrot.slane %v1469, %v1473
      %v1480 = vunpack.c.l.b16 %v1465
      %v1481 = vunpack.c.l.b16 %v1466
      %v1482 = vunpack.c.l.b16 %v1467
      %v1483 = vunpack.c.l.b16 %v1468
      %v1484 = vpack.c.b16 %v1481, %v1480
      %v1485 = vpack.c.b16 %v1483, %v1482
      %1488 = vmatprep.subr.bf16.mxu0 0
      %1489 = vmatpush1.bf16.msra.mxu0 %v1484
      %1490 = vmatprep.subr.bf16.mxu0 0
      %1491 = vmatpush1.bf16.msra.mxu0 %v1485
      %1492 = vmatprep.subr.bf16.mxu0 0
      %1493 = vmatpush1.bf16.msra.mxu0 0
      %1494 = vmatprep.subr.bf16.mxu0 0
      %1495 = vmatpush1.bf16.msra.mxu0 0
      %1496 = vmatprep.subr.bf16.mxu0 0
      %1497 = vmatpush1.bf16.msra.mxu0 0
      %1498 = vmatprep.subr.bf16.mxu0 0
      %1499 = vmatpush1.bf16.msra.mxu0 0
      %1500 = vmatprep.subr.bf16.mxu0 0
      %1501 = vmatpush1.bf16.msra.mxu0 0
      %1502 = vmatprep.subr.bf16.mxu0 0
      %1503 = vmatpush1.bf16.msra.mxu0 0
      %1504 = vmatprep.subr.bf16.mxu0 0
      %1505 = vmatpush1.bf16.msra.mxu0 0
      %1506 = vmatprep.subr.bf16.mxu0 0
      %1507 = vmatpush1.bf16.msra.mxu0 0
      %1508 = vmatprep.subr.bf16.mxu0 0
      %1509 = vmatpush1.bf16.msra.mxu0 0
      %1510 = vmatprep.subr.bf16.mxu0 0
      %1511 = vmatpush1.bf16.msra.mxu0 0
      %1512 = vmatprep.subr.bf16.mxu0 0
      %1513 = vmatpush1.bf16.msra.mxu0 0
      %1514 = vmatprep.subr.bf16.mxu0 0
      %1515 = vmatpush1.bf16.msra.mxu0 0
      %1516 = vmatprep.subr.bf16.mxu0 0
      %1517 = vmatpush1.bf16.msra.mxu0 0
      %1518 = vmatprep.subr.bf16.mxu0 0
      %1519 = vmatpush1.bf16.msra.mxu0 0
      %1520 = vmatprep.mubr.bf16.mxu0 0
      %1521 = vmatmul.mubr.bf16.gmra.mrb[0].mxu0 %v1422
      %v1522 = vpop.f32.mrb[0].mxu0
      %v1523 = vadd.f32 %v1474, %v1522
      %v1524 = vpop.f32.mrb[0].mxu0
      %v1525 = vpop.f32.mrb[0].mxu0
      %v1526 = vadd.f32 %v1474, %v1525
      %v1527 = vpop.f32.mrb[0].mxu0
      %1528 = vdwg.mxu0
      %v1529 = vld [vmem:[%s27] sm:$0xf]
      %v1530 = vld [vmem:[%s27 + $0x4] sm:$0xf]
      %v1531 = vld [vmem:[%s27 + $0x8] sm:$0xf]
      %v1532 = vld [vmem:[%s27 + $0xc] sm:$0xf]
      %v1533 = vld [vmem:[%s29] sm:$0x1]
      %v1535 = vlaneseq
      %v1536 = vshrl.u32 %v1535, 7
      %v1537 = vsub.s32 0, %v1536
      %v1538 = vrot.slane %v1533, %v1537
      %v1544 = vunpack.c.l.b16 %v1529
      %v1545 = vunpack.c.l.b16 %v1530
      %v1546 = vunpack.c.l.b16 %v1531
      %v1547 = vunpack.c.l.b16 %v1532
      %v1548 = vpack.c.b16 %v1545, %v1544
      %v1549 = vpack.c.b16 %v1547, %v1546
      %1552 = vmatprep.subr.bf16.mxu0 0
      %1553 = vmatpush1.bf16.msra.mxu0 %v1548
      %1554 = vmatprep.subr.bf16.mxu0 0
      %1555 = vmatpush1.bf16.msra.mxu0 %v1549
      %1556 = vmatprep.subr.bf16.mxu0 0
      %1557 = vmatpush1.bf16.msra.mxu0 0
      %1558 = vmatprep.subr.bf16.mxu0 0
      %1559 = vmatpush1.bf16.msra.mxu0 0
      %1560 = vmatprep.subr.bf16.mxu0 0
      %1561 = vmatpush1.bf16.msra.mxu0 0
      %1562 = vmatprep.subr.bf16.mxu0 0
      %1563 = vmatpush1.bf16.msra.mxu0 0
      %1564 = vmatprep.subr.bf16.mxu0 0
      %1565 = vmatpush1.bf16.msra.mxu0 0
      %1566 = vmatprep.subr.bf16.mxu0 0
      %1567 = vmatpush1.bf16.msra.mxu0 0
      %1568 = vmatprep.subr.bf16.mxu0 0
      %1569 = vmatpush1.bf16.msra.mxu0 0
      %1570 = vmatprep.subr.bf16.mxu0 0
      %1571 = vmatpush1.bf16.msra.mxu0 0
      %1572 = vmatprep.subr.bf16.mxu0 0
      %1573 = vmatpush1.bf16.msra.mxu0 0
      %1574 = vmatprep.subr.bf16.mxu0 0
      %1575 = vmatpush1.bf16.msra.mxu0 0
      %1576 = vmatprep.subr.bf16.mxu0 0
      %1577 = vmatpush1.bf16.msra.mxu0 0
      %1578 = vmatprep.subr.bf16.mxu0 0
      %1579 = vmatpush1.bf16.msra.mxu0 0
      %1580 = vmatprep.subr.bf16.mxu0 0
      %1581 = vmatpush1.bf16.msra.mxu0 0
      %1582 = vmatprep.subr.bf16.mxu0 0
      %1583 = vmatpush1.bf16.msra.mxu0 0
      %1584 = vmatprep.mubr.bf16.mxu0 0
      %1585 = vmatmul.mubr.bf16.gmra.mrb[0].mxu0 %v1422
      %v1586 = vpop.f32.mrb[0].mxu0
      %v1587 = vadd.f32 %v1538, %v1586
      %v1588 = vpop.f32.mrb[0].mxu0
      %v1589 = vpop.f32.mrb[0].mxu0
      %v1590 = vadd.f32 %v1538, %v1589
      %v1591 = vpop.f32.mrb[0].mxu0
      %1592 = vdwg.mxu0
      %1595 = vrot.lane.b32.xlu0 %v1459, 120
      %v1596 = vpop.permute.xlu0 %1595
      %1597 = vrot.lane.b32.xlu0 %v1462, 120
      %v1598 = vpop.permute.xlu0 %1597
      %1601 = vrot.lane.b32.xlu0 %v1459, 112
      %v1602 = vpop.permute.xlu0 %1601
      %1603 = vrot.lane.b32.xlu0 %v1462, 112
      %v1604 = vpop.permute.xlu0 %1603
      %1607 = vrot.lane.b32.xlu0 %v1459, 104
      %v1608 = vpop.permute.xlu0 %1607
      %1609 = vrot.lane.b32.xlu0 %v1462, 104
      %v1610 = vpop.permute.xlu0 %1609
      %v1613 = vpack.c.bf16 %v1462, %v1459
      %v1614 = vpack.c.bf16 %v1598, %v1596
      %v1615 = vpack.c.bf16 %v1604, %v1602
      %v1616 = vpack.c.bf16 %v1610, %v1608
      %1619 = vrot.lane.b32.xlu0 %v1523, 120
      %v1620 = vpop.permute.xlu0 %1619
      %1621 = vrot.lane.b32.xlu0 %v1526, 120
      %v1622 = vpop.permute.xlu0 %1621
      %1625 = vrot.lane.b32.xlu0 %v1523, 112
      %v1626 = vpop.permute.xlu0 %1625
      %1627 = vrot.lane.b32.xlu0 %v1526, 112
      %v1628 = vpop.permute.xlu0 %1627
      %1631 = vrot.lane.b32.xlu0 %v1523, 104
      %v1632 = vpop.permute.xlu0 %1631
      %1633 = vrot.lane.b32.xlu0 %v1526, 104
      %v1634 = vpop.permute.xlu0 %1633
      %v1637 = vpack.c.bf16 %v1526, %v1523
      %v1638 = vpack.c.bf16 %v1622, %v1620
      %v1639 = vpack.c.bf16 %v1628, %v1626
      %v1640 = vpack.c.bf16 %v1634, %v1632
      %1643 = vrot.lane.b32.xlu0 %v1587, 120
      %v1644 = vpop.permute.xlu0 %1643
      %1645 = vrot.lane.b32.xlu0 %v1590, 120
      %v1646 = vpop.permute.xlu0 %1645
      %1649 = vrot.lane.b32.xlu0 %v1587, 112
      %v1650 = vpop.permute.xlu0 %1649
      %1651 = vrot.lane.b32.xlu0 %v1590, 112
      %v1652 = vpop.permute.xlu0 %1651
      %1655 = vrot.lane.b32.xlu0 %v1587, 104
      %v1656 = vpop.permute.xlu0 %1655
      %1657 = vrot.lane.b32.xlu0 %v1590, 104
      %v1658 = vpop.permute.xlu0 %1657
      %v1661 = vpack.c.bf16 %v1590, %v1587
      %v1662 = vpack.c.bf16 %v1646, %v1644
      %v1663 = vpack.c.bf16 %v1652, %v1650
      %v1664 = vpack.c.bf16 %v1658, %v1656
      %vm1665 = vcmask 64512
      %v1667 = vsel %vm1665, %v1613, 0
      %v1670 = vsel %vm1665, %v1637, 0
      %1672 = vmatprep.subr.bf16.mxu0 0
      %1673 = vmatpush1.bf16.xpose.msra.mxu0 %v1670
      %1674 = vmatprep.subr.bf16.mxu0 0
      %1675 = vmatpush1.bf16.xpose.msra.mxu0 0
      %1676 = vmatprep.subr.bf16.mxu0 0
      %1677 = vmatpush1.bf16.xpose.msra.mxu0 0
      %1678 = vmatprep.subr.bf16.mxu0 0
      %1679 = vmatpush1.bf16.xpose.msra.mxu0 0
      %1680 = vmatprep.subr.bf16.mxu0 0
      %1681 = vmatpush1.bf16.xpose.msra.mxu0 0
      %1682 = vmatprep.subr.bf16.mxu0 0
      %1683 = vmatpush1.bf16.xpose.msra.mxu0 0
      %1684 = vmatprep.subr.bf16.mxu0 0
      %1685 = vmatpush1.bf16.xpose.msra.mxu0 0
      %1686 = vmatprep.subr.bf16.mxu0 0
      %1687 = vmatpush1.bf16.xpose.msra.mxu0 0
      %1688 = vmatprep.subr.bf16.mxu0 0
      %1689 = vmatpush1.bf16.xpose.msra.mxu0 0
      %1690 = vmatprep.subr.bf16.mxu0 0
      %1691 = vmatpush1.bf16.xpose.msra.mxu0 0
      %1692 = vmatprep.subr.bf16.mxu0 0
      %1693 = vmatpush1.bf16.xpose.msra.mxu0 0
      %1694 = vmatprep.subr.bf16.mxu0 0
      %1695 = vmatpush1.bf16.xpose.msra.mxu0 0
      %1696 = vmatprep.subr.bf16.mxu0 0
      %1697 = vmatpush1.bf16.xpose.msra.mxu0 0
      %1698 = vmatprep.subr.bf16.mxu0 0
      %1699 = vmatpush1.bf16.xpose.msra.mxu0 0
      %1700 = vmatprep.subr.bf16.mxu0 0
      %1701 = vmatpush1.bf16.xpose.msra.mxu0 0
      %1702 = vmatprep.subr.bf16.mxu0 0
      %1703 = vmatpush1.bf16.xpose.msra.mxu0 0
      %1704 = vmatprep.mubr.bf16.mxu0 0
      %1705 = vmatmul.mubr.bf16.gmra.mrb[0].mxu0 %v1667
      %v1706 = vpop.f32.mrb[0].mxu0
      %v1707 = vadd.f32 0.0, %v1706
      %v1708 = vpop.f32.mrb[0].mxu0
      %v1709 = vpop.f32.mrb[0].mxu0
      %v1710 = vadd.f32 0.0, %v1709
      %v1711 = vpop.f32.mrb[0].mxu0
      %1712 = vdwg.mxu0
      %v1714 = vsel %vm1665, %v1614, 0
      %v1717 = vsel %vm1665, %v1638, 0
      %1719 = vmatprep.subr.bf16.mxu0 0
      %1720 = vmatpush1.bf16.xpose.msra.mxu0 %v1717
      %1721 = vmatprep.subr.bf16.mxu0 0
      %1722 = vmatpush1.bf16.xpose.msra.mxu0 0
      %1723 = vmatprep.subr.bf16.mxu0 0
      %1724 = vmatpush1.bf16.xpose.msra.mxu0 0
      %1725 = vmatprep.subr.bf16.mxu0 0
      %1726 = vmatpush1.bf16.xpose.msra.mxu0 0
      %1727 = vmatprep.subr.bf16.mxu0 0
      %1728 = vmatpush1.bf16.xpose.msra.mxu0 0
      %1729 = vmatprep.subr.bf16.mxu0 0
      %1730 = vmatpush1.bf16.xpose.msra.mxu0 0
      %1731 = vmatprep.subr.bf16.mxu0 0
      %1732 = vmatpush1.bf16.xpose.msra.mxu0 0
      %1733 = vmatprep.subr.bf16.mxu0 0
      %1734 = vmatpush1.bf16.xpose.msra.mxu0 0
      %1735 = vmatprep.subr.bf16.mxu0 0
      %1736 = vmatpush1.bf16.xpose.msra.mxu0 0
      %1737 = vmatprep.subr.bf16.mxu0 0
      %1738 = vmatpush1.bf16.xpose.msra.mxu0 0
      %1739 = vmatprep.subr.bf16.mxu0 0
      %1740 = vmatpush1.bf16.xpose.msra.mxu0 0
      %1741 = vmatprep.subr.bf16.mxu0 0
      %1742 = vmatpush1.bf16.xpose.msra.mxu0 0
      %1743 = vmatprep.subr.bf16.mxu0 0
      %1744 = vmatpush1.bf16.xpose.msra.mxu0 0
      %1745 = vmatprep.subr.bf16.mxu0 0
      %1746 = vmatpush1.bf16.xpose.msra.mxu0 0
      %1747 = vmatprep.subr.bf16.mxu0 0
      %1748 = vmatpush1.bf16.xpose.msra.mxu0 0
      %1749 = vmatprep.subr.bf16.mxu0 0
      %1750 = vmatpush1.bf16.xpose.msra.mxu0 0
      %1751 = vmatprep.mubr.bf16.mxu0 0
      %1752 = vmatmul.mubr.bf16.gmra.mrb[0].mxu0 %v1714
      %v1753 = vpop.f32.mrb[0].mxu0
      %v1754 = vadd.f32 0.0, %v1753
      %v1755 = vpop.f32.mrb[0].mxu0
      %v1756 = vpop.f32.mrb[0].mxu0
      %v1757 = vadd.f32 0.0, %v1756
      %v1758 = vpop.f32.mrb[0].mxu0
      %1759 = vdwg.mxu0
      %v1761 = vsel %vm1665, %v1615, 0
      %v1764 = vsel %vm1665, %v1639, 0
      %1766 = vmatprep.subr.bf16.mxu0 0
      %1767 = vmatpush1.bf16.xpose.msra.mxu0 %v1764
      %1768 = vmatprep.subr.bf16.mxu0 0
      %1769 = vmatpush1.bf16.xpose.msra.mxu0 0
      %1770 = vmatprep.subr.bf16.mxu0 0
      %1771 = vmatpush1.bf16.xpose.msra.mxu0 0
      %1772 = vmatprep.subr.bf16.mxu0 0
      %1773 = vmatpush1.bf16.xpose.msra.mxu0 0
      %1774 = vmatprep.subr.bf16.mxu0 0
      %1775 = vmatpush1.bf16.xpose.msra.mxu0 0
      %1776 = vmatprep.subr.bf16.mxu0 0
      %1777 = vmatpush1.bf16.xpose.msra.mxu0 0
      %1778 = vmatprep.subr.bf16.mxu0 0
      %1779 = vmatpush1.bf16.xpose.msra.mxu0 0
      %1780 = vmatprep.subr.bf16.mxu0 0
      %1781 = vmatpush1.bf16.xpose.msra.mxu0 0
      %1782 = vmatprep.subr.bf16.mxu0 0
      %1783 = vmatpush1.bf16.xpose.msra.mxu0 0
      %1784 = vmatprep.subr.bf16.mxu0 0
      %1785 = vmatpush1.bf16.xpose.msra.mxu0 0
      %1786 = vmatprep.subr.bf16.mxu0 0
      %1787 = vmatpush1.bf16.xpose.msra.mxu0 0
      %1788 = vmatprep.subr.bf16.mxu0 0
      %1789 = vmatpush1.bf16.xpose.msra.mxu0 0
      %1790 = vmatprep.subr.bf16.mxu0 0
      %1791 = vmatpush1.bf16.xpose.msra.mxu0 0
      %1792 = vmatprep.subr.bf16.mxu0 0
      %1793 = vmatpush1.bf16.xpose.msra.mxu0 0
      %1794 = vmatprep.subr.bf16.mxu0 0
      %1795 = vmatpush1.bf16.xpose.msra.mxu0 0
      %1796 = vmatprep.subr.bf16.mxu0 0
      %1797 = vmatpush1.bf16.xpose.msra.mxu0 0
      %1798 = vmatprep.mubr.bf16.mxu0 0
      %1799 = vmatmul.mubr.bf16.gmra.mrb[0].mxu0 %v1761
      %v1800 = vpop.f32.mrb[0].mxu0
      %v1801 = vadd.f32 0.0, %v1800
      %v1802 = vpop.f32.mrb[0].mxu0
      %v1803 = vpop.f32.mrb[0].mxu0
      %v1804 = vadd.f32 0.0, %v1803
      %v1805 = vpop.f32.mrb[0].mxu0
      %1806 = vdwg.mxu0
      %v1808 = vsel %vm1665, %v1616, 0
      %v1811 = vsel %vm1665, %v1640, 0
      %1813 = vmatprep.subr.bf16.mxu0 0
      %1814 = vmatpush1.bf16.xpose.msra.mxu0 %v1811
      %1815 = vmatprep.subr.bf16.mxu0 0
      %1816 = vmatpush1.bf16.xpose.msra.mxu0 0
      %1817 = vmatprep.subr.bf16.mxu0 0
      %1818 = vmatpush1.bf16.xpose.msra.mxu0 0
      %1819 = vmatprep.subr.bf16.mxu0 0
      %1820 = vmatpush1.bf16.xpose.msra.mxu0 0
      %1821 = vmatprep.subr.bf16.mxu0 0
      %1822 = vmatpush1.bf16.xpose.msra.mxu0 0
      %1823 = vmatprep.subr.bf16.mxu0 0
      %1824 = vmatpush1.bf16.xpose.msra.mxu0 0
      %1825 = vmatprep.subr.bf16.mxu0 0
      %1826 = vmatpush1.bf16.xpose.msra.mxu0 0
      %1827 = vmatprep.subr.bf16.mxu0 0
      %1828 = vmatpush1.bf16.xpose.msra.mxu0 0
      %1829 = vmatprep.subr.bf16.mxu0 0
      %1830 = vmatpush1.bf16.xpose.msra.mxu0 0
      %1831 = vmatprep.subr.bf16.mxu0 0
      %1832 = vmatpush1.bf16.xpose.msra.mxu0 0
      %1833 = vmatprep.subr.bf16.mxu0 0
      %1834 = vmatpush1.bf16.xpose.msra.mxu0 0
      %1835 = vmatprep.subr.bf16.mxu0 0
      %1836 = vmatpush1.bf16.xpose.msra.mxu0 0
      %1837 = vmatprep.subr.bf16.mxu0 0
      %1838 = vmatpush1.bf16.xpose.msra.mxu0 0
      %1839 = vmatprep.subr.bf16.mxu0 0
      %1840 = vmatpush1.bf16.xpose.msra.mxu0 0
      %1841 = vmatprep.subr.bf16.mxu0 0
      %1842 = vmatpush1.bf16.xpose.msra.mxu0 0
      %1843 = vmatprep.subr.bf16.mxu0 0
      %1844 = vmatpush1.bf16.xpose.msra.mxu0 0
      %1845 = vmatprep.mubr.bf16.mxu0 0
      %1846 = vmatmul.mubr.bf16.gmra.mrb[0].mxu0 %v1808
      %v1847 = vpop.f32.mrb[0].mxu0
      %v1848 = vadd.f32 0.0, %v1847
      %v1849 = vpop.f32.mrb[0].mxu0
      %v1850 = vpop.f32.mrb[0].mxu0
      %v1851 = vadd.f32 0.0, %v1850
      %v1852 = vpop.f32.mrb[0].mxu0
      %1853 = vdwg.mxu0
      %v1854 = vmul.f32 %v1707, 0.35355338
      %v1855 = vmul.f32 %v1710, 0.35355338
      %v1856 = vmul.f32 %v1754, 0.35355338
      %v1857 = vmul.f32 %v1757, 0.35355338
      %v1858 = vmul.f32 %v1801, 0.35355338
      %v1859 = vmul.f32 %v1804, 0.35355338
      %v1860 = vmul.f32 %v1848, 0.35355338
      %v1861 = vmul.f32 %v1851, 0.35355338
      %vm1862 = vcmask 130048
      %v1863 = vsel %vm1862, %v1854, -inf
      %1864 = vmax.xlane.f32.xlu0 %v1863
      %v1865 = vpop.xlane.xlu0 %1864
      %v1866 = vsel %vm1862, %v1855, -inf
      %1867 = vmax.xlane.f32.xlu0 %v1866
      %v1868 = vpop.xlane.xlu0 %1867
      %v1869 = vsel %vm1862, %v1856, -inf
      %1870 = vmax.xlane.f32.xlu0 %v1869
      %v1871 = vpop.xlane.xlu0 %1870
      %v1872 = vsel %vm1862, %v1857, -inf
      %1873 = vmax.xlane.f32.xlu0 %v1872
      %v1874 = vpop.xlane.xlu0 %1873
      %v1875 = vsel %vm1862, %v1858, -inf
      %1876 = vmax.xlane.f32.xlu0 %v1875
      %v1877 = vpop.xlane.xlu0 %1876
      %v1878 = vsel %vm1862, %v1859, -inf
      %1879 = vmax.xlane.f32.xlu0 %v1878
      %v1880 = vpop.xlane.xlu0 %1879
      %v1881 = vsel %vm1862, %v1860, -inf
      %1882 = vmax.xlane.f32.xlu0 %v1881
      %v1883 = vpop.xlane.xlu0 %1882
      %v1884 = vsel %vm1862, %v1861, -inf
      %1885 = vmax.xlane.f32.xlu0 %v1884
      %v1886 = vpop.xlane.xlu0 %1885
      %v1887 = vsub.f32 %v1854, %v1865
      %v1888 = vsub.f32 %v1855, %v1868
      %v1889 = vsub.f32 %v1856, %v1871
      %v1890 = vsub.f32 %v1857, %v1874
      %v1891 = vsub.f32 %v1858, %v1877
      %v1892 = vsub.f32 %v1859, %v1880
      %v1893 = vsub.f32 %v1860, %v1883
      %v1894 = vsub.f32 %v1861, %v1886
      %v1895 = vmul.f32 %v1887, 1.442695
      %v1896 = vpow.pop %v1895
      %v1897 = vmul.f32 %v1888, 1.442695
      %v1898 = vpow.pop %v1897
      %v1899 = vmul.f32 %v1889, 1.442695
      %v1900 = vpow.pop %v1899
      %v1901 = vmul.f32 %v1890, 1.442695
      %v1902 = vpow.pop %v1901
      %v1903 = vmul.f32 %v1891, 1.442695
      %v1904 = vpow.pop %v1903
      %v1905 = vmul.f32 %v1892, 1.442695
      %v1906 = vpow.pop %v1905
      %v1907 = vmul.f32 %v1893, 1.442695
      %v1908 = vpow.pop %v1907
      %v1909 = vmul.f32 %v1894, 1.442695
      %v1910 = vpow.pop %v1909
      %v1911 = vsel %vm1862, %v1896, 0.0
      %1912 = vadd.xlane.f32.xlu0 %v1911
      %v1913 = vpop.xlane.xlu0 %1912
      %v1914 = vsel %vm1862, %v1898, 0.0
      %1915 = vadd.xlane.f32.xlu0 %v1914
      %v1916 = vpop.xlane.xlu0 %1915
      %v1917 = vsel %vm1862, %v1900, 0.0
      %1918 = vadd.xlane.f32.xlu0 %v1917
      %v1919 = vpop.xlane.xlu0 %1918
      %v1920 = vsel %vm1862, %v1902, 0.0
      %1921 = vadd.xlane.f32.xlu0 %v1920
      %v1922 = vpop.xlane.xlu0 %1921
      %v1923 = vsel %vm1862, %v1904, 0.0
      %1924 = vadd.xlane.f32.xlu0 %v1923
      %v1925 = vpop.xlane.xlu0 %1924
      %v1926 = vsel %vm1862, %v1906, 0.0
      %1927 = vadd.xlane.f32.xlu0 %v1926
      %v1928 = vpop.xlane.xlu0 %1927
      %v1929 = vsel %vm1862, %v1908, 0.0
      %1930 = vadd.xlane.f32.xlu0 %v1929
      %v1931 = vpop.xlane.xlu0 %1930
      %v1932 = vsel %vm1862, %v1910, 0.0
      %1933 = vadd.xlane.f32.xlu0 %v1932
      %v1934 = vpop.xlane.xlu0 %1933
      %v1935 = vrcp.pop %v1913
      %v1936 = vrcp.pop %v1916
      %v1937 = vrcp.pop %v1919
      %v1938 = vrcp.pop %v1922
      %v1939 = vrcp.pop %v1925
      %v1940 = vrcp.pop %v1928
      %v1941 = vrcp.pop %v1931
      %v1942 = vrcp.pop %v1934
      %v1943 = vmul.f32 %v1896, %v1935
      %v1944 = vmul.f32 %v1898, %v1936
      %v1945 = vmul.f32 %v1900, %v1937
      %v1946 = vmul.f32 %v1902, %v1938
      %v1947 = vmul.f32 %v1904, %v1939
      %v1948 = vmul.f32 %v1906, %v1940
      %v1949 = vmul.f32 %v1908, %v1941
      %v1950 = vmul.f32 %v1910, %v1942
      %v1951 = vpack.c.bf16 %v1944, %v1943
      %v1952 = vpack.c.bf16 %v1946, %v1945
      %v1953 = vpack.c.bf16 %v1948, %v1947
      %v1954 = vpack.c.bf16 %v1950, %v1949
      %v1956 = vsel %vm1862, %v1951, 0
      %1958 = vmatprep.subr.bf16.mxu0 0
      %1959 = vmatpush1.bf16.msra.mxu0 %v1661
      %1960 = vmatprep.subr.bf16.mxu0 0
      %1961 = vmatpush1.bf16.msra.mxu0 0
      %1962 = vmatprep.subr.bf16.mxu0 0
      %1963 = vmatpush1.bf16.msra.mxu0 0
      %1964 = vmatprep.subr.bf16.mxu0 0
      %1965 = vmatpush1.bf16.msra.mxu0 0
      %1966 = vmatprep.subr.bf16.mxu0 0
      %1967 = vmatpush1.bf16.msra.mxu0 0
      %1968 = vmatprep.subr.bf16.mxu0 0
      %1969 = vmatpush1.bf16.msra.mxu0 0
      %1970 = vmatprep.subr.bf16.mxu0 0
      %1971 = vmatpush1.bf16.msra.mxu0 0
      %1972 = vmatprep.subr.bf16.mxu0 0
      %1973 = vmatpush1.bf16.msra.mxu0 0
      %1974 = vmatprep.subr.bf16.mxu0 0
      %1975 = vmatpush1.bf16.msra.mxu0 0
      %1976 = vmatprep.subr.bf16.mxu0 0
      %1977 = vmatpush1.bf16.msra.mxu0 0
      %1978 = vmatprep.subr.bf16.mxu0 0
      %1979 = vmatpush1.bf16.msra.mxu0 0
      %1980 = vmatprep.subr.bf16.mxu0 0
      %1981 = vmatpush1.bf16.msra.mxu0 0
      %1982 = vmatprep.subr.bf16.mxu0 0
      %1983 = vmatpush1.bf16.msra.mxu0 0
      %1984 = vmatprep.subr.bf16.mxu0 0
      %1985 = vmatpush1.bf16.msra.mxu0 0
      %1986 = vmatprep.subr.bf16.mxu0 0
      %1987 = vmatpush1.bf16.msra.mxu0 0
      %1988 = vmatprep.subr.bf16.mxu0 0
      %1989 = vmatpush1.bf16.msra.mxu0 0
      %1990 = vmatprep.mubr.bf16.mxu0 0
      %1991 = vmatmul.mubr.bf16.gmra.mrb[0].mxu0 %v1956
      %v1992 = vpop.f32.mrb[0].mxu0
      %v1993 = vadd.f32 0.0, %v1992
      %v1994 = vpop.f32.mrb[0].mxu0
      %v1995 = vpop.f32.mrb[0].mxu0
      %v1996 = vadd.f32 0.0, %v1995
      %v1997 = vpop.f32.mrb[0].mxu0
      %1998 = vdwg.mxu0
      %v2000 = vsel %vm1862, %v1952, 0
      %2002 = vmatprep.subr.bf16.mxu0 0
      %2003 = vmatpush1.bf16.msra.mxu0 %v1662
      %2004 = vmatprep.subr.bf16.mxu0 0
      %2005 = vmatpush1.bf16.msra.mxu0 0
      %2006 = vmatprep.subr.bf16.mxu0 0
      %2007 = vmatpush1.bf16.msra.mxu0 0
      %2008 = vmatprep.subr.bf16.mxu0 0
      %2009 = vmatpush1.bf16.msra.mxu0 0
      %2010 = vmatprep.subr.bf16.mxu0 0
      %2011 = vmatpush1.bf16.msra.mxu0 0
      %2012 = vmatprep.subr.bf16.mxu0 0
      %2013 = vmatpush1.bf16.msra.mxu0 0
      %2014 = vmatprep.subr.bf16.mxu0 0
      %2015 = vmatpush1.bf16.msra.mxu0 0
      %2016 = vmatprep.subr.bf16.mxu0 0
      %2017 = vmatpush1.bf16.msra.mxu0 0
      %2018 = vmatprep.subr.bf16.mxu0 0
      %2019 = vmatpush1.bf16.msra.mxu0 0
      %2020 = vmatprep.subr.bf16.mxu0 0
      %2021 = vmatpush1.bf16.msra.mxu0 0
      %2022 = vmatprep.subr.bf16.mxu0 0
      %2023 = vmatpush1.bf16.msra.mxu0 0
      %2024 = vmatprep.subr.bf16.mxu0 0
      %2025 = vmatpush1.bf16.msra.mxu0 0
      %2026 = vmatprep.subr.bf16.mxu0 0
      %2027 = vmatpush1.bf16.msra.mxu0 0
      %2028 = vmatprep.subr.bf16.mxu0 0
      %2029 = vmatpush1.bf16.msra.mxu0 0
      %2030 = vmatprep.subr.bf16.mxu0 0
      %2031 = vmatpush1.bf16.msra.mxu0 0
      %2032 = vmatprep.subr.bf16.mxu0 0
      %2033 = vmatpush1.bf16.msra.mxu0 0
      %2034 = vmatprep.mubr.bf16.mxu0 0
      %2035 = vmatmul.mubr.bf16.gmra.mrb[0].mxu0 %v2000
      %v2036 = vpop.f32.mrb[0].mxu0
      %v2037 = vadd.f32 0.0, %v2036
      %v2038 = vpop.f32.mrb[0].mxu0
      %v2039 = vpop.f32.mrb[0].mxu0
      %v2040 = vadd.f32 0.0, %v2039
      %v2041 = vpop.f32.mrb[0].mxu0
      %2042 = vdwg.mxu0
      %v2044 = vsel %vm1862, %v1953, 0
      %2046 = vmatprep.subr.bf16.mxu0 0
      %2047 = vmatpush1.bf16.msra.mxu0 %v1663
      %2048 = vmatprep.subr.bf16.mxu0 0
      %2049 = vmatpush1.bf16.msra.mxu0 0
      %2050 = vmatprep.subr.bf16.mxu0 0
      %2051 = vmatpush1.bf16.msra.mxu0 0
      %2052 = vmatprep.subr.bf16.mxu0 0
      %2053 = vmatpush1.bf16.msra.mxu0 0
      %2054 = vmatprep.subr.bf16.mxu0 0
      %2055 = vmatpush1.bf16.msra.mxu0 0
      %2056 = vmatprep.subr.bf16.mxu0 0
      %2057 = vmatpush1.bf16.msra.mxu0 0
      %2058 = vmatprep.subr.bf16.mxu0 0
      %2059 = vmatpush1.bf16.msra.mxu0 0
      %2060 = vmatprep.subr.bf16.mxu0 0
      %2061 = vmatpush1.bf16.msra.mxu0 0
      %2062 = vmatprep.subr.bf16.mxu0 0
      %2063 = vmatpush1.bf16.msra.mxu0 0
      %2064 = vmatprep.subr.bf16.mxu0 0
      %2065 = vmatpush1.bf16.msra.mxu0 0
      %2066 = vmatprep.subr.bf16.mxu0 0
      %2067 = vmatpush1.bf16.msra.mxu0 0
      %2068 = vmatprep.subr.bf16.mxu0 0
      %2069 = vmatpush1.bf16.msra.mxu0 0
      %2070 = vmatprep.subr.bf16.mxu0 0
      %2071 = vmatpush1.bf16.msra.mxu0 0
      %2072 = vmatprep.subr.bf16.mxu0 0
      %2073 = vmatpush1.bf16.msra.mxu0 0
      %2074 = vmatprep.subr.bf16.mxu0 0
      %2075 = vmatpush1.bf16.msra.mxu0 0
      %2076 = vmatprep.subr.bf16.mxu0 0
      %2077 = vmatpush1.bf16.msra.mxu0 0
      %2078 = vmatprep.mubr.bf16.mxu0 0
      %2079 = vmatmul.mubr.bf16.gmra.mrb[0].mxu0 %v2044
      %v2080 = vpop.f32.mrb[0].mxu0
      %v2081 = vadd.f32 0.0, %v2080
      %v2082 = vpop.f32.mrb[0].mxu0
      %v2083 = vpop.f32.mrb[0].mxu0
      %v2084 = vadd.f32 0.0, %v2083
      %v2085 = vpop.f32.mrb[0].mxu0
      %2086 = vdwg.mxu0
      %v2088 = vsel %vm1862, %v1954, 0
      %2090 = vmatprep.subr.bf16.mxu0 0
      %2091 = vmatpush1.bf16.msra.mxu0 %v1664
      %2092 = vmatprep.subr.bf16.mxu0 0
      %2093 = vmatpush1.bf16.msra.mxu0 0
      %2094 = vmatprep.subr.bf16.mxu0 0
      %2095 = vmatpush1.bf16.msra.mxu0 0
      %2096 = vmatprep.subr.bf16.mxu0 0
      %2097 = vmatpush1.bf16.msra.mxu0 0
      %2098 = vmatprep.subr.bf16.mxu0 0
      %2099 = vmatpush1.bf16.msra.mxu0 0
      %2100 = vmatprep.subr.bf16.mxu0 0
      %2101 = vmatpush1.bf16.msra.mxu0 0
      %2102 = vmatprep.subr.bf16.mxu0 0
      %2103 = vmatpush1.bf16.msra.mxu0 0
      %2104 = vmatprep.subr.bf16.mxu0 0
      %2105 = vmatpush1.bf16.msra.mxu0 0
      %2106 = vmatprep.subr.bf16.mxu0 0
      %2107 = vmatpush1.bf16.msra.mxu0 0
      %2108 = vmatprep.subr.bf16.mxu0 0
      %2109 = vmatpush1.bf16.msra.mxu0 0
      %2110 = vmatprep.subr.bf16.mxu0 0
      %2111 = vmatpush1.bf16.msra.mxu0 0
      %2112 = vmatprep.subr.bf16.mxu0 0
      %2113 = vmatpush1.bf16.msra.mxu0 0
      %2114 = vmatprep.subr.bf16.mxu0 0
      %2115 = vmatpush1.bf16.msra.mxu0 0
      %2116 = vmatprep.subr.bf16.mxu0 0
      %2117 = vmatpush1.bf16.msra.mxu0 0
      %2118 = vmatprep.subr.bf16.mxu0 0
      %2119 = vmatpush1.bf16.msra.mxu0 0
      %2120 = vmatprep.subr.bf16.mxu0 0
      %2121 = vmatpush1.bf16.msra.mxu0 0
      %2122 = vmatprep.mubr.bf16.mxu0 0
      %2123 = vmatmul.mubr.bf16.gmra.mrb[0].mxu0 %v2088
      %v2124 = vpop.f32.mrb[0].mxu0
      %v2125 = vadd.f32 0.0, %v2124
      %v2126 = vpop.f32.mrb[0].mxu0
      %v2127 = vpop.f32.mrb[0].mxu0
      %v2128 = vadd.f32 0.0, %v2127
      %v2129 = vpop.f32.mrb[0].mxu0
      %2130 = vdwg.mxu0
      %2133 = vrot.lane.b32.xlu0 %v2037, 8
      %v2134 = vpop.permute.xlu0 %2133
      %2135 = vrot.lane.b32.xlu0 %v2040, 8
      %v2136 = vpop.permute.xlu0 %2135
      %2141 = vrot.lane.b32.xlu0 %v2081, 16
      %v2142 = vpop.permute.xlu0 %2141
      %2143 = vrot.lane.b32.xlu0 %v2084, 16
      %v2144 = vpop.permute.xlu0 %2143
      %2149 = vrot.lane.b32.xlu0 %v2125, 24
      %v2150 = vpop.permute.xlu0 %2149
      %2151 = vrot.lane.b32.xlu0 %v2128, 24
      %v2152 = vpop.permute.xlu0 %2151
      %v2155 = vsel %vm1665, %v1993, %v2134
      %v2156 = vsel %vm1665, %v1996, %v2136
      %v2157 = vsel %vm1862, %v2155, %v2142
      %v2158 = vsel %vm1862, %v2156, %v2144
      %vm2159 = vcmask 195584
      %v2160 = vsel %vm2159, %v2157, %v2150
      %v2161 = vsel %vm2159, %v2158, %v2152
      %v2162 = vpack.c.bf16 %v2161, %v2160
      %v2163 = vld [vmem:[%s31] sm:$0xf]
      %v2164 = vld [vmem:[%s31 + $0x4] sm:$0xf]
      %v2165 = vld [vmem:[%s31 + $0x8] sm:$0xf]
      %v2166 = vld [vmem:[%s31 + $0xc] sm:$0xf]
      %v2167 = vld [vmem:[%s33] sm:$0x1]
      %v2169 = vlaneseq
      %v2170 = vshrl.u32 %v2169, 7
      %v2171 = vsub.s32 0, %v2170
      %v2172 = vrot.slane %v2167, %v2171
      %v2178 = vunpack.c.l.b16 %v2163
      %v2179 = vunpack.c.l.b16 %v2164
      %v2180 = vunpack.c.l.b16 %v2165
      %v2181 = vunpack.c.l.b16 %v2166
      %v2182 = vpack.c.b16 %v2179, %v2178
      %v2183 = vpack.c.b16 %v2181, %v2180
      %v2187 = vsel %vm1110, %v2162, 0
      %2189 = vmatprep.subr.bf16.mxu0 0
      %2190 = vmatpush1.bf16.msra.mxu0 %v2182
      %2191 = vmatprep.subr.bf16.mxu0 0
      %2192 = vmatpush1.bf16.msra.mxu0 %v2183
      %2193 = vmatprep.subr.bf16.mxu0 0
      %2194 = vmatpush1.bf16.msra.mxu0 0
      %2195 = vmatprep.subr.bf16.mxu0 0
      %2196 = vmatpush1.bf16.msra.mxu0 0
      %2197 = vmatprep.subr.bf16.mxu0 0
      %2198 = vmatpush1.bf16.msra.mxu0 0
      %2199 = vmatprep.subr.bf16.mxu0 0
      %2200 = vmatpush1.bf16.msra.mxu0 0
      %2201 = vmatprep.subr.bf16.mxu0 0
      %2202 = vmatpush1.bf16.msra.mxu0 0
      %2203 = vmatprep.subr.bf16.mxu0 0
      %2204 = vmatpush1.bf16.msra.mxu0 0
      %2205 = vmatprep.subr.bf16.mxu0 0
      %2206 = vmatpush1.bf16.msra.mxu0 0
      %2207 = vmatprep.subr.bf16.mxu0 0
      %2208 = vmatpush1.bf16.msra.mxu0 0
      %2209 = vmatprep.subr.bf16.mxu0 0
      %2210 = vmatpush1.bf16.msra.mxu0 0
      %2211 = vmatprep.subr.bf16.mxu0 0
      %2212 = vmatpush1.bf16.msra.mxu0 0
      %2213 = vmatprep.subr.bf16.mxu0 0
      %2214 = vmatpush1.bf16.msra.mxu0 0
      %2215 = vmatprep.subr.bf16.mxu0 0
      %2216 = vmatpush1.bf16.msra.mxu0 0
      %2217 = vmatprep.subr.bf16.mxu0 0
      %2218 = vmatpush1.bf16.msra.mxu0 0
      %2219 = vmatprep.subr.bf16.mxu0 0
      %2220 = vmatpush1.bf16.msra.mxu0 0
      %2221 = vmatprep.mubr.bf16.mxu0 0
      %2222 = vmatmul.mubr.bf16.gmra.mrb[0].mxu0 %v2187
      %v2223 = vpop.f32.mrb[0].mxu0
      %v2224 = vadd.f32 %v2172, %v2223
      %v2225 = vpop.f32.mrb[0].mxu0
      %v2226 = vpop.f32.mrb[0].mxu0
      %v2227 = vadd.f32 %v2172, %v2226
      %v2228 = vpop.f32.mrb[0].mxu0
      %2229 = vdwg.mxu0
      %v2230 = vadd.f32 %v1351, %v2224
      %v2231 = vadd.f32 %v1352, %v2227
      %v2232 = vld [vmem:[%s35] sm:$0x1]
      %v2233 = vld [vmem:[%s37] sm:$0x1]
      %v2234 = vsel %vm1110, %v2230, 0.0
      %2235 = vadd.xlane.f32.xlu0 %v2234
      %v2236 = vpop.xlane.xlu0 %2235
      %v2237 = vsel %vm1110, %v2231, 0.0
      %2238 = vadd.xlane.f32.xlu0 %v2237
      %v2239 = vpop.xlane.xlu0 %2238
      %v2240 = vmul.f32 %v2236, %v1117
      %v2241 = vmul.f32 %v2239, %v1117
      %v2242 = vsub.f32 %v2230, %v2240
      %v2243 = vsub.f32 %v2231, %v2241
      %v2244 = vmul.f32 %v2242, %v2242
      %v2245 = vmul.f32 %v2243, %v2243
      %v2246 = vsel %vm1110, %v2244, 0.0
      %2247 = vadd.xlane.f32.xlu0 %v2246
      %v2248 = vpop.xlane.xlu0 %2247
      %v2249 = vsel %vm1110, %v2245, 0.0
      %2250 = vadd.xlane.f32.xlu0 %v2249
      %v2251 = vpop.xlane.xlu0 %2250
      %v2252 = vmul.f32 %v2248, %v1117
      %v2253 = vmul.f32 %v2251, %v1117
      %v2254 = vadd.f32 %v2252, 1e-05
      %v2255 = vadd.f32 %v2253, 1e-05
      %v2256 = vrsqrt.pop %v2254
      %v2257 = vrsqrt.pop %v2255
      %v2258 = vmul.f32 %v2242, %v2256
      %v2259 = vmul.f32 %v2243, %v2257
      %v2261 = vlaneseq
      %v2262 = vshrl.u32 %v2261, 7
      %v2263 = vsub.s32 0, %v2262
      %v2264 = vrot.slane %v2232, %v2263
      %v2266 = vmul.f32 %v2258, %v2264
      %v2267 = vmul.f32 %v2259, %v2264
      %v2269 = vlaneseq
      %v2270 = vshrl.u32 %v2269, 7
      %v2271 = vsub.s32 0, %v2270
      %v2272 = vrot.slane %v2233, %v2271
      %v2274 = vadd.f32 %v2266, %v2272
      %v2275 = vadd.f32 %v2267, %v2272
      %v2276 = vpack.c.bf16 %v2275, %v2274
      %v2277 = vld [vmem:[%s39] sm:$0xf]
      %v2278 = vld [vmem:[%s39 + $0x4] sm:$0xf]
      %v2279 = vld [vmem:[%s39 + $0x8] sm:$0xf]
      %v2280 = vld [vmem:[%s39 + $0xc] sm:$0xf]
      %v2281 = vld [vmem:[%s41] sm:$0x1]
      %v2283 = vlaneseq
      %v2284 = vshrl.u32 %v2283, 7
      %v2285 = vsub.s32 0, %v2284
      %v2286 = vrot.slane %v2281, %v2285
      %v2292 = vunpack.c.l.b16 %v2277
      %v2293 = vunpack.c.l.b16 %v2278
      %v2294 = vunpack.c.l.b16 %v2279
      %v2295 = vunpack.c.l.b16 %v2280
      %v2296 = vpack.c.b16 %v2293, %v2292
      %v2297 = vpack.c.b16 %v2295, %v2294
      %v2301 = vsel %vm1110, %v2276, 0
      %2303 = vmatprep.subr.bf16.mxu0 0
      %2304 = vmatpush1.bf16.msra.mxu0 %v2296
      %2305 = vmatprep.subr.bf16.mxu0 0
      %2306 = vmatpush1.bf16.msra.mxu0 %v2297
      %2307 = vmatprep.subr.bf16.mxu0 0
      %2308 = vmatpush1.bf16.msra.mxu0 0
      %2309 = vmatprep.subr.bf16.mxu0 0
      %2310 = vmatpush1.bf16.msra.mxu0 0
      %2311 = vmatprep.subr.bf16.mxu0 0
      %2312 = vmatpush1.bf16.msra.mxu0 0
      %2313 = vmatprep.subr.bf16.mxu0 0
      %2314 = vmatpush1.bf16.msra.mxu0 0
      %2315 = vmatprep.subr.bf16.mxu0 0
      %2316 = vmatpush1.bf16.msra.mxu0 0
      %2317 = vmatprep.subr.bf16.mxu0 0
      %2318 = vmatpush1.bf16.msra.mxu0 0
      %2319 = vmatprep.subr.bf16.mxu0 0
      %2320 = vmatpush1.bf16.msra.mxu0 0
      %2321 = vmatprep.subr.bf16.mxu0 0
      %2322 = vmatpush1.bf16.msra.mxu0 0
      %2323 = vmatprep.subr.bf16.mxu0 0
      %2324 = vmatpush1.bf16.msra.mxu0 0
      %2325 = vmatprep.subr.bf16.mxu0 0
      %2326 = vmatpush1.bf16.msra.mxu0 0
      %2327 = vmatprep.subr.bf16.mxu0 0
      %2328 = vmatpush1.bf16.msra.mxu0 0
      %2329 = vmatprep.subr.bf16.mxu0 0
      %2330 = vmatpush1.bf16.msra.mxu0 0
      %2331 = vmatprep.subr.bf16.mxu0 0
      %2332 = vmatpush1.bf16.msra.mxu0 0
      %2333 = vmatprep.subr.bf16.mxu0 0
      %2334 = vmatpush1.bf16.msra.mxu0 0
      %2335 = vmatprep.mubr.bf16.mxu0 0
      %2336 = vmatmul.mubr.bf16.gmra.mrb[0].mxu0 %v2301
      %v2337 = vpop.f32.mrb[0].mxu0
      %v2338 = vadd.f32 %v2286, %v2337
      %v2339 = vpop.f32.mrb[0].mxu0
      %v2340 = vpop.f32.mrb[0].mxu0
      %v2341 = vadd.f32 %v2286, %v2340
      %v2342 = vpop.f32.mrb[0].mxu0
      %2343 = vdwg.mxu0
      %v2344 = vxor.u32 %v2338, 2147483648
      %v2345 = vxor.u32 %v2341, 2147483648
      %v2346 = vmul.f32 %v2344, 1.442695
      %v2347 = vpow.pop %v2346
      %v2348 = vmul.f32 %v2345, 1.442695
      %v2349 = vpow.pop %v2348
      %v2350 = vadd.f32 %v2347, 1.0
      %v2351 = vadd.f32 %v2349, 1.0
      %v2352 = vrcp.pop %v2350
      %v2353 = vmul.f32 1.0, %v2352
      %v2354 = vrcp.pop %v2351
      %v2355 = vmul.f32 1.0, %v2354
      %2358 = vrot.lane.b32.xlu0 %v2353, 96
      %v2359 = vpop.permute.xlu0 %2358
      %2360 = vrot.lane.b32.xlu0 %v2355, 96
      %v2361 = vpop.permute.xlu0 %2360
      %v2364 = vmul.f32 %v2338, %v2359
      %v2365 = vmul.f32 %v2341, %v2361
      %2366 = vst.msk [vmem:[#allocation2] sm:$0xff] %vm1110, 0.0
      %2367 = vst.msk [vmem:[#allocation2 + $0x8] sm:$0xff] %vm1110, 0.0
      %vm2368 = vcmask 254976
      %2369 = vst.msk [vmem:[#allocation2 + $0x10] sm:$0x3] %vm2368, 0.0
      %2370 = vst.msk [vmem:[#allocation2 + $0x1] sm:$0xff] %vm1110, %v2364
      %2371 = vst.msk [vmem:[#allocation2 + $0x9] sm:$0xff] %vm1110, %v2365
      %v2372 = vld [vmem:[%s43] sm:$0x7]
      %v2373 = vld [vmem:[#allocation2] sm:$0xff]
      %v2374 = vld [vmem:[#allocation2 + $0x8] sm:$0xff]
      %v2375 = vlaneseq
      %v2376 = vshrl.u32 %v2375, 7
      %v2377 = vsub.s32 0, %v2376
      %v2378 = vrot.slane %v2372, %v2377
      %v2379 = vmul.f32 %v2373, %v2378
      %v2380 = vmul.f32 %v2374, %v2378
      %v2381 = vadd.f32 %v2379, 0.0
      %v2382 = vadd.f32 %v2380, 0.0
      %v2383 = vld [vmem:[#allocation2 + $0x1] sm:$0xff]
      %v2384 = vld [vmem:[#allocation2 + $0x9] sm:$0xff]
      %v2385 = vlaneseq
      %v2386 = vshrl.u32 %v2385, 7
      %v2387 = vsub.s32 1, %v2386
      %v2388 = vrot.slane %v2372, %v2387
      %v2389 = vmul.f32 %v2383, %v2388
      %v2390 = vmul.f32 %v2384, %v2388
      %v2391 = vadd.f32 %v2381, %v2389
      %v2392 = vadd.f32 %v2382, %v2390
      %v2393 = vld [vmem:[#allocation2 + $0x2] sm:$0xff]
      %v2394 = vld [vmem:[#allocation2 + $0xa] sm:$0xff]
      %v2395 = vlaneseq
      %v2396 = vshrl.u32 %v2395, 7
      %v2397 = vsub.s32 2, %v2396
      %v2398 = vrot.slane %v2372, %v2397
      %v2399 = vmul.f32 %v2393, %v2398
      %v2400 = vmul.f32 %v2394, %v2398
      %v2401 = vadd.f32 %v2391, %v2399
      %v2402 = vadd.f32 %v2392, %v2400
      %v2403 = vld [vmem:[%s45] sm:$0x1]
      %v2405 = vlaneseq
      %v2406 = vshrl.u32 %v2405, 7
      %v2407 = vsub.s32 0, %v2406
      %v2408 = vrot.slane %v2403, %v2407
      %v2410 = vadd.f32 %v2401, %v2408
      %v2411 = vadd.f32 %v2402, %v2408
      %v2412 = vld [vmem:[%s47] sm:$0x1]
      %v2414 = vlaneseq
      %v2415 = vshrl.u32 %v2414, 7
      %v2416 = vsub.s32 0, %v2415
      %v2417 = vrot.slane %v2412, %v2416
      %v2419 = vmul.f32 %v2410, %v2417
      %v2420 = vmul.f32 %v2411, %v2417
      %v2421 = vld [vmem:[%s49] sm:$0x1]
      %v2423 = vlaneseq
      %v2424 = vshrl.u32 %v2423, 7
      %v2425 = vsub.s32 0, %v2424
      %v2426 = vrot.slane %v2421, %v2425
      %v2428 = vadd.f32 %v2419, %v2426
      %v2429 = vadd.f32 %v2420, %v2426
      %v2430 = vxor.u32 %v2428, 2147483648
      %v2431 = vxor.u32 %v2429, 2147483648
      %v2432 = vmul.f32 %v2430, 1.442695
      %v2433 = vpow.pop %v2432
      %v2434 = vmul.f32 %v2431, 1.442695
      %v2435 = vpow.pop %v2434
      %v2436 = vadd.f32 %v2433, 1.0
      %v2437 = vadd.f32 %v2435, 1.0
      %v2438 = vrcp.pop %v2436
      %v2439 = vmul.f32 1.0, %v2438
      %v2440 = vrcp.pop %v2437
      %v2441 = vmul.f32 1.0, %v2440
      %v2442 = vmul.f32 %v2428, %v2439
      %v2443 = vmul.f32 %v2429, %v2441
      %v2444 = vpack.c.bf16 %v2443, %v2442
      %v2445 = vld [vmem:[%s51] sm:$0xf]
      %v2446 = vld [vmem:[%s51 + $0x4] sm:$0xf]
      %v2447 = vld [vmem:[%s51 + $0x8] sm:$0xf]
      %v2448 = vld [vmem:[%s51 + $0xc] sm:$0xf]
      %v2449 = vld [vmem:[%s53] sm:$0x1]
      %v2451 = vlaneseq
      %v2452 = vshrl.u32 %v2451, 7
      %v2453 = vsub.s32 0, %v2452
      %v2454 = vrot.slane %v2449, %v2453
      %v2460 = vunpack.c.l.b16 %v2445
      %v2461 = vunpack.c.l.b16 %v2446
      %v2462 = vunpack.c.l.b16 %v2447
      %v2463 = vunpack.c.l.b16 %v2448
      %v2464 = vpack.c.b16 %v2461, %v2460
      %v2465 = vpack.c.b16 %v2463, %v2462
      %v2469 = vsel %vm1110, %v2444, 0
      %2471 = vmatprep.subr.bf16.mxu0 0
      %2472 = vmatpush1.bf16.msra.mxu0 %v2464
      %2473 = vmatprep.subr.bf16.mxu0 0
      %2474 = vmatpush1.bf16.msra.mxu0 %v2465
      %2475 = vmatprep.subr.bf16.mxu0 0
      %2476 = vmatpush1.bf16.msra.mxu0 0
      %2477 = vmatprep.subr.bf16.mxu0 0
      %2478 = vmatpush1.bf16.msra.mxu0 0
      %2479 = vmatprep.subr.bf16.mxu0 0
      %2480 = vmatpush1.bf16.msra.mxu0 0
      %2481 = vmatprep.subr.bf16.mxu0 0
      %2482 = vmatpush1.bf16.msra.mxu0 0
      %2483 = vmatprep.subr.bf16.mxu0 0
      %2484 = vmatpush1.bf16.msra.mxu0 0
      %2485 = vmatprep.subr.bf16.mxu0 0
      %2486 = vmatpush1.bf16.msra.mxu0 0
      %2487 = vmatprep.subr.bf16.mxu0 0
      %2488 = vmatpush1.bf16.msra.mxu0 0
      %2489 = vmatprep.subr.bf16.mxu0 0
      %2490 = vmatpush1.bf16.msra.mxu0 0
      %2491 = vmatprep.subr.bf16.mxu0 0
      %2492 = vmatpush1.bf16.msra.mxu0 0
      %2493 = vmatprep.subr.bf16.mxu0 0
      %2494 = vmatpush1.bf16.msra.mxu0 0
      %2495 = vmatprep.subr.bf16.mxu0 0
      %2496 = vmatpush1.bf16.msra.mxu0 0
      %2497 = vmatprep.subr.bf16.mxu0 0
      %2498 = vmatpush1.bf16.msra.mxu0 0
      %2499 = vmatprep.subr.bf16.mxu0 0
      %2500 = vmatpush1.bf16.msra.mxu0 0
      %2501 = vmatprep.subr.bf16.mxu0 0
      %2502 = vmatpush1.bf16.msra.mxu0 0
      %2503 = vmatprep.mubr.bf16.mxu0 0
      %2504 = vmatmul.mubr.bf16.gmra.mrb[0].mxu0 %v2469
      %v2505 = vpop.f32.mrb[0].mxu0
      %v2506 = vadd.f32 %v2454, %v2505
      %v2507 = vpop.f32.mrb[0].mxu0
      %v2508 = vpop.f32.mrb[0].mxu0
      %v2509 = vadd.f32 %v2454, %v2508
      %v2510 = vpop.f32.mrb[0].mxu0
      %2511 = vdwg.mxu0
      %v2512 = vadd.f32 %v2230, %v2506
      %v2513 = vadd.f32 %v2231, %v2509
      %v2514 = vld [vmem:[%s55] sm:$0x1]
      %v2515 = vld [vmem:[%s57] sm:$0x1]
      %v2516 = vsel %vm1110, %v2512, 0.0
      %2517 = vadd.xlane.f32.xlu0 %v2516
      %v2518 = vpop.xlane.xlu0 %2517
      %v2519 = vsel %vm1110, %v2513, 0.0
      %2520 = vadd.xlane.f32.xlu0 %v2519
      %v2521 = vpop.xlane.xlu0 %2520
      %v2522 = vmul.f32 %v2518, %v1117
      %v2523 = vmul.f32 %v2521, %v1117
      %v2524 = vsub.f32 %v2512, %v2522
      %v2525 = vsub.f32 %v2513, %v2523
      %v2526 = vmul.f32 %v2524, %v2524
      %v2527 = vmul.f32 %v2525, %v2525
      %v2528 = vsel %vm1110, %v2526, 0.0
      %2529 = vadd.xlane.f32.xlu0 %v2528
      %v2530 = vpop.xlane.xlu0 %2529
      %v2531 = vsel %vm1110, %v2527, 0.0
      %2532 = vadd.xlane.f32.xlu0 %v2531
      %v2533 = vpop.xlane.xlu0 %2532
      %v2534 = vmul.f32 %v2530, %v1117
      %v2535 = vmul.f32 %v2533, %v1117
      %v2536 = vadd.f32 %v2534, 1e-05
      %v2537 = vadd.f32 %v2535, 1e-05
      %v2538 = vrsqrt.pop %v2536
      %v2539 = vrsqrt.pop %v2537
      %v2540 = vmul.f32 %v2524, %v2538
      %v2541 = vmul.f32 %v2525, %v2539
      %v2543 = vlaneseq
      %v2544 = vshrl.u32 %v2543, 7
      %v2545 = vsub.s32 0, %v2544
      %v2546 = vrot.slane %v2514, %v2545
      %v2548 = vmul.f32 %v2540, %v2546
      %v2549 = vmul.f32 %v2541, %v2546
      %v2551 = vlaneseq
      %v2552 = vshrl.u32 %v2551, 7
      %v2553 = vsub.s32 0, %v2552
      %v2554 = vrot.slane %v2515, %v2553
      %v2556 = vadd.f32 %v2548, %v2554
      %v2557 = vadd.f32 %v2549, %v2554
      %v2558 = vpack.c.bf16 %v2557, %v2556
      %v2559 = vld [vmem:[%s59] sm:$0xf]
      %v2560 = vld [vmem:[%s59 + $0x4] sm:$0xf]
      %v2561 = vld [vmem:[%s59 + $0x8] sm:$0xf]
      %v2562 = vld [vmem:[%s59 + $0xc] sm:$0xf]
      %v2563 = vld [vmem:[%s61] sm:$0x1]
      %v2565 = vlaneseq
      %v2566 = vshrl.u32 %v2565, 7
      %v2567 = vsub.s32 0, %v2566
      %v2568 = vrot.slane %v2563, %v2567
      %v2574 = vunpack.c.l.b16 %v2559
      %v2575 = vunpack.c.l.b16 %v2560
      %v2576 = vunpack.c.l.b16 %v2561
      %v2577 = vunpack.c.l.b16 %v2562
      %v2578 = vpack.c.b16 %v2575, %v2574
      %v2579 = vpack.c.b16 %v2577, %v2576
      %v2583 = vsel %vm1110, %v2558, 0
      %2585 = vmatprep.subr.bf16.mxu0 0
      %2586 = vmatpush1.bf16.msra.mxu0 %v2578
      %2587 = vmatprep.subr.bf16.mxu0 0
      %2588 = vmatpush1.bf16.msra.mxu0 %v2579
      %2589 = vmatprep.subr.bf16.mxu0 0
      %2590 = vmatpush1.bf16.msra.mxu0 0
      %2591 = vmatprep.subr.bf16.mxu0 0
      %2592 = vmatpush1.bf16.msra.mxu0 0
      %2593 = vmatprep.subr.bf16.mxu0 0
      %2594 = vmatpush1.bf16.msra.mxu0 0
      %2595 = vmatprep.subr.bf16.mxu0 0
      %2596 = vmatpush1.bf16.msra.mxu0 0
      %2597 = vmatprep.subr.bf16.mxu0 0
      %2598 = vmatpush1.bf16.msra.mxu0 0
      %2599 = vmatprep.subr.bf16.mxu0 0
      %2600 = vmatpush1.bf16.msra.mxu0 0
      %2601 = vmatprep.subr.bf16.mxu0 0
      %2602 = vmatpush1.bf16.msra.mxu0 0
      %2603 = vmatprep.subr.bf16.mxu0 0
      %2604 = vmatpush1.bf16.msra.mxu0 0
      %2605 = vmatprep.subr.bf16.mxu0 0
      %2606 = vmatpush1.bf16.msra.mxu0 0
      %2607 = vmatprep.subr.bf16.mxu0 0
      %2608 = vmatpush1.bf16.msra.mxu0 0
      %2609 = vmatprep.subr.bf16.mxu0 0
      %2610 = vmatpush1.bf16.msra.mxu0 0
      %2611 = vmatprep.subr.bf16.mxu0 0
      %2612 = vmatpush1.bf16.msra.mxu0 0
      %2613 = vmatprep.subr.bf16.mxu0 0
      %2614 = vmatpush1.bf16.msra.mxu0 0
      %2615 = vmatprep.subr.bf16.mxu0 0
      %2616 = vmatpush1.bf16.msra.mxu0 0
      %2617 = vmatprep.mubr.bf16.mxu0 0
      %2618 = vmatmul.mubr.bf16.gmra.mrb[0].mxu0 %v2583
      %v2619 = vpop.f32.mrb[0].mxu0
      %v2620 = vadd.f32 %v2568, %v2619
      %v2621 = vpop.f32.mrb[0].mxu0
      %v2622 = vpop.f32.mrb[0].mxu0
      %v2623 = vadd.f32 %v2568, %v2622
      %v2624 = vpop.f32.mrb[0].mxu0
      %2625 = vdwg.mxu0
      %v2626 = vxor.u32 %v2620, 2147483648
      %v2627 = vxor.u32 %v2623, 2147483648
      %v2628 = vmul.f32 %v2626, 1.442695
      %v2629 = vpow.pop %v2628
      %v2630 = vmul.f32 %v2627, 1.442695
      %v2631 = vpow.pop %v2630
      %v2632 = vadd.f32 %v2629, 1.0
      %v2633 = vadd.f32 %v2631, 1.0
      %v2634 = vrcp.pop %v2632
      %v2635 = vmul.f32 1.0, %v2634
      %v2636 = vrcp.pop %v2633
      %v2637 = vmul.f32 1.0, %v2636
      %v2638 = vmul.f32 %v2620, %v2635
      %v2639 = vmul.f32 %v2623, %v2637
      %v2640 = vpack.c.bf16 %v2639, %v2638
      %v2641 = vld [vmem:[%s63] sm:$0xf]
      %v2642 = vld [vmem:[%s63 + $0x4] sm:$0xf]
      %v2643 = vld [vmem:[%s63 + $0x8] sm:$0xf]
      %v2644 = vld [vmem:[%s63 + $0xc] sm:$0xf]
      %v2645 = vld [vmem:[%s63 + $0x10] sm:$0xf]
      %v2646 = vld [vmem:[%s63 + $0x14] sm:$0xf]
      %v2647 = vld [vmem:[%s63 + $0x18] sm:$0xf]
      %v2648 = vld [vmem:[%s63 + $0x1c] sm:$0xf]
      %v2649 = vld [vmem:[%s63 + $0x20] sm:$0xf]
      %v2650 = vld [vmem:[%s63 + $0x24] sm:$0xf]
      %v2651 = vld [vmem:[%s63 + $0x28] sm:$0xf]
      %v2652 = vld [vmem:[%s63 + $0x2c] sm:$0xf]
      %v2653 = vld [vmem:[%s63 + $0x30] sm:$0xf]
      %v2654 = vld [vmem:[%s63 + $0x34] sm:$0xf]
      %v2655 = vld [vmem:[%s63 + $0x38] sm:$0xf]
      %v2656 = vld [vmem:[%s63 + $0x3c] sm:$0xf]
      %v2657 = vld [vmem:[%s65] sm:$0x1]
      %v2659 = vlaneseq
      %v2660 = vshrl.u32 %v2659, 7
      %v2661 = vsub.s32 0, %v2660
      %v2662 = vrot.slane %v2657, %v2661
      %v2680 = vunpack.c.l.b16 %v2641
      %v2681 = vunpack.c.l.b16 %v2642
      %v2682 = vunpack.c.l.b16 %v2643
      %v2683 = vunpack.c.l.b16 %v2644
      %v2684 = vunpack.c.l.b16 %v2645
      %v2685 = vunpack.c.l.b16 %v2646
      %v2686 = vunpack.c.l.b16 %v2647
      %v2687 = vunpack.c.l.b16 %v2648
      %v2688 = vunpack.c.l.b16 %v2649
      %v2689 = vunpack.c.l.b16 %v2650
      %v2690 = vunpack.c.l.b16 %v2651
      %v2691 = vunpack.c.l.b16 %v2652
      %v2692 = vunpack.c.l.b16 %v2653
      %v2693 = vunpack.c.l.b16 %v2654
      %v2694 = vunpack.c.l.b16 %v2655
      %v2695 = vunpack.c.l.b16 %v2656
      %v2696 = vpack.c.b16 %v2681, %v2680
      %v2697 = vpack.c.b16 %v2683, %v2682
      %v2698 = vpack.c.b16 %v2685, %v2684
      %v2699 = vpack.c.b16 %v2687, %v2686
      %v2700 = vpack.c.b16 %v2689, %v2688
      %v2701 = vpack.c.b16 %v2691, %v2690
      %v2702 = vpack.c.b16 %v2693, %v2692
      %v2703 = vpack.c.b16 %v2695, %v2694
      %2712 = vmatprep.subr.bf16.mxu0 0
      %2713 = vmatpush1.bf16.msra.mxu0 %v2696
      %2714 = vmatprep.subr.bf16.mxu0 0
      %2715 = vmatpush1.bf16.msra.mxu0 %v2697
      %2716 = vmatprep.subr.bf16.mxu0 0
      %2717 = vmatpush1.bf16.msra.mxu0 %v2698
      %2718 = vmatprep.subr.bf16.mxu0 0
      %2719 = vmatpush1.bf16.msra.mxu0 %v2699
      %2720 = vmatprep.subr.bf16.mxu0 0
      %2721 = vmatpush1.bf16.msra.mxu0 %v2700
      %2722 = vmatprep.subr.bf16.mxu0 0
      %2723 = vmatpush1.bf16.msra.mxu0 %v2701
      %2724 = vmatprep.subr.bf16.mxu0 0
      %2725 = vmatpush1.bf16.msra.mxu0 %v2702
      %2726 = vmatprep.subr.bf16.mxu0 0
      %2727 = vmatpush1.bf16.msra.mxu0 %v2703
      %2728 = vmatprep.subr.bf16.mxu0 0
      %2729 = vmatpush1.bf16.msra.mxu0 0
      %2730 = vmatprep.subr.bf16.mxu0 0
      %2731 = vmatpush1.bf16.msra.mxu0 0
      %2732 = vmatprep.subr.bf16.mxu0 0
      %2733 = vmatpush1.bf16.msra.mxu0 0
      %2734 = vmatprep.subr.bf16.mxu0 0
      %2735 = vmatpush1.bf16.msra.mxu0 0
      %2736 = vmatprep.subr.bf16.mxu0 0
      %2737 = vmatpush1.bf16.msra.mxu0 0
      %2738 = vmatprep.subr.bf16.mxu0 0
      %2739 = vmatpush1.bf16.msra.mxu0 0
      %2740 = vmatprep.subr.bf16.mxu0 0
      %2741 = vmatpush1.bf16.msra.mxu0 0
      %2742 = vmatprep.subr.bf16.mxu0 0
      %2743 = vmatpush1.bf16.msra.mxu0 0
      %2744 = vmatprep.mubr.bf16.mxu0 0
      %2745 = vmatmul.mubr.bf16.gmra.mrb[0].mxu0 %v2640
      %v2746 = vpop.f32.mrb[0].mxu0
      %v2747 = vadd.f32 %v2662, %v2746
      %v2748 = vpop.f32.mrb[0].mxu0
      %v2749 = vpop.f32.mrb[0].mxu0
      %v2750 = vadd.f32 %v2662, %v2749
      %v2751 = vpop.f32.mrb[0].mxu0
      %2752 = vdwg.mxu0
      %v2753 = vmul.f32 %v2747, 0.5
      %v2754 = vmul.f32 %v2750, 0.5
      %v2755 = vadd.f32 %v2753, %v2512
      %v2756 = vadd.f32 %v2754, %v2513
      %v2757 = vld [vmem:[%s67] sm:$0x1]
      %v2758 = vld [vmem:[%s69] sm:$0x1]
      %v2759 = vsel %vm1110, %v2755, 0.0
      %2760 = vadd.xlane.f32.xlu0 %v2759
      %v2761 = vpop.xlane.xlu0 %2760
      %v2762 = vsel %vm1110, %v2756, 0.0
      %2763 = vadd.xlane.f32.xlu0 %v2762
      %v2764 = vpop.xlane.xlu0 %2763
      %v2765 = vmul.f32 %v2761, %v1117
      %v2766 = vmul.f32 %v2764, %v1117
      %v2767 = vsub.f32 %v2755, %v2765
      %v2768 = vsub.f32 %v2756, %v2766
      %v2769 = vmul.f32 %v2767, %v2767
      %v2770 = vmul.f32 %v2768, %v2768
      %v2771 = vsel %vm1110, %v2769, 0.0
      %2772 = vadd.xlane.f32.xlu0 %v2771
      %v2773 = vpop.xlane.xlu0 %2772
      %v2774 = vsel %vm1110, %v2770, 0.0
      %2775 = vadd.xlane.f32.xlu0 %v2774
      %v2776 = vpop.xlane.xlu0 %2775
      %v2777 = vmul.f32 %v2773, %v1117
      %v2778 = vmul.f32 %v2776, %v1117
      %v2779 = vadd.f32 %v2777, 1e-05
      %v2780 = vadd.f32 %v2778, 1e-05
      %v2781 = vrsqrt.pop %v2779
      %v2782 = vrsqrt.pop %v2780
      %v2783 = vmul.f32 %v2767, %v2781
      %v2784 = vmul.f32 %v2768, %v2782
      %v2786 = vlaneseq
      %v2787 = vshrl.u32 %v2786, 7
      %v2788 = vsub.s32 0, %v2787
      %v2789 = vrot.slane %v2757, %v2788
      %v2791 = vmul.f32 %v2783, %v2789
      %v2792 = vmul.f32 %v2784, %v2789
      %v2794 = vlaneseq
      %v2795 = vshrl.u32 %v2794, 7
      %v2796 = vsub.s32 0, %v2795
      %v2797 = vrot.slane %v2758, %v2796
      %v2799 = vadd.f32 %v2791, %v2797
      %v2800 = vadd.f32 %v2792, %v2797
      %2801 = vxpose.xlu0.b32.start [1/16] %v2799, 128
      %2802 = vxpose.xlu0.b32.cont [2/16] %v2800, 128
      %2803 = vxpose.xlu0.b32.cont [3/16] 0.0, 128
      %2804 = vxpose.xlu0.b32.cont [4/16] 0.0, 128
      %2805 = vxpose.xlu0.b32.cont [5/16] 0.0, 128
      %2806 = vxpose.xlu0.b32.cont [6/16] 0.0, 128
      %2807 = vxpose.xlu0.b32.cont [7/16] 0.0, 128
      %2808 = vxpose.xlu0.b32.cont [8/16] 0.0, 128
      %2809 = vxpose.xlu0.b32.cont [9/16] 0.0, 128
      %2810 = vxpose.xlu0.b32.cont [10/16] 0.0, 128
      %2811 = vxpose.xlu0.b32.cont [11/16] 0.0, 128
      %2812 = vxpose.xlu0.b32.cont [12/16] 0.0, 128
      %2813 = vxpose.xlu0.b32.cont [13/16] 0.0, 128
      %2814 = vxpose.xlu0.b32.cont [14/16] 0.0, 128
      %2815 = vxpose.xlu0.b32.cont [15/16] 0.0, 128
      %2816 = vxpose.xlu0.b32.end [16/16] 0.0, 128
      %v2817 = vpop.trf.xlu0
      %v2818 = vpop.trf.xlu0
      %v2819 = vpop.trf.xlu0
      %v2820 = vpop.trf.xlu0
      %v2821 = vpop.trf.xlu0
      %v2822 = vpop.trf.xlu0
      %v2823 = vpop.trf.xlu0
      %v2824 = vpop.trf.xlu0
      %v2825 = vpop.trf.xlu0
      %v2826 = vpop.trf.xlu0
      %v2827 = vpop.trf.xlu0
      %v2828 = vpop.trf.xlu0
      %v2829 = vpop.trf.xlu0
      %v2830 = vpop.trf.xlu0
      %v2831 = vpop.trf.xlu0
      %v2832 = vpop.trf.xlu0
      %2833 = vst.msk [vmem:[%s1070] sm:$0xff] %vm1862, %v2817
      %2834 = vst.msk [vmem:[%s1070 + $0x8] sm:$0xff] %vm1862, %v2818
      %2835 = vst.msk [vmem:[%s1070 + $0x10] sm:$0xff] %vm1862, %v2819
      %2836 = vst.msk [vmem:[%s1070 + $0x18] sm:$0xff] %vm1862, %v2820
      %p2837 = scmp.lt.s32.totalorder %s82, 1
      %s2838 = scalar_select %p2837, %s82, 1
      %s2839 = smul.addr %s2838, 4
      %s2840 = smul.addr %s2839, 8
      %s2841 = scalar_lea.vmem %s71, %s2840
      // Predicated region
      $region161: #{tpu_custom_call.1} parent=159 // pred_check
        %p2842 = pneg %p840
      $region162: #{tpu_custom_call.1} parent=159 // pred_check_branch
        %2844 = sbr.rel (%p2842) target = $region164
      $region163: #{tpu_custom_call.1} parent=159 // pred_region
        _
      $region164: #{tpu_custom_call.1} parent=159 // pred_fallthru
        _
    $region160: #{tpu_custom_call.1} parent=5 // pred_fallthru
      _
    %p2845 = scmp.le.s32.totalorder 2, %s77
    // Predicated region
    $region165: #{tpu_custom_call.1} parent=5 // pred_check
      %p2846 = pneg %p2845
    $region166: #{tpu_custom_call.1} parent=5 // pred_check_branch
      %2848 = sbr.rel (%p2846) target = $region168
    $region167: #{tpu_custom_call.1} parent=5 // pred_region
      %s2849 = ssub.s32 %s77, 2
      // Predicated region
      $region169: #{tpu_custom_call.1} parent=167 // pred_check
        %p2850 = pneg %p846
      $region170: #{tpu_custom_call.1} parent=167 // pred_check_branch
        %2852 = sbr.rel (%p2850) target = $region172
      $region171: #{tpu_custom_call.1} parent=167 // pred_region
        %p2853 = scmp.lt.s32.totalorder %s83, 1
        %s2854 = scalar_select %p2853, %s83, 1
        %s2855 = smul.addr %s2854, 4
        %s2856 = smul.addr %s2855, 8
        %s2857 = scalar_lea.vmem %s71, %s2856
      $region172: #{tpu_custom_call.1} parent=167 // pred_fallthru
        _
    $region168: #{tpu_custom_call.1} parent=5 // pred_fallthru
      _
  $region6: #{tpu_custom_call.1} parent=0 // loop_footer
    %s81 = sadd.s32 1, %s77
  $region7: #{tpu_custom_call.1} parent=0 // loop_footer_branch
    %76 = sbr.rel target = $region3
  $region8: #{tpu_custom_call.1} parent=0 // loop_exit
    _

</llo_original>
